<compile_context>
chip_gen: v7x
topology: tpu7x:2x2x1
jax: 0.10.0
libtpu: 0.0.40
codegen_flags: <defaults>
</compile_context>

<pallas_src>
import functools

import jax
import jax.numpy as jnp
from jax.experimental import pallas as pl
from jax.experimental.pallas import tpu as pltpu

EPS = 1e-5  # nn.BatchNorm1d default eps


# ----------------------------------------------------------------------------
# in-kernel helpers (traced inside the Pallas kernel)
# ----------------------------------------------------------------------------
def _shift_down(pad_ref, x):
    """y[m] = x[m-1], y[0] = 0.  `pad_ref` halo rows are pre-zeroed."""
    t = x.shape[0]
    pad_ref[1:t + 1, :] = x
    return pad_ref[0:t, :]


def _shift_up(pad_ref, x):
    """y[m] = x[m+1], y[t-1] = 0."""
    t = x.shape[0]
    pad_ref[1:t + 1, :] = x
    return pad_ref[2:t + 2, :]


def _shifted3(pad_ref, x):
    """(x[m-1], x[m], x[m+1]) with zero halo via one reusable padded scratch."""
    t = x.shape[0]
    pad_ref[1:t + 1, :] = x
    return pad_ref[0:t, :], x, pad_ref[2:t + 2, :]


def _dense3(prev, cur, nxt, w, b):
    """Conv1d(k=3, pad=1) as 3 accumulated MXU matmuls (single f32 accumulator)."""
    acc = jnp.dot(prev, w[0], preferred_element_type=jnp.float32)
    acc = acc + jnp.dot(cur, w[1], preferred_element_type=jnp.float32)
    acc = acc + jnp.dot(nxt, w[2], preferred_element_type=jnp.float32)
    return acc + b


def _dw3(prev, cur, nxt, w, b):
    """Depthwise Conv1d(k=3, pad=1) on the VPU.  w: (3,C), b: (1,C)."""
    return prev * w[0:1] + cur * w[1:2] + nxt * w[2:3] + b


# ----------------------------------------------------------------------------
# fused Pallas kernel: blocks 1..13 + final conv + residual-cat + ReLU
# ----------------------------------------------------------------------------
def _fused_kernel(x_ref, w1_ref, b1_ref, dwlw_ref, dwlb_ref, w9_ref, b9_ref,
                  dwhw_ref, dwhb_ref, wf_ref, bf_ref,
                  o_ref, pad1_ref, pad2_ref, *, scale):
    f32 = jnp.float32
    x = x_ref[0]                                    # (T, C)
    t = x.shape[0]
    c4 = w9_ref.shape[2]

    # Zero-halo scratch pads; rows 1..t are always overwritten before reads.
    pad1_ref[...] = jnp.zeros_like(pad1_ref)
    pad2_ref[...] = jnp.zeros_like(pad2_ref)

    # ---- block 1: dense conv C -> 2C (+ folded BN) + ReLU -------------------
    zc = jnp.zeros((1, x.shape[1]), f32)
    x_prev = jnp.concatenate([zc, x[0:t - 1]], axis=0)
    x_next = jnp.concatenate([x[1:t], zc], axis=0)
    h = jnp.maximum(_dense3(x_prev, x, x_next, w1_ref[...], b1_ref[...]), 0.0)

    # ---- blocks 2..8: depthwise residual blocks at (T, 2C) ------------------
    for i in range(7):
        w = dwlw_ref[i]                             # (3, 2C)
        b = dwlb_ref[i]                             # (1, 2C)
        prev, cur, nxt = _shifted3(pad1_ref, h)
        h = jnp.maximum(h + _dw3(prev, cur, nxt, w, b), 0.0)

    # ---- block 9: ConvTranspose1d(k=5, stride=scale, pad=2, out_pad=scale-1)
    #      (+ folded BN0) + ReLU, kept PHASE-SEPARATED:
    #        g[p][m] = out[m*scale + p]
    #              = relu( sum_{k : (p+2-k) % scale == 0} h[m + (p+2-k)//scale] @ W9[k] + b9 )
    #      For k=5, pad=2, stride=scale>=2 the tap offset d=(p+2-k)//scale is
    #      always in {-1,0,1}, so a 1-row halo is sufficient.
    prev, cur, nxt = _shifted3(pad1_ref, h)
    shifted = (prev, cur, nxt)                      # index with d + 1
    b9 = b9_ref[...]
    g = []
    for p in range(scale):
        acc = jnp.zeros((t, c4), f32)
        for k in range(5):
            if (p + 2 - k) % scale == 0:
                d = (p + 2 - k) // scale
                acc = acc + jnp.dot(shifted[d + 1], w9_ref[k],
                                    preferred_element_type=f32)
        g.append(jnp.maximum(acc + b9, 0.0))

    # ---- blocks 10..13: depthwise residual blocks at fine resolution --------
    # Fine-time neighbours in phase space:
    #   left  of phase p = phase p-1   (phase scale-1 shifted down one coarse row for p=0)
    #   right of phase p = phase p+1   (phase 0 shifted up one coarse row for p=scale-1)
    for i in range(4):
        w = dwhw_ref[i]                             # (3, 4C)
        b = dwhb_ref[i]                             # (1, 4C)
        lo = _shift_down(pad2_ref, g[scale - 1])
        hi = _shift_up(pad2_ref, g[0])
        g_new = []
        for p in range(scale):
            left = g[p - 1] if p > 0 else lo
            right = g[p + 1] if p < scale - 1 else hi
            y = _dw3(left, g[p], right, w, b)
            g_new.append(jnp.maximum(g[p] + y, 0.0))
        g = g_new

    # ---- final conv 4C -> C (+ folded BN1) + upsample residual + ReLU -------
    wf = wf_ref[...]                                # (3, 4C, C)
    bf = bf_ref[...]                                # (1, C)
    lo = _shift_down(pad2_ref, g[scale - 1])
    hi = _shift_up(pad2_ref, g[0])
    # residual: nearest-upsample(frames, scale) shifted left by scale//2:
    #   cat[m*scale + p] = frames[min(m + (p + scale//2)//scale, T-1)]
    x_next_c = jnp.concatenate([x[1:t], x[t - 1:t]], axis=0)   # clamped shift
    for p in range(scale):
        left = g[p - 1] if p > 0 else lo
        right = g[p + 1] if p < scale - 1 else hi
        z = _dense3(left, g[p], right, wf, bf)
        cat = x if (p + scale // 2) < scale else x_next_c
        o_ref[0, p] = jnp.maximum(z + cat, 0.0)


# ----------------------------------------------------------------------------
# host-side parameter preparation (fold eval-mode BN, kernel-friendly layouts)
# ----------------------------------------------------------------------------
def _bn_fold(bn):
    s = bn['gamma'] / jnp.sqrt(bn['var'] + EPS)
    return s, bn['beta'] - bn['mean'] * s


def _prep_dense(w, b, bn):
    """PyTorch (Cout, Cin, 3) conv weight -> (3, Cin, Cout), BN folded."""
    s, sh = _bn_fold(bn)
    wk = jnp.transpose(w * s[:, None, None], (2, 1, 0))
    return wk, (s * b + sh)[None, :]


def _prep_convT(w, b, bn):
    """PyTorch (Cin, Cout, 5) ConvTranspose weight -> (5, Cin, Cout), BN folded."""
    s, sh = _bn_fold(bn)
    wk = jnp.transpose(w * s[None, :, None], (2, 0, 1))
    return wk, (s * b + sh)[None, :]


def _prep_dw_stack(params, idxs):
    """Stack depthwise layers: weights (n,3,C), biases (n,1,C), BN folded."""
    ws, bs = [], []
    for i in idxs:
        w, b = params[f'dw{i}']
        s, sh = _bn_fold(params[f'bn{i}'])
        ws.append(jnp.transpose(w[:, 0, :] * s[:, None], (1, 0)))  # (3, C)
        bs.append((s * b + sh)[None, :])                           # (1, C)
    return jnp.stack(ws, axis=0), jnp.stack(bs, axis=0)


def _full_spec(a):
    zeros = (0,) * a.ndim
    return pl.BlockSpec(a.shape, lambda b, _z=zeros: _z)


# ----------------------------------------------------------------------------
# forward wrapper
# ----------------------------------------------------------------------------
def temporal_upsample_forward(frames, params, scale):
    """Pallas forward of TemporalUpSample. frames: (B, C, T) -> (B, C, T*scale)."""
    assert scale >= 2, "the reference module requires scale >= 2"
    B, C, T = frames.shape
    C2, C4 = 2 * C, 4 * C
    T2 = T * scale

    # Fold eval-mode BN into conv weights/bias; pack depthwise layers.
    w1, b1 = _prep_dense(*params['conv1'], params['bn1'])
    dwlw, dwlb = _prep_dw_stack(params, range(2, 9))
    w9, b9 = _prep_convT(*params['convT'], params['bn0'])
    dwhw, dwhb = _prep_dw_stack(params, range(10, 14))
    wf, bf = _prep_dense(*params['convF'], params['bnF'])
    prm = [w1, b1, dwlw, dwlb, w9, b9, dwhw, dwhb, wf, bf]

    x_tc = jnp.transpose(frames, (0, 2, 1))                      # (B, T, C)

    flops = B * (2 * T * 3 * C * C2                              # block1
                 + 7 * 6 * T * C2                                # dw 2..8
                 + 2 * T * 5 * C2 * C4                           # block9
                 + 4 * 6 * T2 * C4                               # dw 10..13
                 + 2 * T2 * 3 * C4 * C)                          # final conv
    bytes_acc = 4 * (x_tc.size + B * scale * T * C
                     + sum(int(a.size) for a in prm))

    out = pl.pallas_call(
        functools.partial(_fused_kernel, scale=scale),
        out_shape=jax.ShapeDtypeStruct((B, scale, T, C), jnp.float32),
        grid=(B,),
        in_specs=[pl.BlockSpec((1, T, C), lambda b: (b, 0, 0))]
                 + [_full_spec(a) for a in prm],
        out_specs=pl.BlockSpec((1, scale, T, C), lambda b: (b, 0, 0, 0)),
        scratch_shapes=[pltpu.VMEM((T + 2, C2), jnp.float32),
                        pltpu.VMEM((T + 2, C4), jnp.float32)],
        compiler_params=pltpu.CompilerParams(
            dimension_semantics=("parallel",)),
        cost_estimate=pl.CostEstimate(flops=int(flops), transcendentals=0,
                                      bytes_accessed=int(bytes_acc)),
    )(x_tc, *prm)

    # (B, scale, T, C) -> (B, C, T, scale) -> (B, C, T*scale): only host-side
    # layout op left (the module returns channels-first anyway).
    return jnp.transpose(out, (0, 3, 2, 1)).reshape(B, C, T2)


# ----------------------------------------------------------------------------
# parameter init (PyTorch layouts) and pure-JAX reference
# ----------------------------------------------------------------------------
def init_params(key, C):
    C2, C4 = 2 * C, 4 * C
    keys = iter(jax.random.split(key, 128))

    def conv(cin, cout, k, std):
        w = std * jax.random.normal(next(keys), (cout, cin, k), jnp.float32)
        b = 0.05 * jax.random.normal(next(keys), (cout,), jnp.float32)
        return (w, b)

    def dw(c):
        w = 0.1 * jax.random.normal(next(keys), (c, 1, 3), jnp.float32)
        b = 0.05 * jax.random.normal(next(keys), (c,), jnp.float32)
        return (w, b)

    def bn(c):
        return dict(
            gamma=1.0 + 0.1 * jax.random.normal(next(keys), (c,), jnp.float32),
            beta=0.1 * jax.random.normal(next(keys), (c,), jnp.float32),
            mean=0.1 * jax.random.normal(next(keys), (c,), jnp.float32),
            var=jax.random.uniform(next(keys), (c,), jnp.float32, 0.5, 1.5))

    p = {'conv1': conv(C, C2, 3, 0.05), 'bn1': bn(C2)}
    for i in range(2, 9):
        p[f'dw{i}'] = dw(C2)
        p[f'bn{i}'] = bn(C2)
    wT = 0.05 * jax.random.normal(next(keys), (C2, C4, 5), jnp.float32)
    bT = 0.05 * jax.random.normal(next(keys), (C4,), jnp.float32)
    p['convT'] = (wT, bT)
    p['bn0'] = bn(C4)
    for i in range(10, 14):
        p[f'dw{i}'] = dw(C4)
        p[f'bn{i}'] = bn(C4)
    p['convF'] = conv(C4, C, 3, 0.05)
    p['bnF'] = bn(C)
    return p


def reference_forward(frames, params, scale):
    """Pure-JAX replica of the PyTorch TemporalUpSample forward (eval-mode BN)."""
    s = scale
    hi = jax.lax.Precision.HIGHEST

    def bn_apply(x, bn):
        sc = bn['gamma'] / jnp.sqrt(bn['var'] + EPS)
        return (x - bn['mean'][None, :, None]) * sc[None, :, None] \
            + bn['beta'][None, :, None]

    def conv1d(x, w, b, groups=1):
        y = jax.lax.conv_general_dilated(
            x, w, window_strides=(1,), padding=[(1, 1)],
            dimension_numbers=('NCH', 'OIH', 'NCH'),
            feature_group_count=groups, precision=hi)
        return y + b[None, :, None]

    def conv_transpose1d(x, w, b):
        k = w.shape[-1]
        wc = jnp.transpose(jnp.flip(w, -1), (1, 0, 2))   # (Cout, Cin, K)
        y = jax.lax.conv_general_dilated(
            x, wc, window_strides=(1,),
            padding=[(k - 1 - 2, k - 1 - 2 + (s - 1))],
            lhs_dilation=(s,),
            dimension_numbers=('NCH', 'OIH', 'NCH'), precision=hi)
        return y + b[None, :, None]

    # Upsample(x, scale): nearest upsample then shift left by scale//2.
    up = jnp.repeat(frames, s, axis=-1)
    shift = s // 2
    cat = jnp.concatenate([up[:, :, shift:], up[:, :, -shift:]], axis=-1)

    w, b = params['conv1']
    h = jax.nn.relu(bn_apply(conv1d(frames, w, b), params['bn1']))
    for i in range(2, 9):
        w, b = params[f'dw{i}']
        h = jax.nn.relu(h + bn_apply(conv1d(h, w, b, groups=h.shape[1]),
                                     params[f'bn{i}']))
    wT, bT = params['convT']
    h = jax.nn.relu(bn_apply(conv_transpose1d(h, wT, bT), params['bn0']))
    for i in range(10, 14):
        w, b = params[f'dw{i}']
        h = jax.nn.relu(h + bn_apply(conv1d(h, w, b, groups=h.shape[1]),
                                     params[f'bn{i}']))
    w, b = params['convF']
    h = bn_apply(conv1d(h, w, b), params['bnF'])
    return jax.nn.relu(h + cat)


if __name__ == "__main__":
    B, C, T, SCALE = 2, 32, 16, 2
    key = jax.random.PRNGKey(0)
    kx, kp = jax.random.split(key)
    frames = jax.random.normal(kx, (B, C, T), jnp.float32)
    params = init_params(kp, C)

    fwd = jax.jit(temporal_upsample_forward, static_argnums=(2,))
    out = jax.block_until_ready(fwd(frames, params, SCALE))

    ref = reference_forward(frames, params, SCALE)
    assert out.shape == (B, C, T * SCALE)
    max_err = float(jnp.max(jnp.abs(out - ref)))
    assert jnp.allclose(out, ref, atol=5e-3, rtol=5e-3), f"max abs err {max_err}"

    print("KERNEL_OK")
</pallas_src>

<mosaic_0001>
module attributes {stable_mosaic.version = 11 : i64} {
  func.func @_fused_kernel(%arg0: i32, %arg1: memref<1x16x32xf32, #tpu.memory_space<vmem>>, %arg2: memref<3x32x64xf32, #tpu.memory_space<vmem>>, %arg3: memref<1x64xf32, #tpu.memory_space<vmem>>, %arg4: memref<7x3x64xf32, #tpu.memory_space<vmem>>, %arg5: memref<7x1x64xf32, #tpu.memory_space<vmem>>, %arg6: memref<5x64x128xf32, #tpu.memory_space<vmem>>, %arg7: memref<1x128xf32, #tpu.memory_space<vmem>>, %arg8: memref<4x3x128xf32, #tpu.memory_space<vmem>>, %arg9: memref<4x1x128xf32, #tpu.memory_space<vmem>>, %arg10: memref<3x128x32xf32, #tpu.memory_space<vmem>>, %arg11: memref<1x32xf32, #tpu.memory_space<vmem>>, %arg12: memref<1x2x16x32xf32, #tpu.memory_space<vmem>>, %arg13: memref<18x64xf32, #tpu.memory_space<vmem>>, %arg14: memref<18x128xf32, #tpu.memory_space<vmem>>) attributes {dimension_semantics = [#tpu.dimension_semantics<parallel>], iteration_bounds = array<i64: 2>, scalar_prefetch = 0 : i64, scratch_operands = 2 : i64, tpu.core_type = #tpu.core_type<tc>, window_params = [{transform_indices = @transform_0, window_bounds = array<i64: 1, 16, 32>}, {pipeline_mode = #tpu.pipeline_mode<synchronous>, transform_indices = @transform_1, window_bounds = array<i64: 3, 32, 64>}, {pipeline_mode = #tpu.pipeline_mode<synchronous>, transform_indices = @transform_2, window_bounds = array<i64: 1, 64>}, {pipeline_mode = #tpu.pipeline_mode<synchronous>, transform_indices = @transform_3, window_bounds = array<i64: 7, 3, 64>}, {pipeline_mode = #tpu.pipeline_mode<synchronous>, transform_indices = @transform_4, window_bounds = array<i64: 7, 1, 64>}, {pipeline_mode = #tpu.pipeline_mode<synchronous>, transform_indices = @transform_5, window_bounds = array<i64: 5, 64, 128>}, {pipeline_mode = #tpu.pipeline_mode<synchronous>, transform_indices = @transform_6, window_bounds = array<i64: 1, 128>}, {pipeline_mode = #tpu.pipeline_mode<synchronous>, transform_indices = @transform_7, window_bounds = array<i64: 4, 3, 128>}, {pipeline_mode = #tpu.pipeline_mode<synchronous>, transform_indices = @transform_8, window_bounds = array<i64: 4, 1, 128>}, {pipeline_mode = #tpu.pipeline_mode<synchronous>, transform_indices = @transform_9, window_bounds = array<i64: 3, 128, 32>}, {pipeline_mode = #tpu.pipeline_mode<synchronous>, transform_indices = @transform_10, window_bounds = array<i64: 1, 32>}, {transform_indices = @transform_11, window_bounds = array<i64: 1, 2, 16, 32>}]} {
    %c0 = arith.constant 0 : index
    %c0_0 = arith.constant 0 : index
    %c0_1 = arith.constant 0 : index
    %0 = vector.load %arg1[%c0, %c0_0, %c0_1] : memref<1x16x32xf32, #tpu.memory_space<vmem>>, vector<1x16x32xf32>
    %1 = vector.shape_cast %0 : vector<1x16x32xf32> to vector<16x32xf32>
    %cst = arith.constant 0.000000e+00 : f32
    %2 = vector.broadcast %cst : f32 to vector<18x64xf32>
    %c0_2 = arith.constant 0 : index
    %c0_3 = arith.constant 0 : index
    %3 = vector.load %arg13[%c0_2, %c0_3] : memref<18x64xf32, #tpu.memory_space<vmem>>, vector<18x64xf32>
    tpu.vector_store %arg13[%c0_2, %c0_3], %2 {strides = array<i32>} : memref<18x64xf32, #tpu.memory_space<vmem>>, vector<18x64xf32>,
    %cst_4 = arith.constant 0.000000e+00 : f32
    %4 = vector.broadcast %cst_4 : f32 to vector<18x128xf32>
    %c0_5 = arith.constant 0 : index
    %c0_6 = arith.constant 0 : index
    %5 = vector.load %arg14[%c0_5, %c0_6] : memref<18x128xf32, #tpu.memory_space<vmem>>, vector<18x128xf32>
    tpu.vector_store %arg14[%c0_5, %c0_6], %4 {strides = array<i32>} : memref<18x128xf32, #tpu.memory_space<vmem>>, vector<18x128xf32>,
    %cst_7 = arith.constant 0.000000e+00 : f32
    %6 = vector.broadcast %cst_7 : f32 to vector<1x32xf32>
    %7 = vector.extract_strided_slice %1 {offsets = [0, 0], sizes = [15, 32], strides = [1, 1]} : vector<16x32xf32> to vector<15x32xf32>
    %8 = tpu.concatenate %6, %7 in 0 : vector<1x32xf32>, vector<15x32xf32> -> vector<16x32xf32>
    %9 = vector.extract_strided_slice %1 {offsets = [1, 0], sizes = [15, 32], strides = [1, 1]} : vector<16x32xf32> to vector<15x32xf32>
    %10 = tpu.concatenate %9, %6 in 0 : vector<15x32xf32>, vector<1x32xf32> -> vector<16x32xf32>
    %c0_8 = arith.constant 0 : index
    %c0_9 = arith.constant 0 : index
    %c0_10 = arith.constant 0 : index
    %11 = vector.load %arg2[%c0_8, %c0_9, %c0_10] : memref<3x32x64xf32, #tpu.memory_space<vmem>>, vector<3x32x64xf32>
    %c0_11 = arith.constant 0 : index
    %c0_12 = arith.constant 0 : index
    %12 = vector.load %arg3[%c0_11, %c0_12] : memref<1x64xf32, #tpu.memory_space<vmem>>, vector<1x64xf32>
    %13 = vector.extract_strided_slice %11 {offsets = [0, 0, 0], sizes = [1, 32, 64], strides = [1, 1, 1]} : vector<3x32x64xf32> to vector<1x32x64xf32>
    %14 = vector.shape_cast %13 : vector<1x32x64xf32> to vector<32x64xf32>
    %cst_13 = arith.constant dense<0.000000e+00> : vector<16x64xf32>
    %15 = tpu.matmul %8, %14, %cst_13 {dimension_numbers = #tpu.dot_dimension_numbers<[1], [0], [0], [1], [0, 0, 1, 1], [], []>} : vector<16x32xf32>, vector<32x64xf32>, vector<16x64xf32> -> vector<16x64xf32>
    %16 = vector.extract_strided_slice %11 {offsets = [1, 0, 0], sizes = [1, 32, 64], strides = [1, 1, 1]} : vector<3x32x64xf32> to vector<1x32x64xf32>
    %17 = vector.shape_cast %16 : vector<1x32x64xf32> to vector<32x64xf32>
    %cst_14 = arith.constant dense<0.000000e+00> : vector<16x64xf32>
    %18 = tpu.matmul %1, %17, %cst_14 {dimension_numbers = #tpu.dot_dimension_numbers<[1], [0], [0], [1], [0, 0, 1, 1], [], []>} : vector<16x32xf32>, vector<32x64xf32>, vector<16x64xf32> -> vector<16x64xf32>
    %19 = arith.addf %15, %18 : vector<16x64xf32>
    %20 = vector.extract_strided_slice %11 {offsets = [2, 0, 0], sizes = [1, 32, 64], strides = [1, 1, 1]} : vector<3x32x64xf32> to vector<1x32x64xf32>
    %21 = vector.shape_cast %20 : vector<1x32x64xf32> to vector<32x64xf32>
    %cst_15 = arith.constant dense<0.000000e+00> : vector<16x64xf32>
    %22 = tpu.matmul %10, %21, %cst_15 {dimension_numbers = #tpu.dot_dimension_numbers<[1], [0], [0], [1], [0, 0, 1, 1], [], []>} : vector<16x32xf32>, vector<32x64xf32>, vector<16x64xf32> -> vector<16x64xf32>
    %23 = arith.addf %19, %22 : vector<16x64xf32>
    %24 = vector.broadcast %12 : vector<1x64xf32> to vector<16x64xf32>
    %25 = arith.addf %23, %24 : vector<16x64xf32>
    %cst_16 = arith.constant 0.000000e+00 : f32
    %26 = vector.broadcast %cst_16 : f32 to vector<16x64xf32>
    %27 = arith.maximumf %25, %26 : vector<16x64xf32>
    %c0_17 = arith.constant 0 : index
    %c0_18 = arith.constant 0 : index
    %c0_19 = arith.constant 0 : index
    %28 = vector.load %arg4[%c0_17, %c0_18, %c0_19] : memref<7x3x64xf32, #tpu.memory_space<vmem>>, vector<1x3x64xf32>
    %29 = vector.shape_cast %28 : vector<1x3x64xf32> to vector<3x64xf32>
    %c0_20 = arith.constant 0 : index
    %c0_21 = arith.constant 0 : index
    %c0_22 = arith.constant 0 : index
    %30 = vector.load %arg5[%c0_20, %c0_21, %c0_22] : memref<7x1x64xf32, #tpu.memory_space<vmem>>, vector<1x1x64xf32>
    %31 = vector.shape_cast %30 : vector<1x1x64xf32> to vector<1x64xf32>
    %c1 = arith.constant 1 : index
    %c0_23 = arith.constant 0 : index
    %32 = vector.load %arg13[%c1, %c0_23] : memref<18x64xf32, #tpu.memory_space<vmem>>, vector<16x64xf32>
    tpu.vector_store %arg13[%c1, %c0_23], %27 {strides = array<i32>} : memref<18x64xf32, #tpu.memory_space<vmem>>, vector<16x64xf32>,
    %c0_24 = arith.constant 0 : index
    %c0_25 = arith.constant 0 : index
    %33 = vector.load %arg13[%c0_24, %c0_25] : memref<18x64xf32, #tpu.memory_space<vmem>>, vector<16x64xf32>
    %c2 = arith.constant 2 : index
    %c0_26 = arith.constant 0 : index
    %34 = vector.load %arg13[%c2, %c0_26] : memref<18x64xf32, #tpu.memory_space<vmem>>, vector<16x64xf32>
    %35 = vector.extract_strided_slice %29 {offsets = [0, 0], sizes = [1, 64], strides = [1, 1]} : vector<3x64xf32> to vector<1x64xf32>
    %36 = vector.broadcast %35 : vector<1x64xf32> to vector<16x64xf32>
    %37 = arith.mulf %33, %36 : vector<16x64xf32>
    %38 = vector.extract_strided_slice %29 {offsets = [1, 0], sizes = [1, 64], strides = [1, 1]} : vector<3x64xf32> to vector<1x64xf32>
    %39 = vector.broadcast %38 : vector<1x64xf32> to vector<16x64xf32>
    %40 = arith.mulf %27, %39 : vector<16x64xf32>
    %41 = arith.addf %37, %40 : vector<16x64xf32>
    %42 = vector.extract_strided_slice %29 {offsets = [2, 0], sizes = [1, 64], strides = [1, 1]} : vector<3x64xf32> to vector<1x64xf32>
    %43 = vector.broadcast %42 : vector<1x64xf32> to vector<16x64xf32>
    %44 = arith.mulf %34, %43 : vector<16x64xf32>
    %45 = arith.addf %41, %44 : vector<16x64xf32>
    %46 = vector.broadcast %31 : vector<1x64xf32> to vector<16x64xf32>
    %47 = arith.addf %45, %46 : vector<16x64xf32>
    %48 = arith.addf %27, %47 : vector<16x64xf32>
    %cst_27 = arith.constant 0.000000e+00 : f32
    %49 = vector.broadcast %cst_27 : f32 to vector<16x64xf32>
    %50 = arith.maximumf %48, %49 : vector<16x64xf32>
    %c1_28 = arith.constant 1 : index
    %c0_29 = arith.constant 0 : index
    %c0_30 = arith.constant 0 : index
    %51 = vector.load %arg4[%c1_28, %c0_29, %c0_30] : memref<7x3x64xf32, #tpu.memory_space<vmem>>, vector<1x3x64xf32>
    %52 = vector.shape_cast %51 : vector<1x3x64xf32> to vector<3x64xf32>
    %c1_31 = arith.constant 1 : index
    %c0_32 = arith.constant 0 : index
    %c0_33 = arith.constant 0 : index
    %53 = vector.load %arg5[%c1_31, %c0_32, %c0_33] : memref<7x1x64xf32, #tpu.memory_space<vmem>>, vector<1x1x64xf32>
    %54 = vector.shape_cast %53 : vector<1x1x64xf32> to vector<1x64xf32>
    %c1_34 = arith.constant 1 : index
    %c0_35 = arith.constant 0 : index
    %55 = vector.load %arg13[%c1_34, %c0_35] : memref<18x64xf32, #tpu.memory_space<vmem>>, vector<16x64xf32>
    tpu.vector_store %arg13[%c1_34, %c0_35], %50 {strides = array<i32>} : memref<18x64xf32, #tpu.memory_space<vmem>>, vector<16x64xf32>,
    %c0_36 = arith.constant 0 : index
    %c0_37 = arith.constant 0 : index
    %56 = vector.load %arg13[%c0_36, %c0_37] : memref<18x64xf32, #tpu.memory_space<vmem>>, vector<16x64xf32>
    %c2_38 = arith.constant 2 : index
    %c0_39 = arith.constant 0 : index
    %57 = vector.load %arg13[%c2_38, %c0_39] : memref<18x64xf32, #tpu.memory_space<vmem>>, vector<16x64xf32>
    %58 = vector.extract_strided_slice %52 {offsets = [0, 0], sizes = [1, 64], strides = [1, 1]} : vector<3x64xf32> to vector<1x64xf32>
    %59 = vector.broadcast %58 : vector<1x64xf32> to vector<16x64xf32>
    %60 = arith.mulf %56, %59 : vector<16x64xf32>
    %61 = vector.extract_strided_slice %52 {offsets = [1, 0], sizes = [1, 64], strides = [1, 1]} : vector<3x64xf32> to vector<1x64xf32>
    %62 = vector.broadcast %61 : vector<1x64xf32> to vector<16x64xf32>
    %63 = arith.mulf %50, %62 : vector<16x64xf32>
    %64 = arith.addf %60, %63 : vector<16x64xf32>
    %65 = vector.extract_strided_slice %52 {offsets = [2, 0], sizes = [1, 64], strides = [1, 1]} : vector<3x64xf32> to vector<1x64xf32>
    %66 = vector.broadcast %65 : vector<1x64xf32> to vector<16x64xf32>
    %67 = arith.mulf %57, %66 : vector<16x64xf32>
    %68 = arith.addf %64, %67 : vector<16x64xf32>
    %69 = vector.broadcast %54 : vector<1x64xf32> to vector<16x64xf32>
    %70 = arith.addf %68, %69 : vector<16x64xf32>
    %71 = arith.addf %50, %70 : vector<16x64xf32>
    %cst_40 = arith.constant 0.000000e+00 : f32
    %72 = vector.broadcast %cst_40 : f32 to vector<16x64xf32>
    %73 = arith.maximumf %71, %72 : vector<16x64xf32>
    %c2_41 = arith.constant 2 : index
    %c0_42 = arith.constant 0 : index
    %c0_43 = arith.constant 0 : index
    %74 = vector.load %arg4[%c2_41, %c0_42, %c0_43] : memref<7x3x64xf32, #tpu.memory_space<vmem>>, vector<1x3x64xf32>
    %75 = vector.shape_cast %74 : vector<1x3x64xf32> to vector<3x64xf32>
    %c2_44 = arith.constant 2 : index
    %c0_45 = arith.constant 0 : index
    %c0_46 = arith.constant 0 : index
    %76 = vector.load %arg5[%c2_44, %c0_45, %c0_46] : memref<7x1x64xf32, #tpu.memory_space<vmem>>, vector<1x1x64xf32>
    %77 = vector.shape_cast %76 : vector<1x1x64xf32> to vector<1x64xf32>
    %c1_47 = arith.constant 1 : index
    %c0_48 = arith.constant 0 : index
    %78 = vector.load %arg13[%c1_47, %c0_48] : memref<18x64xf32, #tpu.memory_space<vmem>>, vector<16x64xf32>
    tpu.vector_store %arg13[%c1_47, %c0_48], %73 {strides = array<i32>} : memref<18x64xf32, #tpu.memory_space<vmem>>, vector<16x64xf32>,
    %c0_49 = arith.constant 0 : index
    %c0_50 = arith.constant 0 : index
    %79 = vector.load %arg13[%c0_49, %c0_50] : memref<18x64xf32, #tpu.memory_space<vmem>>, vector<16x64xf32>
    %c2_51 = arith.constant 2 : index
    %c0_52 = arith.constant 0 : index
    %80 = vector.load %arg13[%c2_51, %c0_52] : memref<18x64xf32, #tpu.memory_space<vmem>>, vector<16x64xf32>
    %81 = vector.extract_strided_slice %75 {offsets = [0, 0], sizes = [1, 64], strides = [1, 1]} : vector<3x64xf32> to vector<1x64xf32>
    %82 = vector.broadcast %81 : vector<1x64xf32> to vector<16x64xf32>
    %83 = arith.mulf %79, %82 : vector<16x64xf32>
    %84 = vector.extract_strided_slice %75 {offsets = [1, 0], sizes = [1, 64], strides = [1, 1]} : vector<3x64xf32> to vector<1x64xf32>
    %85 = vector.broadcast %84 : vector<1x64xf32> to vector<16x64xf32>
    %86 = arith.mulf %73, %85 : vector<16x64xf32>
    %87 = arith.addf %83, %86 : vector<16x64xf32>
    %88 = vector.extract_strided_slice %75 {offsets = [2, 0], sizes = [1, 64], strides = [1, 1]} : vector<3x64xf32> to vector<1x64xf32>
    %89 = vector.broadcast %88 : vector<1x64xf32> to vector<16x64xf32>
    %90 = arith.mulf %80, %89 : vector<16x64xf32>
    %91 = arith.addf %87, %90 : vector<16x64xf32>
    %92 = vector.broadcast %77 : vector<1x64xf32> to vector<16x64xf32>
    %93 = arith.addf %91, %92 : vector<16x64xf32>
    %94 = arith.addf %73, %93 : vector<16x64xf32>
    %cst_53 = arith.constant 0.000000e+00 : f32
    %95 = vector.broadcast %cst_53 : f32 to vector<16x64xf32>
    %96 = arith.maximumf %94, %95 : vector<16x64xf32>
    %c3 = arith.constant 3 : index
    %c0_54 = arith.constant 0 : index
    %c0_55 = arith.constant 0 : index
    %97 = vector.load %arg4[%c3, %c0_54, %c0_55] : memref<7x3x64xf32, #tpu.memory_space<vmem>>, vector<1x3x64xf32>
    %98 = vector.shape_cast %97 : vector<1x3x64xf32> to vector<3x64xf32>
    %c3_56 = arith.constant 3 : index
    %c0_57 = arith.constant 0 : index
    %c0_58 = arith.constant 0 : index
    %99 = vector.load %arg5[%c3_56, %c0_57, %c0_58] : memref<7x1x64xf32, #tpu.memory_space<vmem>>, vector<1x1x64xf32>
    %100 = vector.shape_cast %99 : vector<1x1x64xf32> to vector<1x64xf32>
    %c1_59 = arith.constant 1 : index
    %c0_60 = arith.constant 0 : index
    %101 = vector.load %arg13[%c1_59, %c0_60] : memref<18x64xf32, #tpu.memory_space<vmem>>, vector<16x64xf32>
    tpu.vector_store %arg13[%c1_59, %c0_60], %96 {strides = array<i32>} : memref<18x64xf32, #tpu.memory_space<vmem>>, vector<16x64xf32>,
    %c0_61 = arith.constant 0 : index
    %c0_62 = arith.constant 0 : index
    %102 = vector.load %arg13[%c0_61, %c0_62] : memref<18x64xf32, #tpu.memory_space<vmem>>, vector<16x64xf32>
    %c2_63 = arith.constant 2 : index
    %c0_64 = arith.constant 0 : index
    %103 = vector.load %arg13[%c2_63, %c0_64] : memref<18x64xf32, #tpu.memory_space<vmem>>, vector<16x64xf32>
    %104 = vector.extract_strided_slice %98 {offsets = [0, 0], sizes = [1, 64], strides = [1, 1]} : vector<3x64xf32> to vector<1x64xf32>
    %105 = vector.broadcast %104 : vector<1x64xf32> to vector<16x64xf32>
    %106 = arith.mulf %102, %105 : vector<16x64xf32>
    %107 = vector.extract_strided_slice %98 {offsets = [1, 0], sizes = [1, 64], strides = [1, 1]} : vector<3x64xf32> to vector<1x64xf32>
    %108 = vector.broadcast %107 : vector<1x64xf32> to vector<16x64xf32>
    %109 = arith.mulf %96, %108 : vector<16x64xf32>
    %110 = arith.addf %106, %109 : vector<16x64xf32>
    %111 = vector.extract_strided_slice %98 {offsets = [2, 0], sizes = [1, 64], strides = [1, 1]} : vector<3x64xf32> to vector<1x64xf32>
    %112 = vector.broadcast %111 : vector<1x64xf32> to vector<16x64xf32>
    %113 = arith.mulf %103, %112 : vector<16x64xf32>
    %114 = arith.addf %110, %113 : vector<16x64xf32>
    %115 = vector.broadcast %100 : vector<1x64xf32> to vector<16x64xf32>
    %116 = arith.addf %114, %115 : vector<16x64xf32>
    %117 = arith.addf %96, %116 : vector<16x64xf32>
    %cst_65 = arith.constant 0.000000e+00 : f32
    %118 = vector.broadcast %cst_65 : f32 to vector<16x64xf32>
    %119 = arith.maximumf %117, %118 : vector<16x64xf32>
    %c4 = arith.constant 4 : index
    %c0_66 = arith.constant 0 : index
    %c0_67 = arith.constant 0 : index
    %120 = vector.load %arg4[%c4, %c0_66, %c0_67] : memref<7x3x64xf32, #tpu.memory_space<vmem>>, vector<1x3x64xf32>
    %121 = vector.shape_cast %120 : vector<1x3x64xf32> to vector<3x64xf32>
    %c4_68 = arith.constant 4 : index
    %c0_69 = arith.constant 0 : index
    %c0_70 = arith.constant 0 : index
    %122 = vector.load %arg5[%c4_68, %c0_69, %c0_70] : memref<7x1x64xf32, #tpu.memory_space<vmem>>, vector<1x1x64xf32>
    %123 = vector.shape_cast %122 : vector<1x1x64xf32> to vector<1x64xf32>
    %c1_71 = arith.constant 1 : index
    %c0_72 = arith.constant 0 : index
    %124 = vector.load %arg13[%c1_71, %c0_72] : memref<18x64xf32, #tpu.memory_space<vmem>>, vector<16x64xf32>
    tpu.vector_store %arg13[%c1_71, %c0_72], %119 {strides = array<i32>} : memref<18x64xf32, #tpu.memory_space<vmem>>, vector<16x64xf32>,
    %c0_73 = arith.constant 0 : index
    %c0_74 = arith.constant 0 : index
    %125 = vector.load %arg13[%c0_73, %c0_74] : memref<18x64xf32, #tpu.memory_space<vmem>>, vector<16x64xf32>
    %c2_75 = arith.constant 2 : index
    %c0_76 = arith.constant 0 : index
    %126 = vector.load %arg13[%c2_75, %c0_76] : memref<18x64xf32, #tpu.memory_space<vmem>>, vector<16x64xf32>
    %127 = vector.extract_strided_slice %121 {offsets = [0, 0], sizes = [1, 64], strides = [1, 1]} : vector<3x64xf32> to vector<1x64xf32>
    %128 = vector.broadcast %127 : vector<1x64xf32> to vector<16x64xf32>
    %129 = arith.mulf %125, %128 : vector<16x64xf32>
    %130 = vector.extract_strided_slice %121 {offsets = [1, 0], sizes = [1, 64], strides = [1, 1]} : vector<3x64xf32> to vector<1x64xf32>
    %131 = vector.broadcast %130 : vector<1x64xf32> to vector<16x64xf32>
    %132 = arith.mulf %119, %131 : vector<16x64xf32>
    %133 = arith.addf %129, %132 : vector<16x64xf32>
    %134 = vector.extract_strided_slice %121 {offsets = [2, 0], sizes = [1, 64], strides = [1, 1]} : vector<3x64xf32> to vector<1x64xf32>
    %135 = vector.broadcast %134 : vector<1x64xf32> to vector<16x64xf32>
    %136 = arith.mulf %126, %135 : vector<16x64xf32>
    %137 = arith.addf %133, %136 : vector<16x64xf32>
    %138 = vector.broadcast %123 : vector<1x64xf32> to vector<16x64xf32>
    %139 = arith.addf %137, %138 : vector<16x64xf32>
    %140 = arith.addf %119, %139 : vector<16x64xf32>
    %cst_77 = arith.constant 0.000000e+00 : f32
    %141 = vector.broadcast %cst_77 : f32 to vector<16x64xf32>
    %142 = arith.maximumf %140, %141 : vector<16x64xf32>
    %c5 = arith.constant 5 : index
    %c0_78 = arith.constant 0 : index
    %c0_79 = arith.constant 0 : index
    %143 = vector.load %arg4[%c5, %c0_78, %c0_79] : memref<7x3x64xf32, #tpu.memory_space<vmem>>, vector<1x3x64xf32>
    %144 = vector.shape_cast %143 : vector<1x3x64xf32> to vector<3x64xf32>
    %c5_80 = arith.constant 5 : index
    %c0_81 = arith.constant 0 : index
    %c0_82 = arith.constant 0 : index
    %145 = vector.load %arg5[%c5_80, %c0_81, %c0_82] : memref<7x1x64xf32, #tpu.memory_space<vmem>>, vector<1x1x64xf32>
    %146 = vector.shape_cast %145 : vector<1x1x64xf32> to vector<1x64xf32>
    %c1_83 = arith.constant 1 : index
    %c0_84 = arith.constant 0 : index
    %147 = vector.load %arg13[%c1_83, %c0_84] : memref<18x64xf32, #tpu.memory_space<vmem>>, vector<16x64xf32>
    tpu.vector_store %arg13[%c1_83, %c0_84], %142 {strides = array<i32>} : memref<18x64xf32, #tpu.memory_space<vmem>>, vector<16x64xf32>,
    %c0_85 = arith.constant 0 : index
    %c0_86 = arith.constant 0 : index
    %148 = vector.load %arg13[%c0_85, %c0_86] : memref<18x64xf32, #tpu.memory_space<vmem>>, vector<16x64xf32>
    %c2_87 = arith.constant 2 : index
    %c0_88 = arith.constant 0 : index
    %149 = vector.load %arg13[%c2_87, %c0_88] : memref<18x64xf32, #tpu.memory_space<vmem>>, vector<16x64xf32>
    %150 = vector.extract_strided_slice %144 {offsets = [0, 0], sizes = [1, 64], strides = [1, 1]} : vector<3x64xf32> to vector<1x64xf32>
    %151 = vector.broadcast %150 : vector<1x64xf32> to vector<16x64xf32>
    %152 = arith.mulf %148, %151 : vector<16x64xf32>
    %153 = vector.extract_strided_slice %144 {offsets = [1, 0], sizes = [1, 64], strides = [1, 1]} : vector<3x64xf32> to vector<1x64xf32>
    %154 = vector.broadcast %153 : vector<1x64xf32> to vector<16x64xf32>
    %155 = arith.mulf %142, %154 : vector<16x64xf32>
    %156 = arith.addf %152, %155 : vector<16x64xf32>
    %157 = vector.extract_strided_slice %144 {offsets = [2, 0], sizes = [1, 64], strides = [1, 1]} : vector<3x64xf32> to vector<1x64xf32>
    %158 = vector.broadcast %157 : vector<1x64xf32> to vector<16x64xf32>
    %159 = arith.mulf %149, %158 : vector<16x64xf32>
    %160 = arith.addf %156, %159 : vector<16x64xf32>
    %161 = vector.broadcast %146 : vector<1x64xf32> to vector<16x64xf32>
    %162 = arith.addf %160, %161 : vector<16x64xf32>
    %163 = arith.addf %142, %162 : vector<16x64xf32>
    %cst_89 = arith.constant 0.000000e+00 : f32
    %164 = vector.broadcast %cst_89 : f32 to vector<16x64xf32>
    %165 = arith.maximumf %163, %164 : vector<16x64xf32>
    %c6 = arith.constant 6 : index
    %c0_90 = arith.constant 0 : index
    %c0_91 = arith.constant 0 : index
    %166 = vector.load %arg4[%c6, %c0_90, %c0_91] : memref<7x3x64xf32, #tpu.memory_space<vmem>>, vector<1x3x64xf32>
    %167 = vector.shape_cast %166 : vector<1x3x64xf32> to vector<3x64xf32>
    %c6_92 = arith.constant 6 : index
    %c0_93 = arith.constant 0 : index
    %c0_94 = arith.constant 0 : index
    %168 = vector.load %arg5[%c6_92, %c0_93, %c0_94] : memref<7x1x64xf32, #tpu.memory_space<vmem>>, vector<1x1x64xf32>
    %169 = vector.shape_cast %168 : vector<1x1x64xf32> to vector<1x64xf32>
    %c1_95 = arith.constant 1 : index
    %c0_96 = arith.constant 0 : index
    %170 = vector.load %arg13[%c1_95, %c0_96] : memref<18x64xf32, #tpu.memory_space<vmem>>, vector<16x64xf32>
    tpu.vector_store %arg13[%c1_95, %c0_96], %165 {strides = array<i32>} : memref<18x64xf32, #tpu.memory_space<vmem>>, vector<16x64xf32>,
    %c0_97 = arith.constant 0 : index
    %c0_98 = arith.constant 0 : index
    %171 = vector.load %arg13[%c0_97, %c0_98] : memref<18x64xf32, #tpu.memory_space<vmem>>, vector<16x64xf32>
    %c2_99 = arith.constant 2 : index
    %c0_100 = arith.constant 0 : index
    %172 = vector.load %arg13[%c2_99, %c0_100] : memref<18x64xf32, #tpu.memory_space<vmem>>, vector<16x64xf32>
    %173 = vector.extract_strided_slice %167 {offsets = [0, 0], sizes = [1, 64], strides = [1, 1]} : vector<3x64xf32> to vector<1x64xf32>
    %174 = vector.broadcast %173 : vector<1x64xf32> to vector<16x64xf32>
    %175 = arith.mulf %171, %174 : vector<16x64xf32>
    %176 = vector.extract_strided_slice %167 {offsets = [1, 0], sizes = [1, 64], strides = [1, 1]} : vector<3x64xf32> to vector<1x64xf32>
    %177 = vector.broadcast %176 : vector<1x64xf32> to vector<16x64xf32>
    %178 = arith.mulf %165, %177 : vector<16x64xf32>
    %179 = arith.addf %175, %178 : vector<16x64xf32>
    %180 = vector.extract_strided_slice %167 {offsets = [2, 0], sizes = [1, 64], strides = [1, 1]} : vector<3x64xf32> to vector<1x64xf32>
    %181 = vector.broadcast %180 : vector<1x64xf32> to vector<16x64xf32>
    %182 = arith.mulf %172, %181 : vector<16x64xf32>
    %183 = arith.addf %179, %182 : vector<16x64xf32>
    %184 = vector.broadcast %169 : vector<1x64xf32> to vector<16x64xf32>
    %185 = arith.addf %183, %184 : vector<16x64xf32>
    %186 = arith.addf %165, %185 : vector<16x64xf32>
    %cst_101 = arith.constant 0.000000e+00 : f32
    %187 = vector.broadcast %cst_101 : f32 to vector<16x64xf32>
    %188 = arith.maximumf %186, %187 : vector<16x64xf32>
    %c1_102 = arith.constant 1 : index
    %c0_103 = arith.constant 0 : index
    %189 = vector.load %arg13[%c1_102, %c0_103] : memref<18x64xf32, #tpu.memory_space<vmem>>, vector<16x64xf32>
    tpu.vector_store %arg13[%c1_102, %c0_103], %188 {strides = array<i32>} : memref<18x64xf32, #tpu.memory_space<vmem>>, vector<16x64xf32>,
    %c0_104 = arith.constant 0 : index
    %c0_105 = arith.constant 0 : index
    %190 = vector.load %arg13[%c0_104, %c0_105] : memref<18x64xf32, #tpu.memory_space<vmem>>, vector<16x64xf32>
    %c2_106 = arith.constant 2 : index
    %c0_107 = arith.constant 0 : index
    %191 = vector.load %arg13[%c2_106, %c0_107] : memref<18x64xf32, #tpu.memory_space<vmem>>, vector<16x64xf32>
    %c0_108 = arith.constant 0 : index
    %c0_109 = arith.constant 0 : index
    %192 = vector.load %arg7[%c0_108, %c0_109] : memref<1x128xf32, #tpu.memory_space<vmem>>, vector<1x128xf32>
    %cst_110 = arith.constant 0.000000e+00 : f32
    %193 = vector.broadcast %cst_110 : f32 to vector<16x128xf32>
    %c0_111 = arith.constant 0 : index
    %c0_112 = arith.constant 0 : index
    %c0_113 = arith.constant 0 : index
    %194 = vector.load %arg6[%c0_111, %c0_112, %c0_113] : memref<5x64x128xf32, #tpu.memory_space<vmem>>, vector<1x64x128xf32>
    %195 = vector.shape_cast %194 : vector<1x64x128xf32> to vector<64x128xf32>
    %cst_114 = arith.constant dense<0.000000e+00> : vector<16x128xf32>
    %196 = tpu.matmul %191, %195, %cst_114 {dimension_numbers = #tpu.dot_dimension_numbers<[1], [0], [0], [1], [0, 0, 1, 1], [], []>} : vector<16x64xf32>, vector<64x128xf32>, vector<16x128xf32> -> vector<16x128xf32>
    %197 = arith.addf %193, %196 : vector<16x128xf32>
    %c2_115 = arith.constant 2 : index
    %c0_116 = arith.constant 0 : index
    %c0_117 = arith.constant 0 : index
    %198 = vector.load %arg6[%c2_115, %c0_116, %c0_117] : memref<5x64x128xf32, #tpu.memory_space<vmem>>, vector<1x64x128xf32>
    %199 = vector.shape_cast %198 : vector<1x64x128xf32> to vector<64x128xf32>
    %cst_118 = arith.constant dense<0.000000e+00> : vector<16x128xf32>
    %200 = tpu.matmul %188, %199, %cst_118 {dimension_numbers = #tpu.dot_dimension_numbers<[1], [0], [0], [1], [0, 0, 1, 1], [], []>} : vector<16x64xf32>, vector<64x128xf32>, vector<16x128xf32> -> vector<16x128xf32>
    %201 = arith.addf %197, %200 : vector<16x128xf32>
    %c4_119 = arith.constant 4 : index
    %c0_120 = arith.constant 0 : index
    %c0_121 = arith.constant 0 : index
    %202 = vector.load %arg6[%c4_119, %c0_120, %c0_121] : memref<5x64x128xf32, #tpu.memory_space<vmem>>, vector<1x64x128xf32>
    %203 = vector.shape_cast %202 : vector<1x64x128xf32> to vector<64x128xf32>
    %cst_122 = arith.constant dense<0.000000e+00> : vector<16x128xf32>
    %204 = tpu.matmul %190, %203, %cst_122 {dimension_numbers = #tpu.dot_dimension_numbers<[1], [0], [0], [1], [0, 0, 1, 1], [], []>} : vector<16x64xf32>, vector<64x128xf32>, vector<16x128xf32> -> vector<16x128xf32>
    %205 = arith.addf %201, %204 : vector<16x128xf32>
    %206 = vector.broadcast %192 : vector<1x128xf32> to vector<16x128xf32>
    %207 = arith.addf %205, %206 : vector<16x128xf32>
    %cst_123 = arith.constant 0.000000e+00 : f32
    %208 = vector.broadcast %cst_123 : f32 to vector<16x128xf32>
    %209 = arith.maximumf %207, %208 : vector<16x128xf32>
    %cst_124 = arith.constant 0.000000e+00 : f32
    %210 = vector.broadcast %cst_124 : f32 to vector<16x128xf32>
    %c1_125 = arith.constant 1 : index
    %c0_126 = arith.constant 0 : index
    %c0_127 = arith.constant 0 : index
    %211 = vector.load %arg6[%c1_125, %c0_126, %c0_127] : memref<5x64x128xf32, #tpu.memory_space<vmem>>, vector<1x64x128xf32>
    %212 = vector.shape_cast %211 : vector<1x64x128xf32> to vector<64x128xf32>
    %cst_128 = arith.constant dense<0.000000e+00> : vector<16x128xf32>
    %213 = tpu.matmul %191, %212, %cst_128 {dimension_numbers = #tpu.dot_dimension_numbers<[1], [0], [0], [1], [0, 0, 1, 1], [], []>} : vector<16x64xf32>, vector<64x128xf32>, vector<16x128xf32> -> vector<16x128xf32>
    %214 = arith.addf %210, %213 : vector<16x128xf32>
    %c3_129 = arith.constant 3 : index
    %c0_130 = arith.constant 0 : index
    %c0_131 = arith.constant 0 : index
    %215 = vector.load %arg6[%c3_129, %c0_130, %c0_131] : memref<5x64x128xf32, #tpu.memory_space<vmem>>, vector<1x64x128xf32>
    %216 = vector.shape_cast %215 : vector<1x64x128xf32> to vector<64x128xf32>
    %cst_132 = arith.constant dense<0.000000e+00> : vector<16x128xf32>
    %217 = tpu.matmul %188, %216, %cst_132 {dimension_numbers = #tpu.dot_dimension_numbers<[1], [0], [0], [1], [0, 0, 1, 1], [], []>} : vector<16x64xf32>, vector<64x128xf32>, vector<16x128xf32> -> vector<16x128xf32>
    %218 = arith.addf %214, %217 : vector<16x128xf32>
    %219 = vector.broadcast %192 : vector<1x128xf32> to vector<16x128xf32>
    %220 = arith.addf %218, %219 : vector<16x128xf32>
    %cst_133 = arith.constant 0.000000e+00 : f32
    %221 = vector.broadcast %cst_133 : f32 to vector<16x128xf32>
    %222 = arith.maximumf %220, %221 : vector<16x128xf32>
    %c0_134 = arith.constant 0 : index
    %c0_135 = arith.constant 0 : index
    %c0_136 = arith.constant 0 : index
    %223 = vector.load %arg8[%c0_134, %c0_135, %c0_136] : memref<4x3x128xf32, #tpu.memory_space<vmem>>, vector<1x3x128xf32>
    %224 = vector.shape_cast %223 : vector<1x3x128xf32> to vector<3x128xf32>
    %c0_137 = arith.constant 0 : index
    %c0_138 = arith.constant 0 : index
    %c0_139 = arith.constant 0 : index
    %225 = vector.load %arg9[%c0_137, %c0_138, %c0_139] : memref<4x1x128xf32, #tpu.memory_space<vmem>>, vector<1x1x128xf32>
    %226 = vector.shape_cast %225 : vector<1x1x128xf32> to vector<1x128xf32>
    %c1_140 = arith.constant 1 : index
    %c0_141 = arith.constant 0 : index
    %227 = vector.load %arg14[%c1_140, %c0_141] : memref<18x128xf32, #tpu.memory_space<vmem>>, vector<16x128xf32>
    tpu.vector_store %arg14[%c1_140, %c0_141], %222 {strides = array<i32>} : memref<18x128xf32, #tpu.memory_space<vmem>>, vector<16x128xf32>,
    %c0_142 = arith.constant 0 : index
    %c0_143 = arith.constant 0 : index
    %228 = vector.load %arg14[%c0_142, %c0_143] : memref<18x128xf32, #tpu.memory_space<vmem>>, vector<16x128xf32>
    %c1_144 = arith.constant 1 : index
    %c0_145 = arith.constant 0 : index
    %229 = vector.load %arg14[%c1_144, %c0_145] : memref<18x128xf32, #tpu.memory_space<vmem>>, vector<16x128xf32>
    tpu.vector_store %arg14[%c1_144, %c0_145], %209 {strides = array<i32>} : memref<18x128xf32, #tpu.memory_space<vmem>>, vector<16x128xf32>,
    %c2_146 = arith.constant 2 : index
    %c0_147 = arith.constant 0 : index
    %230 = vector.load %arg14[%c2_146, %c0_147] : memref<18x128xf32, #tpu.memory_space<vmem>>, vector<16x128xf32>
    %231 = vector.extract_strided_slice %224 {offsets = [0, 0], sizes = [1, 128], strides = [1, 1]} : vector<3x128xf32> to vector<1x128xf32>
    %232 = vector.broadcast %231 : vector<1x128xf32> to vector<16x128xf32>
    %233 = arith.mulf %228, %232 : vector<16x128xf32>
    %234 = vector.extract_strided_slice %224 {offsets = [1, 0], sizes = [1, 128], strides = [1, 1]} : vector<3x128xf32> to vector<1x128xf32>
    %235 = vector.broadcast %234 : vector<1x128xf32> to vector<16x128xf32>
    %236 = arith.mulf %209, %235 : vector<16x128xf32>
    %237 = arith.addf %233, %236 : vector<16x128xf32>
    %238 = vector.extract_strided_slice %224 {offsets = [2, 0], sizes = [1, 128], strides = [1, 1]} : vector<3x128xf32> to vector<1x128xf32>
    %239 = vector.broadcast %238 : vector<1x128xf32> to vector<16x128xf32>
    %240 = arith.mulf %222, %239 : vector<16x128xf32>
    %241 = arith.addf %237, %240 : vector<16x128xf32>
    %242 = vector.broadcast %226 : vector<1x128xf32> to vector<16x128xf32>
    %243 = arith.addf %241, %242 : vector<16x128xf32>
    %244 = arith.addf %209, %243 : vector<16x128xf32>
    %cst_148 = arith.constant 0.000000e+00 : f32
    %245 = vector.broadcast %cst_148 : f32 to vector<16x128xf32>
    %246 = arith.maximumf %244, %245 : vector<16x128xf32>
    %247 = vector.extract_strided_slice %224 {offsets = [0, 0], sizes = [1, 128], strides = [1, 1]} : vector<3x128xf32> to vector<1x128xf32>
    %248 = vector.broadcast %247 : vector<1x128xf32> to vector<16x128xf32>
    %249 = arith.mulf %209, %248 : vector<16x128xf32>
    %250 = vector.extract_strided_slice %224 {offsets = [1, 0], sizes = [1, 128], strides = [1, 1]} : vector<3x128xf32> to vector<1x128xf32>
    %251 = vector.broadcast %250 : vector<1x128xf32> to vector<16x128xf32>
    %252 = arith.mulf %222, %251 : vector<16x128xf32>
    %253 = arith.addf %249, %252 : vector<16x128xf32>
    %254 = vector.extract_strided_slice %224 {offsets = [2, 0], sizes = [1, 128], strides = [1, 1]} : vector<3x128xf32> to vector<1x128xf32>
    %255 = vector.broadcast %254 : vector<1x128xf32> to vector<16x128xf32>
    %256 = arith.mulf %230, %255 : vector<16x128xf32>
    %257 = arith.addf %253, %256 : vector<16x128xf32>
    %258 = vector.broadcast %226 : vector<1x128xf32> to vector<16x128xf32>
    %259 = arith.addf %257, %258 : vector<16x128xf32>
    %260 = arith.addf %222, %259 : vector<16x128xf32>
    %cst_149 = arith.constant 0.000000e+00 : f32
    %261 = vector.broadcast %cst_149 : f32 to vector<16x128xf32>
    %262 = arith.maximumf %260, %261 : vector<16x128xf32>
    %c1_150 = arith.constant 1 : index
    %c0_151 = arith.constant 0 : index
    %c0_152 = arith.constant 0 : index
    %263 = vector.load %arg8[%c1_150, %c0_151, %c0_152] : memref<4x3x128xf32, #tpu.memory_space<vmem>>, vector<1x3x128xf32>
    %264 = vector.shape_cast %263 : vector<1x3x128xf32> to vector<3x128xf32>
    %c1_153 = arith.constant 1 : index
    %c0_154 = arith.constant 0 : index
    %c0_155 = arith.constant 0 : index
    %265 = vector.load %arg9[%c1_153, %c0_154, %c0_155] : memref<4x1x128xf32, #tpu.memory_space<vmem>>, vector<1x1x128xf32>
    %266 = vector.shape_cast %265 : vector<1x1x128xf32> to vector<1x128xf32>
    %c1_156 = arith.constant 1 : index
    %c0_157 = arith.constant 0 : index
    %267 = vector.load %arg14[%c1_156, %c0_157] : memref<18x128xf32, #tpu.memory_space<vmem>>, vector<16x128xf32>
    tpu.vector_store %arg14[%c1_156, %c0_157], %262 {strides = array<i32>} : memref<18x128xf32, #tpu.memory_space<vmem>>, vector<16x128xf32>,
    %c0_158 = arith.constant 0 : index
    %c0_159 = arith.constant 0 : index
    %268 = vector.load %arg14[%c0_158, %c0_159] : memref<18x128xf32, #tpu.memory_space<vmem>>, vector<16x128xf32>
    %c1_160 = arith.constant 1 : index
    %c0_161 = arith.constant 0 : index
    %269 = vector.load %arg14[%c1_160, %c0_161] : memref<18x128xf32, #tpu.memory_space<vmem>>, vector<16x128xf32>
    tpu.vector_store %arg14[%c1_160, %c0_161], %246 {strides = array<i32>} : memref<18x128xf32, #tpu.memory_space<vmem>>, vector<16x128xf32>,
    %c2_162 = arith.constant 2 : index
    %c0_163 = arith.constant 0 : index
    %270 = vector.load %arg14[%c2_162, %c0_163] : memref<18x128xf32, #tpu.memory_space<vmem>>, vector<16x128xf32>
    %271 = vector.extract_strided_slice %264 {offsets = [0, 0], sizes = [1, 128], strides = [1, 1]} : vector<3x128xf32> to vector<1x128xf32>
    %272 = vector.broadcast %271 : vector<1x128xf32> to vector<16x128xf32>
    %273 = arith.mulf %268, %272 : vector<16x128xf32>
    %274 = vector.extract_strided_slice %264 {offsets = [1, 0], sizes = [1, 128], strides = [1, 1]} : vector<3x128xf32> to vector<1x128xf32>
    %275 = vector.broadcast %274 : vector<1x128xf32> to vector<16x128xf32>
    %276 = arith.mulf %246, %275 : vector<16x128xf32>
    %277 = arith.addf %273, %276 : vector<16x128xf32>
    %278 = vector.extract_strided_slice %264 {offsets = [2, 0], sizes = [1, 128], strides = [1, 1]} : vector<3x128xf32> to vector<1x128xf32>
    %279 = vector.broadcast %278 : vector<1x128xf32> to vector<16x128xf32>
    %280 = arith.mulf %262, %279 : vector<16x128xf32>
    %281 = arith.addf %277, %280 : vector<16x128xf32>
    %282 = vector.broadcast %266 : vector<1x128xf32> to vector<16x128xf32>
    %283 = arith.addf %281, %282 : vector<16x128xf32>
    %284 = arith.addf %246, %283 : vector<16x128xf32>
    %cst_164 = arith.constant 0.000000e+00 : f32
    %285 = vector.broadcast %cst_164 : f32 to vector<16x128xf32>
    %286 = arith.maximumf %284, %285 : vector<16x128xf32>
    %287 = vector.extract_strided_slice %264 {offsets = [0, 0], sizes = [1, 128], strides = [1, 1]} : vector<3x128xf32> to vector<1x128xf32>
    %288 = vector.broadcast %287 : vector<1x128xf32> to vector<16x128xf32>
    %289 = arith.mulf %246, %288 : vector<16x128xf32>
    %290 = vector.extract_strided_slice %264 {offsets = [1, 0], sizes = [1, 128], strides = [1, 1]} : vector<3x128xf32> to vector<1x128xf32>
    %291 = vector.broadcast %290 : vector<1x128xf32> to vector<16x128xf32>
    %292 = arith.mulf %262, %291 : vector<16x128xf32>
    %293 = arith.addf %289, %292 : vector<16x128xf32>
    %294 = vector.extract_strided_slice %264 {offsets = [2, 0], sizes = [1, 128], strides = [1, 1]} : vector<3x128xf32> to vector<1x128xf32>
    %295 = vector.broadcast %294 : vector<1x128xf32> to vector<16x128xf32>
    %296 = arith.mulf %270, %295 : vector<16x128xf32>
    %297 = arith.addf %293, %296 : vector<16x128xf32>
    %298 = vector.broadcast %266 : vector<1x128xf32> to vector<16x128xf32>
    %299 = arith.addf %297, %298 : vector<16x128xf32>
    %300 = arith.addf %262, %299 : vector<16x128xf32>
    %cst_165 = arith.constant 0.000000e+00 : f32
    %301 = vector.broadcast %cst_165 : f32 to vector<16x128xf32>
    %302 = arith.maximumf %300, %301 : vector<16x128xf32>
    %c2_166 = arith.constant 2 : index
    %c0_167 = arith.constant 0 : index
    %c0_168 = arith.constant 0 : index
    %303 = vector.load %arg8[%c2_166, %c0_167, %c0_168] : memref<4x3x128xf32, #tpu.memory_space<vmem>>, vector<1x3x128xf32>
    %304 = vector.shape_cast %303 : vector<1x3x128xf32> to vector<3x128xf32>
    %c2_169 = arith.constant 2 : index
    %c0_170 = arith.constant 0 : index
    %c0_171 = arith.constant 0 : index
    %305 = vector.load %arg9[%c2_169, %c0_170, %c0_171] : memref<4x1x128xf32, #tpu.memory_space<vmem>>, vector<1x1x128xf32>
    %306 = vector.shape_cast %305 : vector<1x1x128xf32> to vector<1x128xf32>
    %c1_172 = arith.constant 1 : index
    %c0_173 = arith.constant 0 : index
    %307 = vector.load %arg14[%c1_172, %c0_173] : memref<18x128xf32, #tpu.memory_space<vmem>>, vector<16x128xf32>
    tpu.vector_store %arg14[%c1_172, %c0_173], %302 {strides = array<i32>} : memref<18x128xf32, #tpu.memory_space<vmem>>, vector<16x128xf32>,
    %c0_174 = arith.constant 0 : index
    %c0_175 = arith.constant 0 : index
    %308 = vector.load %arg14[%c0_174, %c0_175] : memref<18x128xf32, #tpu.memory_space<vmem>>, vector<16x128xf32>
    %c1_176 = arith.constant 1 : index
    %c0_177 = arith.constant 0 : index
    %309 = vector.load %arg14[%c1_176, %c0_177] : memref<18x128xf32, #tpu.memory_space<vmem>>, vector<16x128xf32>
    tpu.vector_store %arg14[%c1_176, %c0_177], %286 {strides = array<i32>} : memref<18x128xf32, #tpu.memory_space<vmem>>, vector<16x128xf32>,
    %c2_178 = arith.constant 2 : index
    %c0_179 = arith.constant 0 : index
    %310 = vector.load %arg14[%c2_178, %c0_179] : memref<18x128xf32, #tpu.memory_space<vmem>>, vector<16x128xf32>
    %311 = vector.extract_strided_slice %304 {offsets = [0, 0], sizes = [1, 128], strides = [1, 1]} : vector<3x128xf32> to vector<1x128xf32>
    %312 = vector.broadcast %311 : vector<1x128xf32> to vector<16x128xf32>
    %313 = arith.mulf %308, %312 : vector<16x128xf32>
    %314 = vector.extract_strided_slice %304 {offsets = [1, 0], sizes = [1, 128], strides = [1, 1]} : vector<3x128xf32> to vector<1x128xf32>
    %315 = vector.broadcast %314 : vector<1x128xf32> to vector<16x128xf32>
    %316 = arith.mulf %286, %315 : vector<16x128xf32>
    %317 = arith.addf %313, %316 : vector<16x128xf32>
    %318 = vector.extract_strided_slice %304 {offsets = [2, 0], sizes = [1, 128], strides = [1, 1]} : vector<3x128xf32> to vector<1x128xf32>
    %319 = vector.broadcast %318 : vector<1x128xf32> to vector<16x128xf32>
    %320 = arith.mulf %302, %319 : vector<16x128xf32>
    %321 = arith.addf %317, %320 : vector<16x128xf32>
    %322 = vector.broadcast %306 : vector<1x128xf32> to vector<16x128xf32>
    %323 = arith.addf %321, %322 : vector<16x128xf32>
    %324 = arith.addf %286, %323 : vector<16x128xf32>
    %cst_180 = arith.constant 0.000000e+00 : f32
    %325 = vector.broadcast %cst_180 : f32 to vector<16x128xf32>
    %326 = arith.maximumf %324, %325 : vector<16x128xf32>
    %327 = vector.extract_strided_slice %304 {offsets = [0, 0], sizes = [1, 128], strides = [1, 1]} : vector<3x128xf32> to vector<1x128xf32>
    %328 = vector.broadcast %327 : vector<1x128xf32> to vector<16x128xf32>
    %329 = arith.mulf %286, %328 : vector<16x128xf32>
    %330 = vector.extract_strided_slice %304 {offsets = [1, 0], sizes = [1, 128], strides = [1, 1]} : vector<3x128xf32> to vector<1x128xf32>
    %331 = vector.broadcast %330 : vector<1x128xf32> to vector<16x128xf32>
    %332 = arith.mulf %302, %331 : vector<16x128xf32>
    %333 = arith.addf %329, %332 : vector<16x128xf32>
    %334 = vector.extract_strided_slice %304 {offsets = [2, 0], sizes = [1, 128], strides = [1, 1]} : vector<3x128xf32> to vector<1x128xf32>
    %335 = vector.broadcast %334 : vector<1x128xf32> to vector<16x128xf32>
    %336 = arith.mulf %310, %335 : vector<16x128xf32>
    %337 = arith.addf %333, %336 : vector<16x128xf32>
    %338 = vector.broadcast %306 : vector<1x128xf32> to vector<16x128xf32>
    %339 = arith.addf %337, %338 : vector<16x128xf32>
    %340 = arith.addf %302, %339 : vector<16x128xf32>
    %cst_181 = arith.constant 0.000000e+00 : f32
    %341 = vector.broadcast %cst_181 : f32 to vector<16x128xf32>
    %342 = arith.maximumf %340, %341 : vector<16x128xf32>
    %c3_182 = arith.constant 3 : index
    %c0_183 = arith.constant 0 : index
    %c0_184 = arith.constant 0 : index
    %343 = vector.load %arg8[%c3_182, %c0_183, %c0_184] : memref<4x3x128xf32, #tpu.memory_space<vmem>>, vector<1x3x128xf32>
    %344 = vector.shape_cast %343 : vector<1x3x128xf32> to vector<3x128xf32>
    %c3_185 = arith.constant 3 : index
    %c0_186 = arith.constant 0 : index
    %c0_187 = arith.constant 0 : index
    %345 = vector.load %arg9[%c3_185, %c0_186, %c0_187] : memref<4x1x128xf32, #tpu.memory_space<vmem>>, vector<1x1x128xf32>
    %346 = vector.shape_cast %345 : vector<1x1x128xf32> to vector<1x128xf32>
    %c1_188 = arith.constant 1 : index
    %c0_189 = arith.constant 0 : index
    %347 = vector.load %arg14[%c1_188, %c0_189] : memref<18x128xf32, #tpu.memory_space<vmem>>, vector<16x128xf32>
    tpu.vector_store %arg14[%c1_188, %c0_189], %342 {strides = array<i32>} : memref<18x128xf32, #tpu.memory_space<vmem>>, vector<16x128xf32>,
    %c0_190 = arith.constant 0 : index
    %c0_191 = arith.constant 0 : index
    %348 = vector.load %arg14[%c0_190, %c0_191] : memref<18x128xf32, #tpu.memory_space<vmem>>, vector<16x128xf32>
    %c1_192 = arith.constant 1 : index
    %c0_193 = arith.constant 0 : index
    %349 = vector.load %arg14[%c1_192, %c0_193] : memref<18x128xf32, #tpu.memory_space<vmem>>, vector<16x128xf32>
    tpu.vector_store %arg14[%c1_192, %c0_193], %326 {strides = array<i32>} : memref<18x128xf32, #tpu.memory_space<vmem>>, vector<16x128xf32>,
    %c2_194 = arith.constant 2 : index
    %c0_195 = arith.constant 0 : index
    %350 = vector.load %arg14[%c2_194, %c0_195] : memref<18x128xf32, #tpu.memory_space<vmem>>, vector<16x128xf32>
    %351 = vector.extract_strided_slice %344 {offsets = [0, 0], sizes = [1, 128], strides = [1, 1]} : vector<3x128xf32> to vector<1x128xf32>
    %352 = vector.broadcast %351 : vector<1x128xf32> to vector<16x128xf32>
    %353 = arith.mulf %348, %352 : vector<16x128xf32>
    %354 = vector.extract_strided_slice %344 {offsets = [1, 0], sizes = [1, 128], strides = [1, 1]} : vector<3x128xf32> to vector<1x128xf32>
    %355 = vector.broadcast %354 : vector<1x128xf32> to vector<16x128xf32>
    %356 = arith.mulf %326, %355 : vector<16x128xf32>
    %357 = arith.addf %353, %356 : vector<16x128xf32>
    %358 = vector.extract_strided_slice %344 {offsets = [2, 0], sizes = [1, 128], strides = [1, 1]} : vector<3x128xf32> to vector<1x128xf32>
    %359 = vector.broadcast %358 : vector<1x128xf32> to vector<16x128xf32>
    %360 = arith.mulf %342, %359 : vector<16x128xf32>
    %361 = arith.addf %357, %360 : vector<16x128xf32>
    %362 = vector.broadcast %346 : vector<1x128xf32> to vector<16x128xf32>
    %363 = arith.addf %361, %362 : vector<16x128xf32>
    %364 = arith.addf %326, %363 : vector<16x128xf32>
    %cst_196 = arith.constant 0.000000e+00 : f32
    %365 = vector.broadcast %cst_196 : f32 to vector<16x128xf32>
    %366 = arith.maximumf %364, %365 : vector<16x128xf32>
    %367 = vector.extract_strided_slice %344 {offsets = [0, 0], sizes = [1, 128], strides = [1, 1]} : vector<3x128xf32> to vector<1x128xf32>
    %368 = vector.broadcast %367 : vector<1x128xf32> to vector<16x128xf32>
    %369 = arith.mulf %326, %368 : vector<16x128xf32>
    %370 = vector.extract_strided_slice %344 {offsets = [1, 0], sizes = [1, 128], strides = [1, 1]} : vector<3x128xf32> to vector<1x128xf32>
    %371 = vector.broadcast %370 : vector<1x128xf32> to vector<16x128xf32>
    %372 = arith.mulf %342, %371 : vector<16x128xf32>
    %373 = arith.addf %369, %372 : vector<16x128xf32>
    %374 = vector.extract_strided_slice %344 {offsets = [2, 0], sizes = [1, 128], strides = [1, 1]} : vector<3x128xf32> to vector<1x128xf32>
    %375 = vector.broadcast %374 : vector<1x128xf32> to vector<16x128xf32>
    %376 = arith.mulf %350, %375 : vector<16x128xf32>
    %377 = arith.addf %373, %376 : vector<16x128xf32>
    %378 = vector.broadcast %346 : vector<1x128xf32> to vector<16x128xf32>
    %379 = arith.addf %377, %378 : vector<16x128xf32>
    %380 = arith.addf %342, %379 : vector<16x128xf32>
    %cst_197 = arith.constant 0.000000e+00 : f32
    %381 = vector.broadcast %cst_197 : f32 to vector<16x128xf32>
    %382 = arith.maximumf %380, %381 : vector<16x128xf32>
    %c0_198 = arith.constant 0 : index
    %c0_199 = arith.constant 0 : index
    %c0_200 = arith.constant 0 : index
    %383 = vector.load %arg10[%c0_198, %c0_199, %c0_200] : memref<3x128x32xf32, #tpu.memory_space<vmem>>, vector<3x128x32xf32>
    %c0_201 = arith.constant 0 : index
    %c0_202 = arith.constant 0 : index
    %384 = vector.load %arg11[%c0_201, %c0_202] : memref<1x32xf32, #tpu.memory_space<vmem>>, vector<1x32xf32>
    %c1_203 = arith.constant 1 : index
    %c0_204 = arith.constant 0 : index
    %385 = vector.load %arg14[%c1_203, %c0_204] : memref<18x128xf32, #tpu.memory_space<vmem>>, vector<16x128xf32>
    tpu.vector_store %arg14[%c1_203, %c0_204], %382 {strides = array<i32>} : memref<18x128xf32, #tpu.memory_space<vmem>>, vector<16x128xf32>,
    %c0_205 = arith.constant 0 : index
    %c0_206 = arith.constant 0 : index
    %386 = vector.load %arg14[%c0_205, %c0_206] : memref<18x128xf32, #tpu.memory_space<vmem>>, vector<16x128xf32>
    %c1_207 = arith.constant 1 : index
    %c0_208 = arith.constant 0 : index
    %387 = vector.load %arg14[%c1_207, %c0_208] : memref<18x128xf32, #tpu.memory_space<vmem>>, vector<16x128xf32>
    tpu.vector_store %arg14[%c1_207, %c0_208], %366 {strides = array<i32>} : memref<18x128xf32, #tpu.memory_space<vmem>>, vector<16x128xf32>,
    %c2_209 = arith.constant 2 : index
    %c0_210 = arith.constant 0 : index
    %388 = vector.load %arg14[%c2_209, %c0_210] : memref<18x128xf32, #tpu.memory_space<vmem>>, vector<16x128xf32>
    %389 = vector.extract_strided_slice %1 {offsets = [1, 0], sizes = [15, 32], strides = [1, 1]} : vector<16x32xf32> to vector<15x32xf32>
    %390 = vector.extract_strided_slice %1 {offsets = [15, 0], sizes = [1, 32], strides = [1, 1]} : vector<16x32xf32> to vector<1x32xf32>
    %391 = tpu.concatenate %389, %390 in 0 : vector<15x32xf32>, vector<1x32xf32> -> vector<16x32xf32>
    %392 = vector.extract_strided_slice %383 {offsets = [0, 0, 0], sizes = [1, 128, 32], strides = [1, 1, 1]} : vector<3x128x32xf32> to vector<1x128x32xf32>
    %393 = vector.shape_cast %392 : vector<1x128x32xf32> to vector<128x32xf32>
    %cst_211 = arith.constant dense<0.000000e+00> : vector<16x32xf32>
    %394 = tpu.matmul %386, %393, %cst_211 {dimension_numbers = #tpu.dot_dimension_numbers<[1], [0], [0], [1], [0, 0, 1, 1], [], []>} : vector<16x128xf32>, vector<128x32xf32>, vector<16x32xf32> -> vector<16x32xf32>
    %395 = vector.extract_strided_slice %383 {offsets = [1, 0, 0], sizes = [1, 128, 32], strides = [1, 1, 1]} : vector<3x128x32xf32> to vector<1x128x32xf32>
    %396 = vector.shape_cast %395 : vector<1x128x32xf32> to vector<128x32xf32>
    %cst_212 = arith.constant dense<0.000000e+00> : vector<16x32xf32>
    %397 = tpu.matmul %366, %396, %cst_212 {dimension_numbers = #tpu.dot_dimension_numbers<[1], [0], [0], [1], [0, 0, 1, 1], [], []>} : vector<16x128xf32>, vector<128x32xf32>, vector<16x32xf32> -> vector<16x32xf32>
    %398 = arith.addf %394, %397 : vector<16x32xf32>
    %399 = vector.extract_strided_slice %383 {offsets = [2, 0, 0], sizes = [1, 128, 32], strides = [1, 1, 1]} : vector<3x128x32xf32> to vector<1x128x32xf32>
    %400 = vector.shape_cast %399 : vector<1x128x32xf32> to vector<128x32xf32>
    %cst_213 = arith.constant dense<0.000000e+00> : vector<16x32xf32>
    %401 = tpu.matmul %382, %400, %cst_213 {dimension_numbers = #tpu.dot_dimension_numbers<[1], [0], [0], [1], [0, 0, 1, 1], [], []>} : vector<16x128xf32>, vector<128x32xf32>, vector<16x32xf32> -> vector<16x32xf32>
    %402 = arith.addf %398, %401 : vector<16x32xf32>
    %403 = vector.broadcast %384 : vector<1x32xf32> to vector<16x32xf32>
    %404 = arith.addf %402, %403 : vector<16x32xf32>
    %405 = arith.addf %404, %1 : vector<16x32xf32>
    %cst_214 = arith.constant 0.000000e+00 : f32
    %406 = vector.broadcast %cst_214 : f32 to vector<16x32xf32>
    %407 = arith.maximumf %405, %406 : vector<16x32xf32>
    %c0_215 = arith.constant 0 : index
    %c0_216 = arith.constant 0 : index
    %c0_217 = arith.constant 0 : index
    %c0_218 = arith.constant 0 : index
    %408 = vector.load %arg12[%c0_215, %c0_216, %c0_217, %c0_218] : memref<1x2x16x32xf32, #tpu.memory_space<vmem>>, vector<1x1x16x32xf32>
    %409 = vector.shape_cast %408 : vector<1x1x16x32xf32> to vector<16x32xf32>
    %410 = vector.shape_cast %407 : vector<16x32xf32> to vector<1x1x16x32xf32>
    tpu.vector_store %arg12[%c0_215, %c0_216, %c0_217, %c0_218], %410 {strides = array<i32>} : memref<1x2x16x32xf32, #tpu.memory_space<vmem>>, vector<1x1x16x32xf32>,
    %411 = vector.extract_strided_slice %383 {offsets = [0, 0, 0], sizes = [1, 128, 32], strides = [1, 1, 1]} : vector<3x128x32xf32> to vector<1x128x32xf32>
    %412 = vector.shape_cast %411 : vector<1x128x32xf32> to vector<128x32xf32>
    %cst_219 = arith.constant dense<0.000000e+00> : vector<16x32xf32>
    %413 = tpu.matmul %366, %412, %cst_219 {dimension_numbers = #tpu.dot_dimension_numbers<[1], [0], [0], [1], [0, 0, 1, 1], [], []>} : vector<16x128xf32>, vector<128x32xf32>, vector<16x32xf32> -> vector<16x32xf32>
    %414 = vector.extract_strided_slice %383 {offsets = [1, 0, 0], sizes = [1, 128, 32], strides = [1, 1, 1]} : vector<3x128x32xf32> to vector<1x128x32xf32>
    %415 = vector.shape_cast %414 : vector<1x128x32xf32> to vector<128x32xf32>
    %cst_220 = arith.constant dense<0.000000e+00> : vector<16x32xf32>
    %416 = tpu.matmul %382, %415, %cst_220 {dimension_numbers = #tpu.dot_dimension_numbers<[1], [0], [0], [1], [0, 0, 1, 1], [], []>} : vector<16x128xf32>, vector<128x32xf32>, vector<16x32xf32> -> vector<16x32xf32>
    %417 = arith.addf %413, %416 : vector<16x32xf32>
    %418 = vector.extract_strided_slice %383 {offsets = [2, 0, 0], sizes = [1, 128, 32], strides = [1, 1, 1]} : vector<3x128x32xf32> to vector<1x128x32xf32>
    %419 = vector.shape_cast %418 : vector<1x128x32xf32> to vector<128x32xf32>
    %cst_221 = arith.constant dense<0.000000e+00> : vector<16x32xf32>
    %420 = tpu.matmul %388, %419, %cst_221 {dimension_numbers = #tpu.dot_dimension_numbers<[1], [0], [0], [1], [0, 0, 1, 1], [], []>} : vector<16x128xf32>, vector<128x32xf32>, vector<16x32xf32> -> vector<16x32xf32>
    %421 = arith.addf %417, %420 : vector<16x32xf32>
    %422 = vector.broadcast %384 : vector<1x32xf32> to vector<16x32xf32>
    %423 = arith.addf %421, %422 : vector<16x32xf32>
    %424 = arith.addf %423, %391 : vector<16x32xf32>
    %cst_222 = arith.constant 0.000000e+00 : f32
    %425 = vector.broadcast %cst_222 : f32 to vector<16x32xf32>
    %426 = arith.maximumf %424, %425 : vector<16x32xf32>
    %c0_223 = arith.constant 0 : index
    %c1_224 = arith.constant 1 : index
    %c0_225 = arith.constant 0 : index
    %c0_226 = arith.constant 0 : index
    %427 = vector.load %arg12[%c0_223, %c1_224, %c0_225, %c0_226] : memref<1x2x16x32xf32, #tpu.memory_space<vmem>>, vector<1x1x16x32xf32>
    %428 = vector.shape_cast %427 : vector<1x1x16x32xf32> to vector<16x32xf32>
    %429 = vector.shape_cast %426 : vector<16x32xf32> to vector<1x1x16x32xf32>
    tpu.vector_store %arg12[%c0_223, %c1_224, %c0_225, %c0_226], %429 {strides = array<i32>} : memref<1x2x16x32xf32, #tpu.memory_space<vmem>>, vector<1x1x16x32xf32>,
    return
  }
  func.func @transform_0(%arg0: i32) -> (i32, i32, i32) {
    %c0_i32 = arith.constant 0 : i32
    %c0_i32_0 = arith.constant 0 : i32
    %c0_i32_1 = arith.constant 0 : i32
    return %arg0, %c0_i32, %c0_i32_0 : i32, i32, i32
  }
  func.func @transform_1(%arg0: i32) -> (i32, i32, i32) {
    %c0_i32 = arith.constant 0 : i32
    %c0_i32_0 = arith.constant 0 : i32
    %c0_i32_1 = arith.constant 0 : i32
    %c0_i32_2 = arith.constant 0 : i32
    return %c0_i32, %c0_i32_0, %c0_i32_1 : i32, i32, i32
  }
  func.func @transform_2(%arg0: i32) -> (i32, i32) {
    %c0_i32 = arith.constant 0 : i32
    %c0_i32_0 = arith.constant 0 : i32
    %c0_i32_1 = arith.constant 0 : i32
    return %c0_i32, %c0_i32_0 : i32, i32
  }
  func.func @transform_3(%arg0: i32) -> (i32, i32, i32) {
    %c0_i32 = arith.constant 0 : i32
    %c0_i32_0 = arith.constant 0 : i32
    %c0_i32_1 = arith.constant 0 : i32
    %c0_i32_2 = arith.constant 0 : i32
    return %c0_i32, %c0_i32_0, %c0_i32_1 : i32, i32, i32
  }
  func.func @transform_4(%arg0: i32) -> (i32, i32, i32) {
    %c0_i32 = arith.constant 0 : i32
    %c0_i32_0 = arith.constant 0 : i32
    %c0_i32_1 = arith.constant 0 : i32
    %c0_i32_2 = arith.constant 0 : i32
    return %c0_i32, %c0_i32_0, %c0_i32_1 : i32, i32, i32
  }
  func.func @transform_5(%arg0: i32) -> (i32, i32, i32) {
    %c0_i32 = arith.constant 0 : i32
    %c0_i32_0 = arith.constant 0 : i32
    %c0_i32_1 = arith.constant 0 : i32
    %c0_i32_2 = arith.constant 0 : i32
    return %c0_i32, %c0_i32_0, %c0_i32_1 : i32, i32, i32
  }
  func.func @transform_6(%arg0: i32) -> (i32, i32) {
    %c0_i32 = arith.constant 0 : i32
    %c0_i32_0 = arith.constant 0 : i32
    %c0_i32_1 = arith.constant 0 : i32
    return %c0_i32, %c0_i32_0 : i32, i32
  }
  func.func @transform_7(%arg0: i32) -> (i32, i32, i32) {
    %c0_i32 = arith.constant 0 : i32
    %c0_i32_0 = arith.constant 0 : i32
    %c0_i32_1 = arith.constant 0 : i32
    %c0_i32_2 = arith.constant 0 : i32
    return %c0_i32, %c0_i32_0, %c0_i32_1 : i32, i32, i32
  }
  func.func @transform_8(%arg0: i32) -> (i32, i32, i32) {
    %c0_i32 = arith.constant 0 : i32
    %c0_i32_0 = arith.constant 0 : i32
    %c0_i32_1 = arith.constant 0 : i32
    %c0_i32_2 = arith.constant 0 : i32
    return %c0_i32, %c0_i32_0, %c0_i32_1 : i32, i32, i32
  }
  func.func @transform_9(%arg0: i32) -> (i32, i32, i32) {
    %c0_i32 = arith.constant 0 : i32
    %c0_i32_0 = arith.constant 0 : i32
    %c0_i32_1 = arith.constant 0 : i32
    %c0_i32_2 = arith.constant 0 : i32
    return %c0_i32, %c0_i32_0, %c0_i32_1 : i32, i32, i32
  }
  func.func @transform_10(%arg0: i32) -> (i32, i32) {
    %c0_i32 = arith.constant 0 : i32
    %c0_i32_0 = arith.constant 0 : i32
    %c0_i32_1 = arith.constant 0 : i32
    return %c0_i32, %c0_i32_0 : i32, i32
  }
  func.func @transform_11(%arg0: i32) -> (i32, i32, i32, i32) {
    %c0_i32 = arith.constant 0 : i32
    %c0_i32_0 = arith.constant 0 : i32
    %c0_i32_1 = arith.constant 0 : i32
    %c0_i32_2 = arith.constant 0 : i32
    return %arg0, %c0_i32, %c0_i32_0, %c0_i32_1 : i32, i32, i32, i32
  }
}

</mosaic_0001>

<llo_original>
// kernel: temporal_upsample_forward.1
$region0: #{temporal_upsample_forward.1}
  #allocation0 [shape = 'u32[]', space=smem, size = 0x4, offset = 0x4, fixed_abs, tag = 'smem constant byte address 0x4 - core index']
  #allocation1 [shape = 'u32[144,128]{1,0:T(1,128)}', space=vmem, size = 0x12000, scoped, tag = 'internal scratch']
  #allocation2 [shape = 'f32[18,64]{1,0:T(8,128)}', space=vmem, size = 0x3000, scoped, tag = 'scratch operand']
  #allocation3 [shape = 'f32[18,128]{1,0:T(8,128)}', space=vmem, size = 0x3000, scoped, tag = 'scratch operand']
  %s0 = inlined_call_operand.vmem [shape: f32[2,16,32], index: 0, kind: input, shape index: {}]
  %s1 = inlined_call_operand.vmem [shape: f32[3,32,64], index: 1, kind: input, shape index: {}]
  %s2 = inlined_call_operand.vmem [shape: f32[1,64], index: 2, kind: input, shape index: {}]
  %s3 = inlined_call_operand.vmem [shape: f32[7,3,64], index: 3, kind: input, shape index: {}]
  %s4 = inlined_call_operand.vmem [shape: f32[7,1,64], index: 4, kind: input, shape index: {}]
  %s5 = inlined_call_operand.vmem [shape: f32[5,64,128], index: 5, kind: input, shape index: {}]
  %s6 = inlined_call_operand.vmem [shape: f32[1,128], index: 6, kind: input, shape index: {}]
  %s7 = inlined_call_operand.vmem [shape: f32[4,3,128], index: 7, kind: input, shape index: {}]
  %s8 = inlined_call_operand.vmem [shape: f32[4,1,128], index: 8, kind: input, shape index: {}]
  %s9 = inlined_call_operand.vmem [shape: f32[3,128,32], index: 9, kind: input, shape index: {}]
  %s10 = inlined_call_operand.vmem [shape: f32[1,32], index: 10, kind: input, shape index: {}]
  %s11 = inlined_call_operand.vmem [shape: f32[2,2,16,32], index: 11, kind: output, shape index: {}]
  %s12 = sld [smem:[#allocation0]]
  $region77: #{temporal_upsample_forward.1} parent=0
    _
  %s14 = ssub.s32 1, %s12
  %s15 = scalar_select 0, %s14, %s12
  loop: start=0, step=1, limit=4
  $region2: #{temporal_upsample_forward.1} parent=0 // loop_pre_header
    _
  $region3: #{temporal_upsample_forward.1} parent=0 // loop_header
    %s17 = sphi 0, %s21
    %p18 = scmp.ge.s32.totalorder %s17, 4
    %s27 = sphi 0, %s29
    %s30 = sphi 0, %s27
    %s31 = sphi 0, %s30
    %s47 = sphi 0, %s31
    %s51 = sphi 0, %s51
    %s53 = sphi 0, %s51
    %s54 = sphi 0, %s53
    %s68 = sphi 0, %s54
    %s72 = sphi 0, %s72
    %s74 = sphi 0, %s72
    %s75 = sphi 0, %s74
    %s89 = sphi 0, %s75
    %s93 = sphi 0, %s93
    %s95 = sphi 0, %s93
    %s96 = sphi 0, %s95
    %s110 = sphi 0, %s96
    %s114 = sphi 0, %s114
    %s116 = sphi 0, %s114
    %s117 = sphi 0, %s116
    %s131 = sphi 0, %s117
    %s135 = sphi 0, %s135
    %s137 = sphi 0, %s135
    %s138 = sphi 0, %s137
    %s152 = sphi 0, %s138
    %s156 = sphi 0, %s156
    %s158 = sphi 0, %s156
    %s159 = sphi 0, %s158
    %s173 = sphi 0, %s159
    %s177 = sphi 0, %s177
    %s179 = sphi 0, %s177
    %s180 = sphi 0, %s179
    %s194 = sphi 0, %s180
    %s198 = sphi 0, %s198
    %s200 = sphi 0, %s198
    %s201 = sphi 0, %s200
    %s215 = sphi 0, %s201
    %s219 = sphi 0, %s219
    %s221 = sphi 0, %s219
    %s222 = sphi 0, %s221
    %s236 = sphi 0, %s222
    %s240 = sphi 0, %s240
    %s242 = sphi 0, %s240
    %s243 = sphi 0, %s242
    %s257 = sphi 0, %s243
    %s263 = sphi 0, %s265
    %s266 = sphi 0, %s263
    %s267 = sphi 0, %s266
    %s283 = sphi 0, %s267
  $region4: #{temporal_upsample_forward.1} parent=0 // loop_header_branch
    %20 = sbr.rel (%p18) target = $region8
  $region5: #{temporal_upsample_forward.1} parent=0 // loop_body
    %s22 = ssub.s32 %s17, 1
    %s23 = ssub.s32 %s17, 2
    %s24 = sadd.s32 %s17, 1
    %s25 = ssub.s32 %s17, %s24
    %p26 = scmp.eq.s32.totalorder %s25, 0
    %s28 = sadd.s32 %s27, 1
    %s29 = scalar_select %p26, %s27, %s28
    %p32 = pneg %p26
    %p33 = scmp.eq.s32.totalorder %s17, 1
    %p34 = por %p32, %p33
    %p35 = scmp.ne.s32.totalorder %s27, %s30
    %p36 = scmp.eq.s32.totalorder %s17, 0
    %p37 = por %p35, %p36
    %p38 = scmp.ne.s32.totalorder %s27, %s30
    %p39 = scmp.eq.s32.totalorder %s22, 1
    %p40 = por %p38, %p39
    %p41 = scmp.ne.s32.totalorder %s30, %s31
    %p42 = scmp.eq.s32.totalorder %s22, 0
    %p43 = por %p41, %p42
    %p44 = scmp.ne.s32.totalorder %s30, %s31
    %p45 = scmp.eq.s32.totalorder %s23, 1
    %p46 = por %p44, %p45
    %p48 = scmp.ne.s32.totalorder %s31, %s47
    %p49 = scmp.eq.s32.totalorder %s23, 0
    %p50 = por %p48, %p49
    %s52 = sadd.s32 %s51, 1
    %p55 = scmp.eq.s32.totalorder %s17, 1
    %p56 = scmp.ne.s32.totalorder %s51, %s53
    %p57 = scmp.eq.s32.totalorder %s17, 0
    %p58 = por %p56, %p57
    %p59 = scmp.ne.s32.totalorder %s51, %s53
    %p60 = scmp.eq.s32.totalorder %s22, 1
    %p61 = por %p59, %p60
    %p62 = scmp.ne.s32.totalorder %s53, %s54
    %p63 = scmp.eq.s32.totalorder %s22, 0
    %p64 = por %p62, %p63
    %p65 = scmp.ne.s32.totalorder %s53, %s54
    %p66 = scmp.eq.s32.totalorder %s23, 1
    %p67 = por %p65, %p66
    %p69 = scmp.ne.s32.totalorder %s54, %s68
    %p70 = scmp.eq.s32.totalorder %s23, 0
    %p71 = por %p69, %p70
    %s73 = sadd.s32 %s72, 1
    %p76 = scmp.eq.s32.totalorder %s17, 1
    %p77 = scmp.ne.s32.totalorder %s72, %s74
    %p78 = scmp.eq.s32.totalorder %s17, 0
    %p79 = por %p77, %p78
    %p80 = scmp.ne.s32.totalorder %s72, %s74
    %p81 = scmp.eq.s32.totalorder %s22, 1
    %p82 = por %p80, %p81
    %p83 = scmp.ne.s32.totalorder %s74, %s75
    %p84 = scmp.eq.s32.totalorder %s22, 0
    %p85 = por %p83, %p84
    %p86 = scmp.ne.s32.totalorder %s74, %s75
    %p87 = scmp.eq.s32.totalorder %s23, 1
    %p88 = por %p86, %p87
    %p90 = scmp.ne.s32.totalorder %s75, %s89
    %p91 = scmp.eq.s32.totalorder %s23, 0
    %p92 = por %p90, %p91
    %s94 = sadd.s32 %s93, 1
    %p97 = scmp.eq.s32.totalorder %s17, 1
    %p98 = scmp.ne.s32.totalorder %s93, %s95
    %p99 = scmp.eq.s32.totalorder %s17, 0
    %p100 = por %p98, %p99
    %p101 = scmp.ne.s32.totalorder %s93, %s95
    %p102 = scmp.eq.s32.totalorder %s22, 1
    %p103 = por %p101, %p102
    %p104 = scmp.ne.s32.totalorder %s95, %s96
    %p105 = scmp.eq.s32.totalorder %s22, 0
    %p106 = por %p104, %p105
    %p107 = scmp.ne.s32.totalorder %s95, %s96
    %p108 = scmp.eq.s32.totalorder %s23, 1
    %p109 = por %p107, %p108
    %p111 = scmp.ne.s32.totalorder %s96, %s110
    %p112 = scmp.eq.s32.totalorder %s23, 0
    %p113 = por %p111, %p112
    %s115 = sadd.s32 %s114, 1
    %p118 = scmp.eq.s32.totalorder %s17, 1
    %p119 = scmp.ne.s32.totalorder %s114, %s116
    %p120 = scmp.eq.s32.totalorder %s17, 0
    %p121 = por %p119, %p120
    %p122 = scmp.ne.s32.totalorder %s114, %s116
    %p123 = scmp.eq.s32.totalorder %s22, 1
    %p124 = por %p122, %p123
    %p125 = scmp.ne.s32.totalorder %s116, %s117
    %p126 = scmp.eq.s32.totalorder %s22, 0
    %p127 = por %p125, %p126
    %p128 = scmp.ne.s32.totalorder %s116, %s117
    %p129 = scmp.eq.s32.totalorder %s23, 1
    %p130 = por %p128, %p129
    %p132 = scmp.ne.s32.totalorder %s117, %s131
    %p133 = scmp.eq.s32.totalorder %s23, 0
    %p134 = por %p132, %p133
    %s136 = sadd.s32 %s135, 1
    %p139 = scmp.eq.s32.totalorder %s17, 1
    %p140 = scmp.ne.s32.totalorder %s135, %s137
    %p141 = scmp.eq.s32.totalorder %s17, 0
    %p142 = por %p140, %p141
    %p143 = scmp.ne.s32.totalorder %s135, %s137
    %p144 = scmp.eq.s32.totalorder %s22, 1
    %p145 = por %p143, %p144
    %p146 = scmp.ne.s32.totalorder %s137, %s138
    %p147 = scmp.eq.s32.totalorder %s22, 0
    %p148 = por %p146, %p147
    %p149 = scmp.ne.s32.totalorder %s137, %s138
    %p150 = scmp.eq.s32.totalorder %s23, 1
    %p151 = por %p149, %p150
    %p153 = scmp.ne.s32.totalorder %s138, %s152
    %p154 = scmp.eq.s32.totalorder %s23, 0
    %p155 = por %p153, %p154
    %s157 = sadd.s32 %s156, 1
    %p160 = scmp.eq.s32.totalorder %s17, 1
    %p161 = scmp.ne.s32.totalorder %s156, %s158
    %p162 = scmp.eq.s32.totalorder %s17, 0
    %p163 = por %p161, %p162
    %p164 = scmp.ne.s32.totalorder %s156, %s158
    %p165 = scmp.eq.s32.totalorder %s22, 1
    %p166 = por %p164, %p165
    %p167 = scmp.ne.s32.totalorder %s158, %s159
    %p168 = scmp.eq.s32.totalorder %s22, 0
    %p169 = por %p167, %p168
    %p170 = scmp.ne.s32.totalorder %s158, %s159
    %p171 = scmp.eq.s32.totalorder %s23, 1
    %p172 = por %p170, %p171
    %p174 = scmp.ne.s32.totalorder %s159, %s173
    %p175 = scmp.eq.s32.totalorder %s23, 0
    %p176 = por %p174, %p175
    %s178 = sadd.s32 %s177, 1
    %p181 = scmp.eq.s32.totalorder %s17, 1
    %p182 = scmp.ne.s32.totalorder %s177, %s179
    %p183 = scmp.eq.s32.totalorder %s17, 0
    %p184 = por %p182, %p183
    %p185 = scmp.ne.s32.totalorder %s177, %s179
    %p186 = scmp.eq.s32.totalorder %s22, 1
    %p187 = por %p185, %p186
    %p188 = scmp.ne.s32.totalorder %s179, %s180
    %p189 = scmp.eq.s32.totalorder %s22, 0
    %p190 = por %p188, %p189
    %p191 = scmp.ne.s32.totalorder %s179, %s180
    %p192 = scmp.eq.s32.totalorder %s23, 1
    %p193 = por %p191, %p192
    %p195 = scmp.ne.s32.totalorder %s180, %s194
    %p196 = scmp.eq.s32.totalorder %s23, 0
    %p197 = por %p195, %p196
    %s199 = sadd.s32 %s198, 1
    %p202 = scmp.eq.s32.totalorder %s17, 1
    %p203 = scmp.ne.s32.totalorder %s198, %s200
    %p204 = scmp.eq.s32.totalorder %s17, 0
    %p205 = por %p203, %p204
    %p206 = scmp.ne.s32.totalorder %s198, %s200
    %p207 = scmp.eq.s32.totalorder %s22, 1
    %p208 = por %p206, %p207
    %p209 = scmp.ne.s32.totalorder %s200, %s201
    %p210 = scmp.eq.s32.totalorder %s22, 0
    %p211 = por %p209, %p210
    %p212 = scmp.ne.s32.totalorder %s200, %s201
    %p213 = scmp.eq.s32.totalorder %s23, 1
    %p214 = por %p212, %p213
    %p216 = scmp.ne.s32.totalorder %s201, %s215
    %p217 = scmp.eq.s32.totalorder %s23, 0
    %p218 = por %p216, %p217
    %s220 = sadd.s32 %s219, 1
    %p223 = scmp.eq.s32.totalorder %s17, 1
    %p224 = scmp.ne.s32.totalorder %s219, %s221
    %p225 = scmp.eq.s32.totalorder %s17, 0
    %p226 = por %p224, %p225
    %p227 = scmp.ne.s32.totalorder %s219, %s221
    %p228 = scmp.eq.s32.totalorder %s22, 1
    %p229 = por %p227, %p228
    %p230 = scmp.ne.s32.totalorder %s221, %s222
    %p231 = scmp.eq.s32.totalorder %s22, 0
    %p232 = por %p230, %p231
    %p233 = scmp.ne.s32.totalorder %s221, %s222
    %p234 = scmp.eq.s32.totalorder %s23, 1
    %p235 = por %p233, %p234
    %p237 = scmp.ne.s32.totalorder %s222, %s236
    %p238 = scmp.eq.s32.totalorder %s23, 0
    %p239 = por %p237, %p238
    %s241 = sadd.s32 %s240, 1
    %p244 = scmp.eq.s32.totalorder %s17, 1
    %p245 = scmp.ne.s32.totalorder %s240, %s242
    %p246 = scmp.eq.s32.totalorder %s17, 0
    %p247 = por %p245, %p246
    %p248 = scmp.ne.s32.totalorder %s240, %s242
    %p249 = scmp.eq.s32.totalorder %s22, 1
    %p250 = por %p248, %p249
    %p251 = scmp.ne.s32.totalorder %s242, %s243
    %p252 = scmp.eq.s32.totalorder %s22, 0
    %p253 = por %p251, %p252
    %p254 = scmp.ne.s32.totalorder %s242, %s243
    %p255 = scmp.eq.s32.totalorder %s23, 1
    %p256 = por %p254, %p255
    %p258 = scmp.ne.s32.totalorder %s243, %s257
    %p259 = scmp.eq.s32.totalorder %s23, 0
    %p260 = por %p258, %p259
    %s261 = ssub.s32 %s17, %s24
    %p262 = scmp.eq.s32.totalorder %s261, 0
    %s264 = sadd.s32 %s263, 1
    %s265 = scalar_select %p262, %s263, %s264
    %p268 = pneg %p262
    %p269 = scmp.eq.s32.totalorder %s17, 1
    %p270 = por %p268, %p269
    %p271 = scmp.ne.s32.totalorder %s263, %s266
    %p272 = scmp.eq.s32.totalorder %s17, 0
    %p273 = por %p271, %p272
    %p274 = scmp.ne.s32.totalorder %s263, %s266
    %p275 = scmp.eq.s32.totalorder %s22, 1
    %p276 = por %p274, %p275
    %p277 = scmp.ne.s32.totalorder %s266, %s267
    %p278 = scmp.eq.s32.totalorder %s22, 0
    %p279 = por %p277, %p278
    %p280 = scmp.ne.s32.totalorder %s266, %s267
    %p281 = scmp.eq.s32.totalorder %s23, 1
    %p282 = por %p280, %p281
    %p284 = scmp.ne.s32.totalorder %s267, %s283
    %p285 = scmp.eq.s32.totalorder %s23, 0
    %p286 = por %p284, %p285
    %p287 = scmp.le.s32.totalorder 1, %s17
    %p288 = scmp.lt.s32.totalorder %s17, 3
    %p289 = pnand %p287, %p288
    %p290 = pneg %p289
    // Predicated region
    $region9: #{temporal_upsample_forward.1} parent=5 // pred_check
      _
    $region10: #{temporal_upsample_forward.1} parent=5 // pred_check_branch
      %292 = sbr.rel (%p289) target = $region12
    $region11: #{temporal_upsample_forward.1} parent=5 // pred_region
      %s293 = ssub.s32 %s17, 1
      // Predicated region
      $region13: #{temporal_upsample_forward.1} parent=11 // pred_check
        %p294 = pneg %p64
      $region14: #{temporal_upsample_forward.1} parent=11 // pred_check_branch
        %296 = sbr.rel (%p294) target = $region16
      $region15: #{temporal_upsample_forward.1} parent=11 // pred_region
        _
      $region16: #{temporal_upsample_forward.1} parent=11 // pred_fallthru
        _
      // Predicated region
      $region17: #{temporal_upsample_forward.1} parent=11 // pred_check
        %p297 = pneg %p85
      $region18: #{temporal_upsample_forward.1} parent=11 // pred_check_branch
        %299 = sbr.rel (%p297) target = $region20
      $region19: #{temporal_upsample_forward.1} parent=11 // pred_region
        _
      $region20: #{temporal_upsample_forward.1} parent=11 // pred_fallthru
        _
      // Predicated region
      $region21: #{temporal_upsample_forward.1} parent=11 // pred_check
        %p300 = pneg %p106
      $region22: #{temporal_upsample_forward.1} parent=11 // pred_check_branch
        %302 = sbr.rel (%p300) target = $region24
      $region23: #{temporal_upsample_forward.1} parent=11 // pred_region
        _
      $region24: #{temporal_upsample_forward.1} parent=11 // pred_fallthru
        _
      // Predicated region
      $region25: #{temporal_upsample_forward.1} parent=11 // pred_check
        %p303 = pneg %p127
      $region26: #{temporal_upsample_forward.1} parent=11 // pred_check_branch
        %305 = sbr.rel (%p303) target = $region28
      $region27: #{temporal_upsample_forward.1} parent=11 // pred_region
        _
      $region28: #{temporal_upsample_forward.1} parent=11 // pred_fallthru
        _
      // Predicated region
      $region29: #{temporal_upsample_forward.1} parent=11 // pred_check
        %p306 = pneg %p148
      $region30: #{temporal_upsample_forward.1} parent=11 // pred_check_branch
        %308 = sbr.rel (%p306) target = $region32
      $region31: #{temporal_upsample_forward.1} parent=11 // pred_region
        _
      $region32: #{temporal_upsample_forward.1} parent=11 // pred_fallthru
        _
      // Predicated region
      $region33: #{temporal_upsample_forward.1} parent=11 // pred_check
        %p309 = pneg %p169
      $region34: #{temporal_upsample_forward.1} parent=11 // pred_check_branch
        %311 = sbr.rel (%p309) target = $region36
      $region35: #{temporal_upsample_forward.1} parent=11 // pred_region
        _
      $region36: #{temporal_upsample_forward.1} parent=11 // pred_fallthru
        _
      // Predicated region
      $region37: #{temporal_upsample_forward.1} parent=11 // pred_check
        %p312 = pneg %p190
      $region38: #{temporal_upsample_forward.1} parent=11 // pred_check_branch
        %314 = sbr.rel (%p312) target = $region40
      $region39: #{temporal_upsample_forward.1} parent=11 // pred_region
        _
      $region40: #{temporal_upsample_forward.1} parent=11 // pred_fallthru
        _
      // Predicated region
      $region41: #{temporal_upsample_forward.1} parent=11 // pred_check
        %p315 = pneg %p211
      $region42: #{temporal_upsample_forward.1} parent=11 // pred_check_branch
        %317 = sbr.rel (%p315) target = $region44
      $region43: #{temporal_upsample_forward.1} parent=11 // pred_region
        _
      $region44: #{temporal_upsample_forward.1} parent=11 // pred_fallthru
        _
      // Predicated region
      $region45: #{temporal_upsample_forward.1} parent=11 // pred_check
        %p318 = pneg %p232
      $region46: #{temporal_upsample_forward.1} parent=11 // pred_check_branch
        %320 = sbr.rel (%p318) target = $region48
      $region47: #{temporal_upsample_forward.1} parent=11 // pred_region
        _
      $region48: #{temporal_upsample_forward.1} parent=11 // pred_fallthru
        _
      // Predicated region
      $region49: #{temporal_upsample_forward.1} parent=11 // pred_check
        %p321 = pneg %p253
      $region50: #{temporal_upsample_forward.1} parent=11 // pred_check_branch
        %323 = sbr.rel (%p321) target = $region52
      $region51: #{temporal_upsample_forward.1} parent=11 // pred_region
        _
      $region52: #{temporal_upsample_forward.1} parent=11 // pred_fallthru
        _
    $region12: #{temporal_upsample_forward.1} parent=5 // pred_fallthru
      _
    %p324 = scmp.lt.s32.totalorder %s17, 2
    // Predicated region
    $region53: #{temporal_upsample_forward.1} parent=5 // pred_check
      %p325 = pneg %p324
    $region54: #{temporal_upsample_forward.1} parent=5 // pred_check_branch
      %327 = sbr.rel (%p325) target = $region56
    $region55: #{temporal_upsample_forward.1} parent=5 // pred_region
      // Predicated region
      $region57: #{temporal_upsample_forward.1} parent=55 // pred_check
        %p328 = pneg %p37
      $region58: #{temporal_upsample_forward.1} parent=55 // pred_check_branch
        %330 = sbr.rel (%p328) target = $region60
      $region59: #{temporal_upsample_forward.1} parent=55 // pred_region
        %p331 = scmp.lt.s32.totalorder %s17, 1
        %s332 = scalar_select %p331, %s17, 1
        %s333 = smul.addr %s332, 2
        %s334 = smul.addr %s333, 8
        %s335 = scalar_lea.vmem %s0, %s334
      $region60: #{temporal_upsample_forward.1} parent=55 // pred_fallthru
        _
    $region56: #{temporal_upsample_forward.1} parent=5 // pred_fallthru
      _
    %p336 = scmp.le.s32.totalorder 1, %s17
    %p337 = scmp.lt.s32.totalorder %s17, 3
    %p338 = pnand %p336, %p337
    %p339 = pneg %p338
    // Predicated region
    $region61: #{temporal_upsample_forward.1} parent=5 // pred_check
      _
    $region62: #{temporal_upsample_forward.1} parent=5 // pred_check_branch
      %341 = sbr.rel (%p338) target = $region64
    $region63: #{temporal_upsample_forward.1} parent=5 // pred_region
      %s342 = ssub.s32 %s17, 1
      %p343 = scmp.lt.s32.totalorder %s22, 1
      %s344 = scalar_select %p343, %s22, 1
      %s345 = smul.addr %s344, 2
      %s346 = smul.addr %s345, 8
      %s347 = scalar_lea.vmem %s0, %s346
      %p348 = pneg %p43
      %p349 = pneg %p40
      %p350 = pneg %p64
      %p351 = pneg %p61
      %p352 = pneg %p85
      %p353 = pneg %p82
      %p354 = pneg %p106
      %p355 = pneg %p103
      %p356 = pneg %p127
      %p357 = pneg %p124
      %p358 = pneg %p148
      %p359 = pneg %p145
      %p360 = pneg %p169
      %p361 = pneg %p166
      %p362 = pneg %p190
      %p363 = pneg %p187
      %p364 = pneg %p211
      %p365 = pneg %p208
      %p366 = pneg %p232
      %p367 = pneg %p229
      %p368 = pneg %p253
      %p369 = pneg %p250
      %p370 = pneg %p279
      %p371 = pneg %p276
      %p372 = scmp.lt.s32.totalorder %s22, 1
      %s373 = scalar_select %p372, %s22, 1
      %s374 = smul.addr %s373, 4
      %s375 = smul.addr %s374, 8
      %s376 = scalar_lea.vmem %s11, %s375
      %p377 = scmp.lt.s32.totalorder %s22, 1
      %s378 = scalar_select %p377, %s22, 1
      %s379 = smul.addr %s378, 2
      %s380 = smul.addr %s379, 8
      %s381 = scalar_lea.vmem %s0, %s380
      %p382 = scmp.lt.s32.totalorder %s22, 1
      %s383 = scalar_select %p382, %s22, 1
      %s384 = smul.addr %s383, 4
      %s385 = smul.addr %s384, 8
      %s386 = scalar_lea.vmem %s11, %s385
      %v387 = vld [vmem:[%s381] sm:$0xff]
      %v388 = vld [vmem:[%s381 + $0x8] sm:$0xff]
      %vm389 = vcmask 523264
      %390 = vst.msk [vmem:[#allocation2] sm:$0xff] %vm389, 0.0
      %391 = vst.msk [vmem:[#allocation2 + $0x8] sm:$0xff] %vm389, 0.0
      %vm392 = vcmask 517120
      %393 = vst.msk [vmem:[#allocation2 + $0x10] sm:$0x3] %vm392, 0.0
      %394 = vst [vmem:[#allocation3] sm:$0xff] 0.0
      %395 = vst [vmem:[#allocation3 + $0x8] sm:$0xff] 0.0
      %396 = vst [vmem:[#allocation3 + $0x10] sm:$0x3] 0.0
      %vm399 = vcmask 1040384
      %v400 = vrot.slane %v387, 7
      %v401 = vrot.slane %v388, 7
      %v402 = vsel %vm399, %v400, %v401
      %v404 = vsel %vm399, 0.0, %v400
      %vm405 = vcmask 1046528
      %v406 = vrot.slane %v387, 1
      %v407 = vrot.slane %v388, 1
      %v408 = vsel %vm405, %v406, %v407
      %v410 = vsel %vm405, %v407, 0.0
      %v411 = vld [vmem:[%s1] sm:$0xff]
      %v412 = vld [vmem:[%s1 + $0x8] sm:$0xff]
      %v413 = vld [vmem:[%s1 + $0x10] sm:$0xff]
      %v414 = vld [vmem:[%s1 + $0x18] sm:$0xff]
      %v415 = vld [vmem:[%s1 + $0x20] sm:$0xff]
      %v416 = vld [vmem:[%s1 + $0x28] sm:$0xff]
      %v417 = vld [vmem:[%s1 + $0x30] sm:$0xff]
      %v418 = vld [vmem:[%s1 + $0x38] sm:$0xff]
      %v419 = vld [vmem:[%s1 + $0x40] sm:$0xff]
      %v420 = vld [vmem:[%s1 + $0x48] sm:$0xff]
      %v421 = vld [vmem:[%s1 + $0x50] sm:$0xff]
      %v422 = vld [vmem:[%s1 + $0x58] sm:$0xff]
      %v423 = vld [vmem:[%s2] sm:$0x1]
      %vm424 = vcmask 261120
      %v425 = vsel %vm424, %v387, 0
      %v427 = vsel %vm424, %v388, 0
      %429 = vmatprep.subr.mxu0 0.0
      %430 = vmatpush1.msra.mxu0 %v415
      %431 = vmatprep.subr.mxu0 0.0
      %432 = vmatpush1.msra.mxu0 %v416
      %433 = vmatprep.subr.mxu0 0.0
      %434 = vmatpush1.msra.mxu0 %v417
      %435 = vmatprep.subr.mxu0 0.0
      %436 = vmatpush1.msra.mxu0 %v418
      %437 = vmatprep.subr.mxu0 0.0
      %438 = vmatpush1.msra.mxu0 0.0
      %439 = vmatprep.subr.mxu0 0.0
      %440 = vmatpush1.msra.mxu0 0.0
      %441 = vmatprep.subr.mxu0 0.0
      %442 = vmatpush1.msra.mxu0 0.0
      %443 = vmatprep.subr.mxu0 0.0
      %444 = vmatpush1.msra.mxu0 0.0
      %445 = vmatprep.subr.mxu0 0.0
      %446 = vmatpush1.msra.mxu0 0.0
      %447 = vmatprep.subr.mxu0 0.0
      %448 = vmatpush1.msra.mxu0 0.0
      %449 = vmatprep.subr.mxu0 0.0
      %450 = vmatpush1.msra.mxu0 0.0
      %451 = vmatprep.subr.mxu0 0.0
      %452 = vmatpush1.msra.mxu0 0.0
      %453 = vmatprep.subr.mxu0 0.0
      %454 = vmatpush1.msra.mxu0 0.0
      %455 = vmatprep.subr.mxu0 0.0
      %456 = vmatpush1.msra.mxu0 0.0
      %457 = vmatprep.subr.mxu0 0.0
      %458 = vmatpush1.msra.mxu0 0.0
      %459 = vmatprep.subr.mxu0 0.0
      %460 = vmatpush1.msra.mxu0 0.0
      %461 = vmatprep.subr.mxu0 0.0
      %462 = vmatpush1.msra.mxu0 0.0
      %463 = vmatprep.subr.mxu0 0.0
      %464 = vmatpush1.msra.mxu0 0.0
      %465 = vmatprep.subr.mxu0 0.0
      %466 = vmatpush1.msra.mxu0 0.0
      %467 = vmatprep.subr.mxu0 0.0
      %468 = vmatpush1.msra.mxu0 0.0
      %469 = vmatprep.subr.mxu0 0.0
      %470 = vmatpush1.msra.mxu0 0.0
      %471 = vmatprep.subr.mxu0 0.0
      %472 = vmatpush1.msra.mxu0 0.0
      %473 = vmatprep.subr.mxu0 0.0
      %474 = vmatpush1.msra.mxu0 0.0
      %475 = vmatprep.subr.mxu0 0.0
      %476 = vmatpush1.msra.mxu0 0.0
      %477 = vmatprep.subr.mxu0 0.0
      %478 = vmatpush1.msra.mxu0 0.0
      %479 = vmatprep.subr.mxu0 0.0
      %480 = vmatpush1.msra.mxu0 0.0
      %481 = vmatprep.subr.mxu0 0.0
      %482 = vmatpush1.msra.mxu0 0.0
      %483 = vmatprep.subr.mxu0 0.0
      %484 = vmatpush1.msra.mxu0 0.0
      %485 = vmatprep.subr.mxu0 0.0
      %486 = vmatpush1.msra.mxu0 0.0
      %487 = vmatprep.subr.mxu0 0.0
      %488 = vmatpush1.msra.mxu0 0.0
      %489 = vmatprep.subr.mxu0 0.0
      %490 = vmatpush1.msra.mxu0 0.0
      %491 = vmatprep.subr.mxu0 0.0
      %492 = vmatpush1.msra.mxu0 0.0
      %493 = vmatprep.mubr.f32.mxu0 0.0
      %494 = vmatmul.mubr.f32.gmra.mrb[0].mxu0 %v425
      %v495 = vpop.f32.mrb[0].mxu0
      %v496 = vadd.f32 0.0, %v495
      %v497 = vpop.f32.mrb[0].mxu0
      %498 = vmatprep.mubr.f32.mxu0 0.0
      %499 = vmatmul.mubr.f32.gmra.mrb[0].mxu0 %v427
      %v500 = vpop.f32.mrb[0].mxu0
      %v501 = vadd.f32 0.0, %v500
      %v502 = vpop.f32.mrb[0].mxu0
      %503 = vdwg.mxu0
      %v505 = vsel %vm424, %v404, 0
      %v507 = vsel %vm424, %v402, 0
      %509 = vmatprep.subr.mxu0 0.0
      %510 = vmatpush1.msra.mxu0 %v411
      %511 = vmatprep.subr.mxu0 0.0
      %512 = vmatpush1.msra.mxu0 %v412
      %513 = vmatprep.subr.mxu0 0.0
      %514 = vmatpush1.msra.mxu0 %v413
      %515 = vmatprep.subr.mxu0 0.0
      %516 = vmatpush1.msra.mxu0 %v414
      %517 = vmatprep.subr.mxu0 0.0
      %518 = vmatpush1.msra.mxu0 0.0
      %519 = vmatprep.subr.mxu0 0.0
      %520 = vmatpush1.msra.mxu0 0.0
      %521 = vmatprep.subr.mxu0 0.0
      %522 = vmatpush1.msra.mxu0 0.0
      %523 = vmatprep.subr.mxu0 0.0
      %524 = vmatpush1.msra.mxu0 0.0
      %525 = vmatprep.subr.mxu0 0.0
      %526 = vmatpush1.msra.mxu0 0.0
      %527 = vmatprep.subr.mxu0 0.0
      %528 = vmatpush1.msra.mxu0 0.0
      %529 = vmatprep.subr.mxu0 0.0
      %530 = vmatpush1.msra.mxu0 0.0
      %531 = vmatprep.subr.mxu0 0.0
      %532 = vmatpush1.msra.mxu0 0.0
      %533 = vmatprep.subr.mxu0 0.0
      %534 = vmatpush1.msra.mxu0 0.0
      %535 = vmatprep.subr.mxu0 0.0
      %536 = vmatpush1.msra.mxu0 0.0
      %537 = vmatprep.subr.mxu0 0.0
      %538 = vmatpush1.msra.mxu0 0.0
      %539 = vmatprep.subr.mxu0 0.0
      %540 = vmatpush1.msra.mxu0 0.0
      %541 = vmatprep.subr.mxu0 0.0
      %542 = vmatpush1.msra.mxu0 0.0
      %543 = vmatprep.subr.mxu0 0.0
      %544 = vmatpush1.msra.mxu0 0.0
      %545 = vmatprep.subr.mxu0 0.0
      %546 = vmatpush1.msra.mxu0 0.0
      %547 = vmatprep.subr.mxu0 0.0
      %548 = vmatpush1.msra.mxu0 0.0
      %549 = vmatprep.subr.mxu0 0.0
      %550 = vmatpush1.msra.mxu0 0.0
      %551 = vmatprep.subr.mxu0 0.0
      %552 = vmatpush1.msra.mxu0 0.0
      %553 = vmatprep.subr.mxu0 0.0
      %554 = vmatpush1.msra.mxu0 0.0
      %555 = vmatprep.subr.mxu0 0.0
      %556 = vmatpush1.msra.mxu0 0.0
      %557 = vmatprep.subr.mxu0 0.0
      %558 = vmatpush1.msra.mxu0 0.0
      %559 = vmatprep.subr.mxu0 0.0
      %560 = vmatpush1.msra.mxu0 0.0
      %561 = vmatprep.subr.mxu0 0.0
      %562 = vmatpush1.msra.mxu0 0.0
      %563 = vmatprep.subr.mxu0 0.0
      %564 = vmatpush1.msra.mxu0 0.0
      %565 = vmatprep.subr.mxu0 0.0
      %566 = vmatpush1.msra.mxu0 0.0
      %567 = vmatprep.subr.mxu0 0.0
      %568 = vmatpush1.msra.mxu0 0.0
      %569 = vmatprep.subr.mxu0 0.0
      %570 = vmatpush1.msra.mxu0 0.0
      %571 = vmatprep.subr.mxu0 0.0
      %572 = vmatpush1.msra.mxu0 0.0
      %573 = vmatprep.mubr.f32.mxu0 0.0
      %574 = vmatmul.mubr.f32.gmra.mrb[0].mxu0 %v505
      %v575 = vpop.f32.mrb[0].mxu0
      %v576 = vadd.f32 %v496, %v575
      %v577 = vpop.f32.mrb[0].mxu0
      %578 = vmatprep.mubr.f32.mxu0 0.0
      %579 = vmatmul.mubr.f32.gmra.mrb[0].mxu0 %v507
      %v580 = vpop.f32.mrb[0].mxu0
      %v581 = vadd.f32 %v501, %v580
      %v582 = vpop.f32.mrb[0].mxu0
      %583 = vdwg.mxu0
      %v584 = vsel %vm424, %v408, 0
      %v587 = vsel %vm424, %v410, 0
      %589 = vmatprep.subr.mxu0 0.0
      %590 = vmatpush1.msra.mxu0 %v419
      %591 = vmatprep.subr.mxu0 0.0
      %592 = vmatpush1.msra.mxu0 %v420
      %593 = vmatprep.subr.mxu0 0.0
      %594 = vmatpush1.msra.mxu0 %v421
      %595 = vmatprep.subr.mxu0 0.0
      %596 = vmatpush1.msra.mxu0 %v422
      %597 = vmatprep.subr.mxu0 0.0
      %598 = vmatpush1.msra.mxu0 0.0
      %599 = vmatprep.subr.mxu0 0.0
      %600 = vmatpush1.msra.mxu0 0.0
      %601 = vmatprep.subr.mxu0 0.0
      %602 = vmatpush1.msra.mxu0 0.0
      %603 = vmatprep.subr.mxu0 0.0
      %604 = vmatpush1.msra.mxu0 0.0
      %605 = vmatprep.subr.mxu0 0.0
      %606 = vmatpush1.msra.mxu0 0.0
      %607 = vmatprep.subr.mxu0 0.0
      %608 = vmatpush1.msra.mxu0 0.0
      %609 = vmatprep.subr.mxu0 0.0
      %610 = vmatpush1.msra.mxu0 0.0
      %611 = vmatprep.subr.mxu0 0.0
      %612 = vmatpush1.msra.mxu0 0.0
      %613 = vmatprep.subr.mxu0 0.0
      %614 = vmatpush1.msra.mxu0 0.0
      %615 = vmatprep.subr.mxu0 0.0
      %616 = vmatpush1.msra.mxu0 0.0
      %617 = vmatprep.subr.mxu0 0.0
      %618 = vmatpush1.msra.mxu0 0.0
      %619 = vmatprep.subr.mxu0 0.0
      %620 = vmatpush1.msra.mxu0 0.0
      %621 = vmatprep.subr.mxu0 0.0
      %622 = vmatpush1.msra.mxu0 0.0
      %623 = vmatprep.subr.mxu0 0.0
      %624 = vmatpush1.msra.mxu0 0.0
      %625 = vmatprep.subr.mxu0 0.0
      %626 = vmatpush1.msra.mxu0 0.0
      %627 = vmatprep.subr.mxu0 0.0
      %628 = vmatpush1.msra.mxu0 0.0
      %629 = vmatprep.subr.mxu0 0.0
      %630 = vmatpush1.msra.mxu0 0.0
      %631 = vmatprep.subr.mxu0 0.0
      %632 = vmatpush1.msra.mxu0 0.0
      %633 = vmatprep.subr.mxu0 0.0
      %634 = vmatpush1.msra.mxu0 0.0
      %635 = vmatprep.subr.mxu0 0.0
      %636 = vmatpush1.msra.mxu0 0.0
      %637 = vmatprep.subr.mxu0 0.0
      %638 = vmatpush1.msra.mxu0 0.0
      %639 = vmatprep.subr.mxu0 0.0
      %640 = vmatpush1.msra.mxu0 0.0
      %641 = vmatprep.subr.mxu0 0.0
      %642 = vmatpush1.msra.mxu0 0.0
      %643 = vmatprep.subr.mxu0 0.0
      %644 = vmatpush1.msra.mxu0 0.0
      %645 = vmatprep.subr.mxu0 0.0
      %646 = vmatpush1.msra.mxu0 0.0
      %647 = vmatprep.subr.mxu0 0.0
      %648 = vmatpush1.msra.mxu0 0.0
      %649 = vmatprep.subr.mxu0 0.0
      %650 = vmatpush1.msra.mxu0 0.0
      %651 = vmatprep.subr.mxu0 0.0
      %652 = vmatpush1.msra.mxu0 0.0
      %653 = vmatprep.mubr.f32.mxu0 0.0
      %654 = vmatmul.mubr.f32.gmra.mrb[0].mxu0 %v584
      %v655 = vpop.f32.mrb[0].mxu0
      %v656 = vadd.f32 0.0, %v655
      %v657 = vpop.f32.mrb[0].mxu0
      %658 = vmatprep.mubr.f32.mxu0 0.0
      %659 = vmatmul.mubr.f32.gmra.mrb[0].mxu0 %v587
      %v660 = vpop.f32.mrb[0].mxu0
      %v661 = vadd.f32 0.0, %v660
      %v662 = vpop.f32.mrb[0].mxu0
      %663 = vdwg.mxu0
      %v664 = vadd.f32 %v576, %v656
      %v665 = vadd.f32 %v581, %v661
      %v667 = vlaneseq
      %v668 = vshrl.u32 %v667, 7
      %v669 = vsub.s32 0, %v668
      %v670 = vrot.slane %v423, %v669
      %v672 = vadd.f32 %v664, %v670
      %v673 = vadd.f32 %v665, %v670
      %v674 = vmax.f32 %v672, 0.0
      %v675 = vmax.f32 %v673, 0.0
      %v676 = vld [vmem:[%s3] sm:$0x7]
      %v677 = vld [vmem:[%s4] sm:$0x1]
      %678 = vst.msk [vmem:[#allocation2 + $0x1] sm:$0xff] %vm389, %v674
      %679 = vst.msk [vmem:[#allocation2 + $0x9] sm:$0xff] %vm389, %v675
      %v680 = vld [vmem:[#allocation2] sm:$0xff]
      %v681 = vld [vmem:[#allocation2 + $0x8] sm:$0xff]
      %v682 = vld [vmem:[#allocation2 + $0x2] sm:$0xff]
      %v683 = vld [vmem:[#allocation2 + $0xa] sm:$0xff]
      %v684 = vlaneseq
      %v685 = vshrl.u32 %v684, 7
      %v686 = vsub.s32 0, %v685
      %v687 = vrot.slane %v676, %v686
      %v688 = vmul.f32 %v680, %v687
      %v689 = vmul.f32 %v681, %v687
      %v690 = vlaneseq
      %v691 = vshrl.u32 %v690, 7
      %v692 = vsub.s32 1, %v691
      %v693 = vrot.slane %v676, %v692
      %v694 = vmul.f32 %v674, %v693
      %v695 = vmul.f32 %v675, %v693
      %v696 = vadd.f32 %v688, %v694
      %v697 = vadd.f32 %v689, %v695
      %v698 = vlaneseq
      %v699 = vshrl.u32 %v698, 7
      %v700 = vsub.s32 2, %v699
      %v701 = vrot.slane %v676, %v700
      %v702 = vmul.f32 %v682, %v701
      %v703 = vmul.f32 %v683, %v701
      %v704 = vadd.f32 %v696, %v702
      %v705 = vadd.f32 %v697, %v703
      %v707 = vlaneseq
      %v708 = vshrl.u32 %v707, 7
      %v709 = vsub.s32 0, %v708
      %v710 = vrot.slane %v677, %v709
      %v712 = vadd.f32 %v704, %v710
      %v713 = vadd.f32 %v705, %v710
      %v714 = vadd.f32 %v674, %v712
      %v715 = vadd.f32 %v675, %v713
      %v716 = vmax.f32 %v714, 0.0
      %v717 = vmax.f32 %v715, 0.0
      %s718 = scalar_lea.vmem %s3, 4
      %v719 = vld [vmem:[%s718] sm:$0x7]
      %s720 = scalar_lea.vmem %s4, 1
      %v721 = vld [vmem:[%s720] sm:$0x1]
      %722 = vst.msk [vmem:[#allocation2 + $0x1] sm:$0xff] %vm389, %v716
      %723 = vst.msk [vmem:[#allocation2 + $0x9] sm:$0xff] %vm389, %v717
      %v724 = vld [vmem:[#allocation2] sm:$0xff]
      %v725 = vld [vmem:[#allocation2 + $0x8] sm:$0xff]
      %v726 = vld [vmem:[#allocation2 + $0x2] sm:$0xff]
      %v727 = vld [vmem:[#allocation2 + $0xa] sm:$0xff]
      %v728 = vlaneseq
      %v729 = vshrl.u32 %v728, 7
      %v730 = vsub.s32 0, %v729
      %v731 = vrot.slane %v719, %v730
      %v732 = vmul.f32 %v724, %v731
      %v733 = vmul.f32 %v725, %v731
      %v734 = vlaneseq
      %v735 = vshrl.u32 %v734, 7
      %v736 = vsub.s32 1, %v735
      %v737 = vrot.slane %v719, %v736
      %v738 = vmul.f32 %v716, %v737
      %v739 = vmul.f32 %v717, %v737
      %v740 = vadd.f32 %v732, %v738
      %v741 = vadd.f32 %v733, %v739
      %v742 = vlaneseq
      %v743 = vshrl.u32 %v742, 7
      %v744 = vsub.s32 2, %v743
      %v745 = vrot.slane %v719, %v744
      %v746 = vmul.f32 %v726, %v745
      %v747 = vmul.f32 %v727, %v745
      %v748 = vadd.f32 %v740, %v746
      %v749 = vadd.f32 %v741, %v747
      %v751 = vlaneseq
      %v752 = vshrl.u32 %v751, 7
      %v753 = vsub.s32 0, %v752
      %v754 = vrot.slane %v721, %v753
      %v756 = vadd.f32 %v748, %v754
      %v757 = vadd.f32 %v749, %v754
      %v758 = vadd.f32 %v716, %v756
      %v759 = vadd.f32 %v717, %v757
      %v760 = vmax.f32 %v758, 0.0
      %v761 = vmax.f32 %v759, 0.0
      %s762 = scalar_lea.vmem %s3, 8
      %v763 = vld [vmem:[%s762] sm:$0x7]
      %s764 = scalar_lea.vmem %s4, 2
      %v765 = vld [vmem:[%s764] sm:$0x1]
      %766 = vst.msk [vmem:[#allocation2 + $0x1] sm:$0xff] %vm389, %v760
      %767 = vst.msk [vmem:[#allocation2 + $0x9] sm:$0xff] %vm389, %v761
      %v768 = vld [vmem:[#allocation2] sm:$0xff]
      %v769 = vld [vmem:[#allocation2 + $0x8] sm:$0xff]
      %v770 = vld [vmem:[#allocation2 + $0x2] sm:$0xff]
      %v771 = vld [vmem:[#allocation2 + $0xa] sm:$0xff]
      %v772 = vlaneseq
      %v773 = vshrl.u32 %v772, 7
      %v774 = vsub.s32 0, %v773
      %v775 = vrot.slane %v763, %v774
      %v776 = vmul.f32 %v768, %v775
      %v777 = vmul.f32 %v769, %v775
      %v778 = vlaneseq
      %v779 = vshrl.u32 %v778, 7
      %v780 = vsub.s32 1, %v779
      %v781 = vrot.slane %v763, %v780
      %v782 = vmul.f32 %v760, %v781
      %v783 = vmul.f32 %v761, %v781
      %v784 = vadd.f32 %v776, %v782
      %v785 = vadd.f32 %v777, %v783
      %v786 = vlaneseq
      %v787 = vshrl.u32 %v786, 7
      %v788 = vsub.s32 2, %v787
      %v789 = vrot.slane %v763, %v788
      %v790 = vmul.f32 %v770, %v789
      %v791 = vmul.f32 %v771, %v789
      %v792 = vadd.f32 %v784, %v790
      %v793 = vadd.f32 %v785, %v791
      %v795 = vlaneseq
      %v796 = vshrl.u32 %v795, 7
      %v797 = vsub.s32 0, %v796
      %v798 = vrot.slane %v765, %v797
      %v800 = vadd.f32 %v792, %v798
      %v801 = vadd.f32 %v793, %v798
      %v802 = vadd.f32 %v760, %v800
      %v803 = vadd.f32 %v761, %v801
      %v804 = vmax.f32 %v802, 0.0
      %v805 = vmax.f32 %v803, 0.0
      %s806 = scalar_lea.vmem %s3, 12
      %v807 = vld [vmem:[%s806] sm:$0x7]
      %s808 = scalar_lea.vmem %s4, 3
      %v809 = vld [vmem:[%s808] sm:$0x1]
      %810 = vst.msk [vmem:[#allocation2 + $0x1] sm:$0xff] %vm389, %v804
      %811 = vst.msk [vmem:[#allocation2 + $0x9] sm:$0xff] %vm389, %v805
      %v812 = vld [vmem:[#allocation2] sm:$0xff]
      %v813 = vld [vmem:[#allocation2 + $0x8] sm:$0xff]
      %v814 = vld [vmem:[#allocation2 + $0x2] sm:$0xff]
      %v815 = vld [vmem:[#allocation2 + $0xa] sm:$0xff]
      %v816 = vlaneseq
      %v817 = vshrl.u32 %v816, 7
      %v818 = vsub.s32 0, %v817
      %v819 = vrot.slane %v807, %v818
      %v820 = vmul.f32 %v812, %v819
      %v821 = vmul.f32 %v813, %v819
      %v822 = vlaneseq
      %v823 = vshrl.u32 %v822, 7
      %v824 = vsub.s32 1, %v823
      %v825 = vrot.slane %v807, %v824
      %v826 = vmul.f32 %v804, %v825
      %v827 = vmul.f32 %v805, %v825
      %v828 = vadd.f32 %v820, %v826
      %v829 = vadd.f32 %v821, %v827
      %v830 = vlaneseq
      %v831 = vshrl.u32 %v830, 7
      %v832 = vsub.s32 2, %v831
      %v833 = vrot.slane %v807, %v832
      %v834 = vmul.f32 %v814, %v833
      %v835 = vmul.f32 %v815, %v833
      %v836 = vadd.f32 %v828, %v834
      %v837 = vadd.f32 %v829, %v835
      %v839 = vlaneseq
      %v840 = vshrl.u32 %v839, 7
      %v841 = vsub.s32 0, %v840
      %v842 = vrot.slane %v809, %v841
      %v844 = vadd.f32 %v836, %v842
      %v845 = vadd.f32 %v837, %v842
      %v846 = vadd.f32 %v804, %v844
      %v847 = vadd.f32 %v805, %v845
      %v848 = vmax.f32 %v846, 0.0
      %v849 = vmax.f32 %v847, 0.0
      %s850 = scalar_lea.vmem %s3, 16
      %v851 = vld [vmem:[%s850] sm:$0x7]
      %s852 = scalar_lea.vmem %s4, 4
      %v853 = vld [vmem:[%s852] sm:$0x1]
      %854 = vst.msk [vmem:[#allocation2 + $0x1] sm:$0xff] %vm389, %v848
      %855 = vst.msk [vmem:[#allocation2 + $0x9] sm:$0xff] %vm389, %v849
      %v856 = vld [vmem:[#allocation2] sm:$0xff]
      %v857 = vld [vmem:[#allocation2 + $0x8] sm:$0xff]
      %v858 = vld [vmem:[#allocation2 + $0x2] sm:$0xff]
      %v859 = vld [vmem:[#allocation2 + $0xa] sm:$0xff]
      %v860 = vlaneseq
      %v861 = vshrl.u32 %v860, 7
      %v862 = vsub.s32 0, %v861
      %v863 = vrot.slane %v851, %v862
      %v864 = vmul.f32 %v856, %v863
      %v865 = vmul.f32 %v857, %v863
      %v866 = vlaneseq
      %v867 = vshrl.u32 %v866, 7
      %v868 = vsub.s32 1, %v867
      %v869 = vrot.slane %v851, %v868
      %v870 = vmul.f32 %v848, %v869
      %v871 = vmul.f32 %v849, %v869
      %v872 = vadd.f32 %v864, %v870
      %v873 = vadd.f32 %v865, %v871
      %v874 = vlaneseq
      %v875 = vshrl.u32 %v874, 7
      %v876 = vsub.s32 2, %v875
      %v877 = vrot.slane %v851, %v876
      %v878 = vmul.f32 %v858, %v877
      %v879 = vmul.f32 %v859, %v877
      %v880 = vadd.f32 %v872, %v878
      %v881 = vadd.f32 %v873, %v879
      %v883 = vlaneseq
      %v884 = vshrl.u32 %v883, 7
      %v885 = vsub.s32 0, %v884
      %v886 = vrot.slane %v853, %v885
      %v888 = vadd.f32 %v880, %v886
      %v889 = vadd.f32 %v881, %v886
      %v890 = vadd.f32 %v848, %v888
      %v891 = vadd.f32 %v849, %v889
      %v892 = vmax.f32 %v890, 0.0
      %v893 = vmax.f32 %v891, 0.0
      %s894 = scalar_lea.vmem %s3, 20
      %v895 = vld [vmem:[%s894] sm:$0x7]
      %s896 = scalar_lea.vmem %s4, 5
      %v897 = vld [vmem:[%s896] sm:$0x1]
      %898 = vst.msk [vmem:[#allocation2 + $0x1] sm:$0xff] %vm389, %v892
      %899 = vst.msk [vmem:[#allocation2 + $0x9] sm:$0xff] %vm389, %v893
      %v900 = vld [vmem:[#allocation2] sm:$0xff]
      %v901 = vld [vmem:[#allocation2 + $0x8] sm:$0xff]
      %v902 = vld [vmem:[#allocation2 + $0x2] sm:$0xff]
      %v903 = vld [vmem:[#allocation2 + $0xa] sm:$0xff]
      %v904 = vlaneseq
      %v905 = vshrl.u32 %v904, 7
      %v906 = vsub.s32 0, %v905
      %v907 = vrot.slane %v895, %v906
      %v908 = vmul.f32 %v900, %v907
      %v909 = vmul.f32 %v901, %v907
      %v910 = vlaneseq
      %v911 = vshrl.u32 %v910, 7
      %v912 = vsub.s32 1, %v911
      %v913 = vrot.slane %v895, %v912
      %v914 = vmul.f32 %v892, %v913
      %v915 = vmul.f32 %v893, %v913
      %v916 = vadd.f32 %v908, %v914
      %v917 = vadd.f32 %v909, %v915
      %v918 = vlaneseq
      %v919 = vshrl.u32 %v918, 7
      %v920 = vsub.s32 2, %v919
      %v921 = vrot.slane %v895, %v920
      %v922 = vmul.f32 %v902, %v921
      %v923 = vmul.f32 %v903, %v921
      %v924 = vadd.f32 %v916, %v922
      %v925 = vadd.f32 %v917, %v923
      %v927 = vlaneseq
      %v928 = vshrl.u32 %v927, 7
      %v929 = vsub.s32 0, %v928
      %v930 = vrot.slane %v897, %v929
      %v932 = vadd.f32 %v924, %v930
      %v933 = vadd.f32 %v925, %v930
      %v934 = vadd.f32 %v892, %v932
      %v935 = vadd.f32 %v893, %v933
      %v936 = vmax.f32 %v934, 0.0
      %v937 = vmax.f32 %v935, 0.0
      %s938 = scalar_lea.vmem %s3, 24
      %v939 = vld [vmem:[%s938] sm:$0x7]
      %s940 = scalar_lea.vmem %s4, 6
      %v941 = vld [vmem:[%s940] sm:$0x1]
      %942 = vst.msk [vmem:[#allocation2 + $0x1] sm:$0xff] %vm389, %v936
      %943 = vst.msk [vmem:[#allocation2 + $0x9] sm:$0xff] %vm389, %v937
      %v944 = vld [vmem:[#allocation2] sm:$0xff]
      %v945 = vld [vmem:[#allocation2 + $0x8] sm:$0xff]
      %v946 = vld [vmem:[#allocation2 + $0x2] sm:$0xff]
      %v947 = vld [vmem:[#allocation2 + $0xa] sm:$0xff]
      %v948 = vlaneseq
      %v949 = vshrl.u32 %v948, 7
      %v950 = vsub.s32 0, %v949
      %v951 = vrot.slane %v939, %v950
      %v952 = vmul.f32 %v944, %v951
      %v953 = vmul.f32 %v945, %v951
      %v954 = vlaneseq
      %v955 = vshrl.u32 %v954, 7
      %v956 = vsub.s32 1, %v955
      %v957 = vrot.slane %v939, %v956
      %v958 = vmul.f32 %v936, %v957
      %v959 = vmul.f32 %v937, %v957
      %v960 = vadd.f32 %v952, %v958
      %v961 = vadd.f32 %v953, %v959
      %v962 = vlaneseq
      %v963 = vshrl.u32 %v962, 7
      %v964 = vsub.s32 2, %v963
      %v965 = vrot.slane %v939, %v964
      %v966 = vmul.f32 %v946, %v965
      %v967 = vmul.f32 %v947, %v965
      %v968 = vadd.f32 %v960, %v966
      %v969 = vadd.f32 %v961, %v967
      %v971 = vlaneseq
      %v972 = vshrl.u32 %v971, 7
      %v973 = vsub.s32 0, %v972
      %v974 = vrot.slane %v941, %v973
      %v976 = vadd.f32 %v968, %v974
      %v977 = vadd.f32 %v969, %v974
      %v978 = vadd.f32 %v936, %v976
      %v979 = vadd.f32 %v937, %v977
      %v980 = vmax.f32 %v978, 0.0
      %v981 = vmax.f32 %v979, 0.0
      %982 = vst.msk [vmem:[#allocation2 + $0x1] sm:$0xff] %vm389, %v980
      %983 = vst.msk [vmem:[#allocation2 + $0x9] sm:$0xff] %vm389, %v981
      %v984 = vld [vmem:[#allocation2] sm:$0xff]
      %v985 = vld [vmem:[#allocation2 + $0x8] sm:$0xff]
      %v986 = vld [vmem:[#allocation2 + $0x2] sm:$0xff]
      %v987 = vld [vmem:[#allocation2 + $0xa] sm:$0xff]
      %v988 = vld [vmem:[%s6] sm:$0x1]
      %v989 = vld [vmem:[%s5] sm:$0xff]
      %v990 = vld [vmem:[%s5 + $0x8] sm:$0xff]
      %v991 = vld [vmem:[%s5 + $0x10] sm:$0xff]
      %v992 = vld [vmem:[%s5 + $0x18] sm:$0xff]
      %v993 = vld [vmem:[%s5 + $0x20] sm:$0xff]
      %v994 = vld [vmem:[%s5 + $0x28] sm:$0xff]
      %v995 = vld [vmem:[%s5 + $0x30] sm:$0xff]
      %v996 = vld [vmem:[%s5 + $0x38] sm:$0xff]
      %s997 = scalar_lea.vmem %s5, 128
      %v998 = vld [vmem:[%s997] sm:$0xff]
      %v999 = vld [vmem:[%s997 + $0x8] sm:$0xff]
      %v1000 = vld [vmem:[%s997 + $0x10] sm:$0xff]
      %v1001 = vld [vmem:[%s997 + $0x18] sm:$0xff]
      %v1002 = vld [vmem:[%s997 + $0x20] sm:$0xff]
      %v1003 = vld [vmem:[%s997 + $0x28] sm:$0xff]
      %v1004 = vld [vmem:[%s997 + $0x30] sm:$0xff]
      %v1005 = vld [vmem:[%s997 + $0x38] sm:$0xff]
      %v1007 = vsel %vm389, %v980, 0
      %v1010 = vsel %vm389, %v981, 0
      %1012 = vmatprep.subr.mxu0 0.0
      %1013 = vmatpush1.msra.mxu0 %v998
      %1014 = vmatprep.subr.mxu0 0.0
      %1015 = vmatpush1.msra.mxu0 %v999
      %1016 = vmatprep.subr.mxu0 0.0
      %1017 = vmatpush1.msra.mxu0 %v1000
      %1018 = vmatprep.subr.mxu0 0.0
      %1019 = vmatpush1.msra.mxu0 %v1001
      %1020 = vmatprep.subr.mxu0 0.0
      %1021 = vmatpush1.msra.mxu0 %v1002
      %1022 = vmatprep.subr.mxu0 0.0
      %1023 = vmatpush1.msra.mxu0 %v1003
      %1024 = vmatprep.subr.mxu0 0.0
      %1025 = vmatpush1.msra.mxu0 %v1004
      %1026 = vmatprep.subr.mxu0 0.0
      %1027 = vmatpush1.msra.mxu0 %v1005
      %1028 = vmatprep.subr.mxu0 0.0
      %1029 = vmatpush1.msra.mxu0 0.0
      %1030 = vmatprep.subr.mxu0 0.0
      %1031 = vmatpush1.msra.mxu0 0.0
      %1032 = vmatprep.subr.mxu0 0.0
      %1033 = vmatpush1.msra.mxu0 0.0
      %1034 = vmatprep.subr.mxu0 0.0
      %1035 = vmatpush1.msra.mxu0 0.0
      %1036 = vmatprep.subr.mxu0 0.0
      %1037 = vmatpush1.msra.mxu0 0.0
      %1038 = vmatprep.subr.mxu0 0.0
      %1039 = vmatpush1.msra.mxu0 0.0
      %1040 = vmatprep.subr.mxu0 0.0
      %1041 = vmatpush1.msra.mxu0 0.0
      %1042 = vmatprep.subr.mxu0 0.0
      %1043 = vmatpush1.msra.mxu0 0.0
      %1044 = vmatprep.subr.mxu0 0.0
      %1045 = vmatpush1.msra.mxu0 0.0
      %1046 = vmatprep.subr.mxu0 0.0
      %1047 = vmatpush1.msra.mxu0 0.0
      %1048 = vmatprep.subr.mxu0 0.0
      %1049 = vmatpush1.msra.mxu0 0.0
      %1050 = vmatprep.subr.mxu0 0.0
      %1051 = vmatpush1.msra.mxu0 0.0
      %1052 = vmatprep.subr.mxu0 0.0
      %1053 = vmatpush1.msra.mxu0 0.0
      %1054 = vmatprep.subr.mxu0 0.0
      %1055 = vmatpush1.msra.mxu0 0.0
      %1056 = vmatprep.subr.mxu0 0.0
      %1057 = vmatpush1.msra.mxu0 0.0
      %1058 = vmatprep.subr.mxu0 0.0
      %1059 = vmatpush1.msra.mxu0 0.0
      %1060 = vmatprep.subr.mxu0 0.0
      %1061 = vmatpush1.msra.mxu0 0.0
      %1062 = vmatprep.subr.mxu0 0.0
      %1063 = vmatpush1.msra.mxu0 0.0
      %1064 = vmatprep.subr.mxu0 0.0
      %1065 = vmatpush1.msra.mxu0 0.0
      %1066 = vmatprep.subr.mxu0 0.0
      %1067 = vmatpush1.msra.mxu0 0.0
      %1068 = vmatprep.subr.mxu0 0.0
      %1069 = vmatpush1.msra.mxu0 0.0
      %1070 = vmatprep.subr.mxu0 0.0
      %1071 = vmatpush1.msra.mxu0 0.0
      %1072 = vmatprep.subr.mxu0 0.0
      %1073 = vmatpush1.msra.mxu0 0.0
      %1074 = vmatprep.subr.mxu0 0.0
      %1075 = vmatpush1.msra.mxu0 0.0
      %1076 = vmatprep.mubr.f32.mxu0 0.0
      %1077 = vmatmul.mubr.f32.gmra.mrb[0].mxu0 %v1007
      %v1078 = vpop.f32.mrb[0].mxu0
      %v1079 = vadd.f32 0.0, %v1078
      %v1080 = vpop.f32.mrb[0].mxu0
      %1081 = vmatprep.mubr.f32.mxu0 0.0
      %1082 = vmatmul.mubr.f32.gmra.mrb[0].mxu0 %v1010
      %v1083 = vpop.f32.mrb[0].mxu0
      %v1084 = vadd.f32 0.0, %v1083
      %v1085 = vpop.f32.mrb[0].mxu0
      %1086 = vdwg.mxu0
      %v1088 = vsel %vm389, %v986, 0
      %v1091 = vsel %vm389, %v987, 0
      %1093 = vmatprep.subr.mxu0 0.0
      %1094 = vmatpush1.msra.mxu0 %v989
      %1095 = vmatprep.subr.mxu0 0.0
      %1096 = vmatpush1.msra.mxu0 %v990
      %1097 = vmatprep.subr.mxu0 0.0
      %1098 = vmatpush1.msra.mxu0 %v991
      %1099 = vmatprep.subr.mxu0 0.0
      %1100 = vmatpush1.msra.mxu0 %v992
      %1101 = vmatprep.subr.mxu0 0.0
      %1102 = vmatpush1.msra.mxu0 %v993
      %1103 = vmatprep.subr.mxu0 0.0
      %1104 = vmatpush1.msra.mxu0 %v994
      %1105 = vmatprep.subr.mxu0 0.0
      %1106 = vmatpush1.msra.mxu0 %v995
      %1107 = vmatprep.subr.mxu0 0.0
      %1108 = vmatpush1.msra.mxu0 %v996
      %1109 = vmatprep.subr.mxu0 0.0
      %1110 = vmatpush1.msra.mxu0 0.0
      %1111 = vmatprep.subr.mxu0 0.0
      %1112 = vmatpush1.msra.mxu0 0.0
      %1113 = vmatprep.subr.mxu0 0.0
      %1114 = vmatpush1.msra.mxu0 0.0
      %1115 = vmatprep.subr.mxu0 0.0
      %1116 = vmatpush1.msra.mxu0 0.0
      %1117 = vmatprep.subr.mxu0 0.0
      %1118 = vmatpush1.msra.mxu0 0.0
      %1119 = vmatprep.subr.mxu0 0.0
      %1120 = vmatpush1.msra.mxu0 0.0
      %1121 = vmatprep.subr.mxu0 0.0
      %1122 = vmatpush1.msra.mxu0 0.0
      %1123 = vmatprep.subr.mxu0 0.0
      %1124 = vmatpush1.msra.mxu0 0.0
      %1125 = vmatprep.subr.mxu0 0.0
      %1126 = vmatpush1.msra.mxu0 0.0
      %1127 = vmatprep.subr.mxu0 0.0
      %1128 = vmatpush1.msra.mxu0 0.0
      %1129 = vmatprep.subr.mxu0 0.0
      %1130 = vmatpush1.msra.mxu0 0.0
      %1131 = vmatprep.subr.mxu0 0.0
      %1132 = vmatpush1.msra.mxu0 0.0
      %1133 = vmatprep.subr.mxu0 0.0
      %1134 = vmatpush1.msra.mxu0 0.0
      %1135 = vmatprep.subr.mxu0 0.0
      %1136 = vmatpush1.msra.mxu0 0.0
      %1137 = vmatprep.subr.mxu0 0.0
      %1138 = vmatpush1.msra.mxu0 0.0
      %1139 = vmatprep.subr.mxu0 0.0
      %1140 = vmatpush1.msra.mxu0 0.0
      %1141 = vmatprep.subr.mxu0 0.0
      %1142 = vmatpush1.msra.mxu0 0.0
      %1143 = vmatprep.subr.mxu0 0.0
      %1144 = vmatpush1.msra.mxu0 0.0
      %1145 = vmatprep.subr.mxu0 0.0
      %1146 = vmatpush1.msra.mxu0 0.0
      %1147 = vmatprep.subr.mxu0 0.0
      %1148 = vmatpush1.msra.mxu0 0.0
      %1149 = vmatprep.subr.mxu0 0.0
      %1150 = vmatpush1.msra.mxu0 0.0
      %1151 = vmatprep.subr.mxu0 0.0
      %1152 = vmatpush1.msra.mxu0 0.0
      %1153 = vmatprep.subr.mxu0 0.0
      %1154 = vmatpush1.msra.mxu0 0.0
      %1155 = vmatprep.subr.mxu0 0.0
      %1156 = vmatpush1.msra.mxu0 0.0
      %1157 = vmatprep.mubr.f32.mxu0 0.0
      %1158 = vmatmul.mubr.f32.gmra.mrb[0].mxu0 %v1088
      %v1159 = vpop.f32.mrb[0].mxu0
      %v1160 = vadd.f32 %v1079, %v1159
      %v1161 = vpop.f32.mrb[0].mxu0
      %1162 = vmatprep.mubr.f32.mxu0 0.0
      %1163 = vmatmul.mubr.f32.gmra.mrb[0].mxu0 %v1091
      %v1164 = vpop.f32.mrb[0].mxu0
      %v1165 = vadd.f32 %v1084, %v1164
      %v1166 = vpop.f32.mrb[0].mxu0
      %1167 = vdwg.mxu0
      %s1168 = scalar_lea.vmem %s5, 256
      %v1169 = vld [vmem:[%s1168] sm:$0xff]
      %v1170 = vld [vmem:[%s1168 + $0x8] sm:$0xff]
      %v1171 = vld [vmem:[%s1168 + $0x10] sm:$0xff]
      %v1172 = vld [vmem:[%s1168 + $0x18] sm:$0xff]
      %v1173 = vld [vmem:[%s1168 + $0x20] sm:$0xff]
      %v1174 = vld [vmem:[%s1168 + $0x28] sm:$0xff]
      %v1175 = vld [vmem:[%s1168 + $0x30] sm:$0xff]
      %v1176 = vld [vmem:[%s1168 + $0x38] sm:$0xff]
      %v1178 = vsel %vm389, %v984, 0
      %v1181 = vsel %vm389, %v985, 0
      %1183 = vmatprep.subr.mxu0 0.0
      %1184 = vmatpush1.msra.mxu0 %v1169
      %1185 = vmatprep.subr.mxu0 0.0
      %1186 = vmatpush1.msra.mxu0 %v1170
      %1187 = vmatprep.subr.mxu0 0.0
      %1188 = vmatpush1.msra.mxu0 %v1171
      %1189 = vmatprep.subr.mxu0 0.0
      %1190 = vmatpush1.msra.mxu0 %v1172
      %1191 = vmatprep.subr.mxu0 0.0
      %1192 = vmatpush1.msra.mxu0 %v1173
      %1193 = vmatprep.subr.mxu0 0.0
      %1194 = vmatpush1.msra.mxu0 %v1174
      %1195 = vmatprep.subr.mxu0 0.0
      %1196 = vmatpush1.msra.mxu0 %v1175
      %1197 = vmatprep.subr.mxu0 0.0
      %1198 = vmatpush1.msra.mxu0 %v1176
      %1199 = vmatprep.subr.mxu0 0.0
      %1200 = vmatpush1.msra.mxu0 0.0
      %1201 = vmatprep.subr.mxu0 0.0
      %1202 = vmatpush1.msra.mxu0 0.0
      %1203 = vmatprep.subr.mxu0 0.0
      %1204 = vmatpush1.msra.mxu0 0.0
      %1205 = vmatprep.subr.mxu0 0.0
      %1206 = vmatpush1.msra.mxu0 0.0
      %1207 = vmatprep.subr.mxu0 0.0
      %1208 = vmatpush1.msra.mxu0 0.0
      %1209 = vmatprep.subr.mxu0 0.0
      %1210 = vmatpush1.msra.mxu0 0.0
      %1211 = vmatprep.subr.mxu0 0.0
      %1212 = vmatpush1.msra.mxu0 0.0
      %1213 = vmatprep.subr.mxu0 0.0
      %1214 = vmatpush1.msra.mxu0 0.0
      %1215 = vmatprep.subr.mxu0 0.0
      %1216 = vmatpush1.msra.mxu0 0.0
      %1217 = vmatprep.subr.mxu0 0.0
      %1218 = vmatpush1.msra.mxu0 0.0
      %1219 = vmatprep.subr.mxu0 0.0
      %1220 = vmatpush1.msra.mxu0 0.0
      %1221 = vmatprep.subr.mxu0 0.0
      %1222 = vmatpush1.msra.mxu0 0.0
      %1223 = vmatprep.subr.mxu0 0.0
      %1224 = vmatpush1.msra.mxu0 0.0
      %1225 = vmatprep.subr.mxu0 0.0
      %1226 = vmatpush1.msra.mxu0 0.0
      %1227 = vmatprep.subr.mxu0 0.0
      %1228 = vmatpush1.msra.mxu0 0.0
      %1229 = vmatprep.subr.mxu0 0.0
      %1230 = vmatpush1.msra.mxu0 0.0
      %1231 = vmatprep.subr.mxu0 0.0
      %1232 = vmatpush1.msra.mxu0 0.0
      %1233 = vmatprep.subr.mxu0 0.0
      %1234 = vmatpush1.msra.mxu0 0.0
      %1235 = vmatprep.subr.mxu0 0.0
      %1236 = vmatpush1.msra.mxu0 0.0
      %1237 = vmatprep.subr.mxu0 0.0
      %1238 = vmatpush1.msra.mxu0 0.0
      %1239 = vmatprep.subr.mxu0 0.0
      %1240 = vmatpush1.msra.mxu0 0.0
      %1241 = vmatprep.subr.mxu0 0.0
      %1242 = vmatpush1.msra.mxu0 0.0
      %1243 = vmatprep.subr.mxu0 0.0
      %1244 = vmatpush1.msra.mxu0 0.0
      %1245 = vmatprep.subr.mxu0 0.0
      %1246 = vmatpush1.msra.mxu0 0.0
      %1247 = vmatprep.mubr.f32.mxu0 0.0
      %1248 = vmatmul.mubr.f32.gmra.mrb[0].mxu0 %v1178
      %v1249 = vpop.f32.mrb[0].mxu0
      %v1250 = vadd.f32 0.0, %v1249
      %v1251 = vpop.f32.mrb[0].mxu0
      %1252 = vmatprep.mubr.f32.mxu0 0.0
      %1253 = vmatmul.mubr.f32.gmra.mrb[0].mxu0 %v1181
      %v1254 = vpop.f32.mrb[0].mxu0
      %v1255 = vadd.f32 0.0, %v1254
      %v1256 = vpop.f32.mrb[0].mxu0
      %1257 = vdwg.mxu0
      %v1258 = vadd.f32 %v1160, %v1250
      %v1259 = vadd.f32 %v1165, %v1255
      %v1261 = vlaneseq
      %v1262 = vshrl.u32 %v1261, 7
      %v1263 = vsub.s32 0, %v1262
      %v1264 = vrot.slane %v988, %v1263
      %v1266 = vadd.f32 %v1258, %v1264
      %v1267 = vadd.f32 %v1259, %v1264
      %v1268 = vmax.f32 %v1266, 0.0
      %v1269 = vmax.f32 %v1267, 0.0
      %s1270 = scalar_lea.vmem %s5, 64
      %v1271 = vld [vmem:[%s1270] sm:$0xff]
      %v1272 = vld [vmem:[%s1270 + $0x8] sm:$0xff]
      %v1273 = vld [vmem:[%s1270 + $0x10] sm:$0xff]
      %v1274 = vld [vmem:[%s1270 + $0x18] sm:$0xff]
      %v1275 = vld [vmem:[%s1270 + $0x20] sm:$0xff]
      %v1276 = vld [vmem:[%s1270 + $0x28] sm:$0xff]
      %v1277 = vld [vmem:[%s1270 + $0x30] sm:$0xff]
      %v1278 = vld [vmem:[%s1270 + $0x38] sm:$0xff]
      %s1279 = scalar_lea.vmem %s5, 192
      %v1280 = vld [vmem:[%s1279] sm:$0xff]
      %v1281 = vld [vmem:[%s1279 + $0x8] sm:$0xff]
      %v1282 = vld [vmem:[%s1279 + $0x10] sm:$0xff]
      %v1283 = vld [vmem:[%s1279 + $0x18] sm:$0xff]
      %v1284 = vld [vmem:[%s1279 + $0x20] sm:$0xff]
      %v1285 = vld [vmem:[%s1279 + $0x28] sm:$0xff]
      %v1286 = vld [vmem:[%s1279 + $0x30] sm:$0xff]
      %v1287 = vld [vmem:[%s1279 + $0x38] sm:$0xff]
      %1288 = vmatprep.subr.mxu0 0.0
      %1289 = vmatpush1.msra.mxu0 %v1280
      %1290 = vmatprep.subr.mxu0 0.0
      %1291 = vmatpush1.msra.mxu0 %v1281
      %1292 = vmatprep.subr.mxu0 0.0
      %1293 = vmatpush1.msra.mxu0 %v1282
      %1294 = vmatprep.subr.mxu0 0.0
      %1295 = vmatpush1.msra.mxu0 %v1283
      %1296 = vmatprep.subr.mxu0 0.0
      %1297 = vmatpush1.msra.mxu0 %v1284
      %1298 = vmatprep.subr.mxu0 0.0
      %1299 = vmatpush1.msra.mxu0 %v1285
      %1300 = vmatprep.subr.mxu0 0.0
      %1301 = vmatpush1.msra.mxu0 %v1286
      %1302 = vmatprep.subr.mxu0 0.0
      %1303 = vmatpush1.msra.mxu0 %v1287
      %1304 = vmatprep.subr.mxu0 0.0
      %1305 = vmatpush1.msra.mxu0 0.0
      %1306 = vmatprep.subr.mxu0 0.0
      %1307 = vmatpush1.msra.mxu0 0.0
      %1308 = vmatprep.subr.mxu0 0.0
      %1309 = vmatpush1.msra.mxu0 0.0
      %1310 = vmatprep.subr.mxu0 0.0
      %1311 = vmatpush1.msra.mxu0 0.0
      %1312 = vmatprep.subr.mxu0 0.0
      %1313 = vmatpush1.msra.mxu0 0.0
      %1314 = vmatprep.subr.mxu0 0.0
      %1315 = vmatpush1.msra.mxu0 0.0
      %1316 = vmatprep.subr.mxu0 0.0
      %1317 = vmatpush1.msra.mxu0 0.0
      %1318 = vmatprep.subr.mxu0 0.0
      %1319 = vmatpush1.msra.mxu0 0.0
      %1320 = vmatprep.subr.mxu0 0.0
      %1321 = vmatpush1.msra.mxu0 0.0
      %1322 = vmatprep.subr.mxu0 0.0
      %1323 = vmatpush1.msra.mxu0 0.0
      %1324 = vmatprep.subr.mxu0 0.0
      %1325 = vmatpush1.msra.mxu0 0.0
      %1326 = vmatprep.subr.mxu0 0.0
      %1327 = vmatpush1.msra.mxu0 0.0
      %1328 = vmatprep.subr.mxu0 0.0
      %1329 = vmatpush1.msra.mxu0 0.0
      %1330 = vmatprep.subr.mxu0 0.0
      %1331 = vmatpush1.msra.mxu0 0.0
      %1332 = vmatprep.subr.mxu0 0.0
      %1333 = vmatpush1.msra.mxu0 0.0
      %1334 = vmatprep.subr.mxu0 0.0
      %1335 = vmatpush1.msra.mxu0 0.0
      %1336 = vmatprep.subr.mxu0 0.0
      %1337 = vmatpush1.msra.mxu0 0.0
      %1338 = vmatprep.subr.mxu0 0.0
      %1339 = vmatpush1.msra.mxu0 0.0
      %1340 = vmatprep.subr.mxu0 0.0
      %1341 = vmatpush1.msra.mxu0 0.0
      %1342 = vmatprep.subr.mxu0 0.0
      %1343 = vmatpush1.msra.mxu0 0.0
      %1344 = vmatprep.subr.mxu0 0.0
      %1345 = vmatpush1.msra.mxu0 0.0
      %1346 = vmatprep.subr.mxu0 0.0
      %1347 = vmatpush1.msra.mxu0 0.0
      %1348 = vmatprep.subr.mxu0 0.0
      %1349 = vmatpush1.msra.mxu0 0.0
      %1350 = vmatprep.subr.mxu0 0.0
      %1351 = vmatpush1.msra.mxu0 0.0
      %1352 = vmatprep.mubr.f32.mxu0 0.0
      %1353 = vmatmul.mubr.f32.gmra.mrb[0].mxu0 %v1007
      %v1354 = vpop.f32.mrb[0].mxu0
      %v1355 = vadd.f32 0.0, %v1354
      %v1356 = vpop.f32.mrb[0].mxu0
      %1357 = vmatprep.mubr.f32.mxu0 0.0
      %1358 = vmatmul.mubr.f32.gmra.mrb[0].mxu0 %v1010
      %v1359 = vpop.f32.mrb[0].mxu0
      %v1360 = vadd.f32 0.0, %v1359
      %v1361 = vpop.f32.mrb[0].mxu0
      %1362 = vdwg.mxu0
      %1363 = vmatprep.subr.mxu0 0.0
      %1364 = vmatpush1.msra.mxu0 %v1271
      %1365 = vmatprep.subr.mxu0 0.0
      %1366 = vmatpush1.msra.mxu0 %v1272
      %1367 = vmatprep.subr.mxu0 0.0
      %1368 = vmatpush1.msra.mxu0 %v1273
      %1369 = vmatprep.subr.mxu0 0.0
      %1370 = vmatpush1.msra.mxu0 %v1274
      %1371 = vmatprep.subr.mxu0 0.0
      %1372 = vmatpush1.msra.mxu0 %v1275
      %1373 = vmatprep.subr.mxu0 0.0
      %1374 = vmatpush1.msra.mxu0 %v1276
      %1375 = vmatprep.subr.mxu0 0.0
      %1376 = vmatpush1.msra.mxu0 %v1277
      %1377 = vmatprep.subr.mxu0 0.0
      %1378 = vmatpush1.msra.mxu0 %v1278
      %1379 = vmatprep.subr.mxu0 0.0
      %1380 = vmatpush1.msra.mxu0 0.0
      %1381 = vmatprep.subr.mxu0 0.0
      %1382 = vmatpush1.msra.mxu0 0.0
      %1383 = vmatprep.subr.mxu0 0.0
      %1384 = vmatpush1.msra.mxu0 0.0
      %1385 = vmatprep.subr.mxu0 0.0
      %1386 = vmatpush1.msra.mxu0 0.0
      %1387 = vmatprep.subr.mxu0 0.0
      %1388 = vmatpush1.msra.mxu0 0.0
      %1389 = vmatprep.subr.mxu0 0.0
      %1390 = vmatpush1.msra.mxu0 0.0
      %1391 = vmatprep.subr.mxu0 0.0
      %1392 = vmatpush1.msra.mxu0 0.0
      %1393 = vmatprep.subr.mxu0 0.0
      %1394 = vmatpush1.msra.mxu0 0.0
      %1395 = vmatprep.subr.mxu0 0.0
      %1396 = vmatpush1.msra.mxu0 0.0
      %1397 = vmatprep.subr.mxu0 0.0
      %1398 = vmatpush1.msra.mxu0 0.0
      %1399 = vmatprep.subr.mxu0 0.0
      %1400 = vmatpush1.msra.mxu0 0.0
      %1401 = vmatprep.subr.mxu0 0.0
      %1402 = vmatpush1.msra.mxu0 0.0
      %1403 = vmatprep.subr.mxu0 0.0
      %1404 = vmatpush1.msra.mxu0 0.0
      %1405 = vmatprep.subr.mxu0 0.0
      %1406 = vmatpush1.msra.mxu0 0.0
      %1407 = vmatprep.subr.mxu0 0.0
      %1408 = vmatpush1.msra.mxu0 0.0
      %1409 = vmatprep.subr.mxu0 0.0
      %1410 = vmatpush1.msra.mxu0 0.0
      %1411 = vmatprep.subr.mxu0 0.0
      %1412 = vmatpush1.msra.mxu0 0.0
      %1413 = vmatprep.subr.mxu0 0.0
      %1414 = vmatpush1.msra.mxu0 0.0
      %1415 = vmatprep.subr.mxu0 0.0
      %1416 = vmatpush1.msra.mxu0 0.0
      %1417 = vmatprep.subr.mxu0 0.0
      %1418 = vmatpush1.msra.mxu0 0.0
      %1419 = vmatprep.subr.mxu0 0.0
      %1420 = vmatpush1.msra.mxu0 0.0
      %1421 = vmatprep.subr.mxu0 0.0
      %1422 = vmatpush1.msra.mxu0 0.0
      %1423 = vmatprep.subr.mxu0 0.0
      %1424 = vmatpush1.msra.mxu0 0.0
      %1425 = vmatprep.subr.mxu0 0.0
      %1426 = vmatpush1.msra.mxu0 0.0
      %1427 = vmatprep.mubr.f32.mxu0 0.0
      %1428 = vmatmul.mubr.f32.gmra.mrb[0].mxu0 %v1088
      %v1429 = vpop.f32.mrb[0].mxu0
      %v1430 = vadd.f32 %v1355, %v1429
      %v1431 = vpop.f32.mrb[0].mxu0
      %1432 = vmatprep.mubr.f32.mxu0 0.0
      %1433 = vmatmul.mubr.f32.gmra.mrb[0].mxu0 %v1091
      %v1434 = vpop.f32.mrb[0].mxu0
      %v1435 = vadd.f32 %v1360, %v1434
      %v1436 = vpop.f32.mrb[0].mxu0
      %1437 = vdwg.mxu0
      %v1438 = vadd.f32 %v1430, %v1264
      %v1439 = vadd.f32 %v1435, %v1264
      %v1440 = vmax.f32 %v1438, 0.0
      %v1441 = vmax.f32 %v1439, 0.0
      %v1442 = vld [vmem:[%s7] sm:$0x7]
      %v1443 = vld [vmem:[%s8] sm:$0x1]
      %1444 = vst [vmem:[#allocation3 + $0x1] sm:$0xff] %v1440
      %1445 = vst [vmem:[#allocation3 + $0x9] sm:$0xff] %v1441
      %v1446 = vld [vmem:[#allocation3] sm:$0xff]
      %v1447 = vld [vmem:[#allocation3 + $0x8] sm:$0xff]
      %1448 = vst [vmem:[#allocation3 + $0x1] sm:$0xff] %v1268
      %1449 = vst [vmem:[#allocation3 + $0x9] sm:$0xff] %v1269
      %v1450 = vld [vmem:[#allocation3 + $0x2] sm:$0xff]
      %v1451 = vld [vmem:[#allocation3 + $0xa] sm:$0xff]
      %v1452 = vlaneseq
      %v1453 = vshrl.u32 %v1452, 7
      %v1454 = vsub.s32 0, %v1453
      %v1455 = vrot.slane %v1442, %v1454
      %v1456 = vmul.f32 %v1446, %v1455
      %v1457 = vmul.f32 %v1447, %v1455
      %v1458 = vlaneseq
      %v1459 = vshrl.u32 %v1458, 7
      %v1460 = vsub.s32 1, %v1459
      %v1461 = vrot.slane %v1442, %v1460
      %v1462 = vmul.f32 %v1268, %v1461
      %v1463 = vmul.f32 %v1269, %v1461
      %v1464 = vadd.f32 %v1456, %v1462
      %v1465 = vadd.f32 %v1457, %v1463
      %v1466 = vlaneseq
      %v1467 = vshrl.u32 %v1466, 7
      %v1468 = vsub.s32 2, %v1467
      %v1469 = vrot.slane %v1442, %v1468
      %v1470 = vmul.f32 %v1440, %v1469
      %v1471 = vmul.f32 %v1441, %v1469
      %v1472 = vadd.f32 %v1464, %v1470
      %v1473 = vadd.f32 %v1465, %v1471
      %v1475 = vlaneseq
      %v1476 = vshrl.u32 %v1475, 7
      %v1477 = vsub.s32 0, %v1476
      %v1478 = vrot.slane %v1443, %v1477
      %v1480 = vadd.f32 %v1472, %v1478
      %v1481 = vadd.f32 %v1473, %v1478
      %v1482 = vadd.f32 %v1268, %v1480
      %v1483 = vadd.f32 %v1269, %v1481
      %v1484 = vmax.f32 %v1482, 0.0
      %v1485 = vmax.f32 %v1483, 0.0
      %v1486 = vmul.f32 %v1268, %v1455
      %v1487 = vmul.f32 %v1269, %v1455
      %v1488 = vmul.f32 %v1440, %v1461
      %v1489 = vmul.f32 %v1441, %v1461
      %v1490 = vadd.f32 %v1486, %v1488
      %v1491 = vadd.f32 %v1487, %v1489
      %v1492 = vmul.f32 %v1450, %v1469
      %v1493 = vmul.f32 %v1451, %v1469
      %v1494 = vadd.f32 %v1490, %v1492
      %v1495 = vadd.f32 %v1491, %v1493
      %v1496 = vadd.f32 %v1494, %v1478
      %v1497 = vadd.f32 %v1495, %v1478
      %v1498 = vadd.f32 %v1440, %v1496
      %v1499 = vadd.f32 %v1441, %v1497
      %v1500 = vmax.f32 %v1498, 0.0
      %v1501 = vmax.f32 %v1499, 0.0
      %s1502 = scalar_lea.vmem %s7, 4
      %v1503 = vld [vmem:[%s1502] sm:$0x7]
      %s1504 = scalar_lea.vmem %s8, 1
      %v1505 = vld [vmem:[%s1504] sm:$0x1]
      %1506 = vst [vmem:[#allocation3 + $0x1] sm:$0xff] %v1500
      %1507 = vst [vmem:[#allocation3 + $0x9] sm:$0xff] %v1501
      %v1508 = vld [vmem:[#allocation3] sm:$0xff]
      %v1509 = vld [vmem:[#allocation3 + $0x8] sm:$0xff]
      %1510 = vst [vmem:[#allocation3 + $0x1] sm:$0xff] %v1484
      %1511 = vst [vmem:[#allocation3 + $0x9] sm:$0xff] %v1485
      %v1512 = vld [vmem:[#allocation3 + $0x2] sm:$0xff]
      %v1513 = vld [vmem:[#allocation3 + $0xa] sm:$0xff]
      %v1514 = vlaneseq
      %v1515 = vshrl.u32 %v1514, 7
      %v1516 = vsub.s32 0, %v1515
      %v1517 = vrot.slane %v1503, %v1516
      %v1518 = vmul.f32 %v1508, %v1517
      %v1519 = vmul.f32 %v1509, %v1517
      %v1520 = vlaneseq
      %v1521 = vshrl.u32 %v1520, 7
      %v1522 = vsub.s32 1, %v1521
      %v1523 = vrot.slane %v1503, %v1522
      %v1524 = vmul.f32 %v1484, %v1523
      %v1525 = vmul.f32 %v1485, %v1523
      %v1526 = vadd.f32 %v1518, %v1524
      %v1527 = vadd.f32 %v1519, %v1525
      %v1528 = vlaneseq
      %v1529 = vshrl.u32 %v1528, 7
      %v1530 = vsub.s32 2, %v1529
      %v1531 = vrot.slane %v1503, %v1530
      %v1532 = vmul.f32 %v1500, %v1531
      %v1533 = vmul.f32 %v1501, %v1531
      %v1534 = vadd.f32 %v1526, %v1532
      %v1535 = vadd.f32 %v1527, %v1533
      %v1537 = vlaneseq
      %v1538 = vshrl.u32 %v1537, 7
      %v1539 = vsub.s32 0, %v1538
      %v1540 = vrot.slane %v1505, %v1539
      %v1542 = vadd.f32 %v1534, %v1540
      %v1543 = vadd.f32 %v1535, %v1540
      %v1544 = vadd.f32 %v1484, %v1542
      %v1545 = vadd.f32 %v1485, %v1543
      %v1546 = vmax.f32 %v1544, 0.0
      %v1547 = vmax.f32 %v1545, 0.0
      %v1548 = vmul.f32 %v1484, %v1517
      %v1549 = vmul.f32 %v1485, %v1517
      %v1550 = vmul.f32 %v1500, %v1523
      %v1551 = vmul.f32 %v1501, %v1523
      %v1552 = vadd.f32 %v1548, %v1550
      %v1553 = vadd.f32 %v1549, %v1551
      %v1554 = vmul.f32 %v1512, %v1531
      %v1555 = vmul.f32 %v1513, %v1531
      %v1556 = vadd.f32 %v1552, %v1554
      %v1557 = vadd.f32 %v1553, %v1555
      %v1558 = vadd.f32 %v1556, %v1540
      %v1559 = vadd.f32 %v1557, %v1540
      %v1560 = vadd.f32 %v1500, %v1558
      %v1561 = vadd.f32 %v1501, %v1559
      %v1562 = vmax.f32 %v1560, 0.0
      %v1563 = vmax.f32 %v1561, 0.0
      %s1564 = scalar_lea.vmem %s7, 8
      %v1565 = vld [vmem:[%s1564] sm:$0x7]
      %s1566 = scalar_lea.vmem %s8, 2
      %v1567 = vld [vmem:[%s1566] sm:$0x1]
      %1568 = vst [vmem:[#allocation3 + $0x1] sm:$0xff] %v1562
      %1569 = vst [vmem:[#allocation3 + $0x9] sm:$0xff] %v1563
      %v1570 = vld [vmem:[#allocation3] sm:$0xff]
      %v1571 = vld [vmem:[#allocation3 + $0x8] sm:$0xff]
      %1572 = vst [vmem:[#allocation3 + $0x1] sm:$0xff] %v1546
      %1573 = vst [vmem:[#allocation3 + $0x9] sm:$0xff] %v1547
      %v1574 = vld [vmem:[#allocation3 + $0x2] sm:$0xff]
      %v1575 = vld [vmem:[#allocation3 + $0xa] sm:$0xff]
      %v1576 = vlaneseq
      %v1577 = vshrl.u32 %v1576, 7
      %v1578 = vsub.s32 0, %v1577
      %v1579 = vrot.slane %v1565, %v1578
      %v1580 = vmul.f32 %v1570, %v1579
      %v1581 = vmul.f32 %v1571, %v1579
      %v1582 = vlaneseq
      %v1583 = vshrl.u32 %v1582, 7
      %v1584 = vsub.s32 1, %v1583
      %v1585 = vrot.slane %v1565, %v1584
      %v1586 = vmul.f32 %v1546, %v1585
      %v1587 = vmul.f32 %v1547, %v1585
      %v1588 = vadd.f32 %v1580, %v1586
      %v1589 = vadd.f32 %v1581, %v1587
      %v1590 = vlaneseq
      %v1591 = vshrl.u32 %v1590, 7
      %v1592 = vsub.s32 2, %v1591
      %v1593 = vrot.slane %v1565, %v1592
      %v1594 = vmul.f32 %v1562, %v1593
      %v1595 = vmul.f32 %v1563, %v1593
      %v1596 = vadd.f32 %v1588, %v1594
      %v1597 = vadd.f32 %v1589, %v1595
      %v1599 = vlaneseq
      %v1600 = vshrl.u32 %v1599, 7
      %v1601 = vsub.s32 0, %v1600
      %v1602 = vrot.slane %v1567, %v1601
      %v1604 = vadd.f32 %v1596, %v1602
      %v1605 = vadd.f32 %v1597, %v1602
      %v1606 = vadd.f32 %v1546, %v1604
      %v1607 = vadd.f32 %v1547, %v1605
      %v1608 = vmax.f32 %v1606, 0.0
      %v1609 = vmax.f32 %v1607, 0.0
      %v1610 = vmul.f32 %v1546, %v1579
      %v1611 = vmul.f32 %v1547, %v1579
      %v1612 = vmul.f32 %v1562, %v1585
      %v1613 = vmul.f32 %v1563, %v1585
      %v1614 = vadd.f32 %v1610, %v1612
      %v1615 = vadd.f32 %v1611, %v1613
      %v1616 = vmul.f32 %v1574, %v1593
      %v1617 = vmul.f32 %v1575, %v1593
      %v1618 = vadd.f32 %v1614, %v1616
      %v1619 = vadd.f32 %v1615, %v1617
      %v1620 = vadd.f32 %v1618, %v1602
      %v1621 = vadd.f32 %v1619, %v1602
      %v1622 = vadd.f32 %v1562, %v1620
      %v1623 = vadd.f32 %v1563, %v1621
      %v1624 = vmax.f32 %v1622, 0.0
      %v1625 = vmax.f32 %v1623, 0.0
      %s1626 = scalar_lea.vmem %s7, 12
      %v1627 = vld [vmem:[%s1626] sm:$0x7]
      %s1628 = scalar_lea.vmem %s8, 3
      %v1629 = vld [vmem:[%s1628] sm:$0x1]
      %1630 = vst [vmem:[#allocation3 + $0x1] sm:$0xff] %v1624
      %1631 = vst [vmem:[#allocation3 + $0x9] sm:$0xff] %v1625
      %v1632 = vld [vmem:[#allocation3] sm:$0xff]
      %v1633 = vld [vmem:[#allocation3 + $0x8] sm:$0xff]
      %1634 = vst [vmem:[#allocation3 + $0x1] sm:$0xff] %v1608
      %1635 = vst [vmem:[#allocation3 + $0x9] sm:$0xff] %v1609
      %v1636 = vld [vmem:[#allocation3 + $0x2] sm:$0xff]
      %v1637 = vld [vmem:[#allocation3 + $0xa] sm:$0xff]
      %v1638 = vlaneseq
      %v1639 = vshrl.u32 %v1638, 7
      %v1640 = vsub.s32 0, %v1639
      %v1641 = vrot.slane %v1627, %v1640
      %v1642 = vmul.f32 %v1632, %v1641
      %v1643 = vmul.f32 %v1633, %v1641
      %v1644 = vlaneseq
      %v1645 = vshrl.u32 %v1644, 7
      %v1646 = vsub.s32 1, %v1645
      %v1647 = vrot.slane %v1627, %v1646
      %v1648 = vmul.f32 %v1608, %v1647
      %v1649 = vmul.f32 %v1609, %v1647
      %v1650 = vadd.f32 %v1642, %v1648
      %v1651 = vadd.f32 %v1643, %v1649
      %v1652 = vlaneseq
      %v1653 = vshrl.u32 %v1652, 7
      %v1654 = vsub.s32 2, %v1653
      %v1655 = vrot.slane %v1627, %v1654
      %v1656 = vmul.f32 %v1624, %v1655
      %v1657 = vmul.f32 %v1625, %v1655
      %v1658 = vadd.f32 %v1650, %v1656
      %v1659 = vadd.f32 %v1651, %v1657
      %v1661 = vlaneseq
      %v1662 = vshrl.u32 %v1661, 7
      %v1663 = vsub.s32 0, %v1662
      %v1664 = vrot.slane %v1629, %v1663
      %v1666 = vadd.f32 %v1658, %v1664
      %v1667 = vadd.f32 %v1659, %v1664
      %v1668 = vadd.f32 %v1608, %v1666
      %v1669 = vadd.f32 %v1609, %v1667
      %v1670 = vmax.f32 %v1668, 0.0
      %v1671 = vmax.f32 %v1669, 0.0
      %v1672 = vmul.f32 %v1608, %v1641
      %v1673 = vmul.f32 %v1609, %v1641
      %v1674 = vmul.f32 %v1624, %v1647
      %v1675 = vmul.f32 %v1625, %v1647
      %v1676 = vadd.f32 %v1672, %v1674
      %v1677 = vadd.f32 %v1673, %v1675
      %v1678 = vmul.f32 %v1636, %v1655
      %v1679 = vmul.f32 %v1637, %v1655
      %v1680 = vadd.f32 %v1676, %v1678
      %v1681 = vadd.f32 %v1677, %v1679
      %v1682 = vadd.f32 %v1680, %v1664
      %v1683 = vadd.f32 %v1681, %v1664
      %v1684 = vadd.f32 %v1624, %v1682
      %v1685 = vadd.f32 %v1625, %v1683
      %v1686 = vmax.f32 %v1684, 0.0
      %v1687 = vmax.f32 %v1685, 0.0
      %v1688 = vld [vmem:[%s9] sm:$0xff]
      %v1689 = vld [vmem:[%s9 + $0x8] sm:$0xff]
      %v1690 = vld [vmem:[%s9 + $0x10] sm:$0xff]
      %v1691 = vld [vmem:[%s9 + $0x18] sm:$0xff]
      %v1692 = vld [vmem:[%s9 + $0x20] sm:$0xff]
      %v1693 = vld [vmem:[%s9 + $0x28] sm:$0xff]
      %v1694 = vld [vmem:[%s9 + $0x30] sm:$0xff]
      %v1695 = vld [vmem:[%s9 + $0x38] sm:$0xff]
      %v1696 = vld [vmem:[%s9 + $0x40] sm:$0xff]
      %v1697 = vld [vmem:[%s9 + $0x48] sm:$0xff]
      %v1698 = vld [vmem:[%s9 + $0x50] sm:$0xff]
      %v1699 = vld [vmem:[%s9 + $0x58] sm:$0xff]
      %v1700 = vld [vmem:[%s9 + $0x60] sm:$0xff]
      %v1701 = vld [vmem:[%s9 + $0x68] sm:$0xff]
      %v1702 = vld [vmem:[%s9 + $0x70] sm:$0xff]
      %v1703 = vld [vmem:[%s9 + $0x78] sm:$0xff]
      %v1704 = vld [vmem:[%s9 + $0x80] sm:$0xff]
      %v1705 = vld [vmem:[%s9 + $0x88] sm:$0xff]
      %v1706 = vld [vmem:[%s9 + $0x90] sm:$0xff]
      %v1707 = vld [vmem:[%s9 + $0x98] sm:$0xff]
      %v1708 = vld [vmem:[%s9 + $0xa0] sm:$0xff]
      %v1709 = vld [vmem:[%s9 + $0xa8] sm:$0xff]
      %v1710 = vld [vmem:[%s9 + $0xb0] sm:$0xff]
      %v1711 = vld [vmem:[%s9 + $0xb8] sm:$0xff]
      %v1712 = vld [vmem:[%s9 + $0xc0] sm:$0xff]
      %v1713 = vld [vmem:[%s9 + $0xc8] sm:$0xff]
      %v1714 = vld [vmem:[%s9 + $0xd0] sm:$0xff]
      %v1715 = vld [vmem:[%s9 + $0xd8] sm:$0xff]
      %v1716 = vld [vmem:[%s9 + $0xe0] sm:$0xff]
      %v1717 = vld [vmem:[%s9 + $0xe8] sm:$0xff]
      %v1718 = vld [vmem:[%s9 + $0xf0] sm:$0xff]
      %v1719 = vld [vmem:[%s9 + $0xf8] sm:$0xff]
      %v1720 = vld [vmem:[%s9 + $0x100] sm:$0xff]
      %v1721 = vld [vmem:[%s9 + $0x108] sm:$0xff]
      %v1722 = vld [vmem:[%s9 + $0x110] sm:$0xff]
      %v1723 = vld [vmem:[%s9 + $0x118] sm:$0xff]
      %v1724 = vld [vmem:[%s9 + $0x120] sm:$0xff]
      %v1725 = vld [vmem:[%s9 + $0x128] sm:$0xff]
      %v1726 = vld [vmem:[%s9 + $0x130] sm:$0xff]
      %v1727 = vld [vmem:[%s9 + $0x138] sm:$0xff]
      %v1728 = vld [vmem:[%s9 + $0x140] sm:$0xff]
      %v1729 = vld [vmem:[%s9 + $0x148] sm:$0xff]
      %v1730 = vld [vmem:[%s9 + $0x150] sm:$0xff]
      %v1731 = vld [vmem:[%s9 + $0x158] sm:$0xff]
      %v1732 = vld [vmem:[%s9 + $0x160] sm:$0xff]
      %v1733 = vld [vmem:[%s9 + $0x168] sm:$0xff]
      %v1734 = vld [vmem:[%s9 + $0x170] sm:$0xff]
      %v1735 = vld [vmem:[%s9 + $0x178] sm:$0xff]
      %v1736 = vld [vmem:[%s10] sm:$0x1]
      %1737 = vst [vmem:[#allocation3 + $0x1] sm:$0xff] %v1686
      %1738 = vst [vmem:[#allocation3 + $0x9] sm:$0xff] %v1687
      %v1739 = vld [vmem:[#allocation3] sm:$0xff]
      %v1740 = vld [vmem:[#allocation3 + $0x8] sm:$0xff]
      %1741 = vst [vmem:[#allocation3 + $0x1] sm:$0xff] %v1670
      %1742 = vst [vmem:[#allocation3 + $0x9] sm:$0xff] %v1671
      %v1743 = vld [vmem:[#allocation3 + $0x2] sm:$0xff]
      %v1744 = vld [vmem:[#allocation3 + $0xa] sm:$0xff]
      %v1746 = vsel %vm405, %v407, %v388
      %1747 = vmatprep.subr.mxu0 0.0
      %1748 = vmatpush1.msra.mxu0 %v1704
      %1749 = vmatprep.subr.mxu0 0.0
      %1750 = vmatpush1.msra.mxu0 %v1705
      %1751 = vmatprep.subr.mxu0 0.0
      %1752 = vmatpush1.msra.mxu0 %v1706
      %1753 = vmatprep.subr.mxu0 0.0
      %1754 = vmatpush1.msra.mxu0 %v1707
      %1755 = vmatprep.subr.mxu0 0.0
      %1756 = vmatpush1.msra.mxu0 %v1708
      %1757 = vmatprep.subr.mxu0 0.0
      %1758 = vmatpush1.msra.mxu0 %v1709
      %1759 = vmatprep.subr.mxu0 0.0
      %1760 = vmatpush1.msra.mxu0 %v1710
      %1761 = vmatprep.subr.mxu0 0.0
      %1762 = vmatpush1.msra.mxu0 %v1711
      %1763 = vmatprep.subr.mxu0 0.0
      %1764 = vmatpush1.msra.mxu0 %v1712
      %1765 = vmatprep.subr.mxu0 0.0
      %1766 = vmatpush1.msra.mxu0 %v1713
      %1767 = vmatprep.subr.mxu0 0.0
      %1768 = vmatpush1.msra.mxu0 %v1714
      %1769 = vmatprep.subr.mxu0 0.0
      %1770 = vmatpush1.msra.mxu0 %v1715
      %1771 = vmatprep.subr.mxu0 0.0
      %1772 = vmatpush1.msra.mxu0 %v1716
      %1773 = vmatprep.subr.mxu0 0.0
      %1774 = vmatpush1.msra.mxu0 %v1717
      %1775 = vmatprep.subr.mxu0 0.0
      %1776 = vmatpush1.msra.mxu0 %v1718
      %1777 = vmatprep.subr.mxu0 0.0
      %1778 = vmatpush1.msra.mxu0 %v1719
      %1779 = vmatprep.subr.mxu0 0.0
      %1780 = vmatpush1.msra.mxu0 0.0
      %1781 = vmatprep.subr.mxu0 0.0
      %1782 = vmatpush1.msra.mxu0 0.0
      %1783 = vmatprep.subr.mxu0 0.0
      %1784 = vmatpush1.msra.mxu0 0.0
      %1785 = vmatprep.subr.mxu0 0.0
      %1786 = vmatpush1.msra.mxu0 0.0
      %1787 = vmatprep.subr.mxu0 0.0
      %1788 = vmatpush1.msra.mxu0 0.0
      %1789 = vmatprep.subr.mxu0 0.0
      %1790 = vmatpush1.msra.mxu0 0.0
      %1791 = vmatprep.subr.mxu0 0.0
      %1792 = vmatpush1.msra.mxu0 0.0
      %1793 = vmatprep.subr.mxu0 0.0
      %1794 = vmatpush1.msra.mxu0 0.0
      %1795 = vmatprep.subr.mxu0 0.0
      %1796 = vmatpush1.msra.mxu0 0.0
      %1797 = vmatprep.subr.mxu0 0.0
      %1798 = vmatpush1.msra.mxu0 0.0
      %1799 = vmatprep.subr.mxu0 0.0
      %1800 = vmatpush1.msra.mxu0 0.0
      %1801 = vmatprep.subr.mxu0 0.0
      %1802 = vmatpush1.msra.mxu0 0.0
      %1803 = vmatprep.subr.mxu0 0.0
      %1804 = vmatpush1.msra.mxu0 0.0
      %1805 = vmatprep.subr.mxu0 0.0
      %1806 = vmatpush1.msra.mxu0 0.0
      %1807 = vmatprep.subr.mxu0 0.0
      %1808 = vmatpush1.msra.mxu0 0.0
      %1809 = vmatprep.subr.mxu0 0.0
      %1810 = vmatpush1.msra.mxu0 0.0
      %1811 = vmatprep.mubr.f32.mxu0 0.0
      %1812 = vmatmul.mubr.f32.gmra.mrb[0].mxu0 %v1670
      %v1813 = vpop.f32.mrb[0].mxu0
      %v1814 = vadd.f32 0.0, %v1813
      %v1815 = vpop.f32.mrb[0].mxu0
      %1816 = vmatprep.mubr.f32.mxu0 0.0
      %1817 = vmatmul.mubr.f32.gmra.mrb[0].mxu0 %v1671
      %v1818 = vpop.f32.mrb[0].mxu0
      %v1819 = vadd.f32 0.0, %v1818
      %v1820 = vpop.f32.mrb[0].mxu0
      %1821 = vdwg.mxu0
      %1822 = vmatprep.subr.mxu0 0.0
      %1823 = vmatpush1.msra.mxu0 %v1688
      %1824 = vmatprep.subr.mxu0 0.0
      %1825 = vmatpush1.msra.mxu0 %v1689
      %1826 = vmatprep.subr.mxu0 0.0
      %1827 = vmatpush1.msra.mxu0 %v1690
      %1828 = vmatprep.subr.mxu0 0.0
      %1829 = vmatpush1.msra.mxu0 %v1691
      %1830 = vmatprep.subr.mxu0 0.0
      %1831 = vmatpush1.msra.mxu0 %v1692
      %1832 = vmatprep.subr.mxu0 0.0
      %1833 = vmatpush1.msra.mxu0 %v1693
      %1834 = vmatprep.subr.mxu0 0.0
      %1835 = vmatpush1.msra.mxu0 %v1694
      %1836 = vmatprep.subr.mxu0 0.0
      %1837 = vmatpush1.msra.mxu0 %v1695
      %1838 = vmatprep.subr.mxu0 0.0
      %1839 = vmatpush1.msra.mxu0 %v1696
      %1840 = vmatprep.subr.mxu0 0.0
      %1841 = vmatpush1.msra.mxu0 %v1697
      %1842 = vmatprep.subr.mxu0 0.0
      %1843 = vmatpush1.msra.mxu0 %v1698
      %1844 = vmatprep.subr.mxu0 0.0
      %1845 = vmatpush1.msra.mxu0 %v1699
      %1846 = vmatprep.subr.mxu0 0.0
      %1847 = vmatpush1.msra.mxu0 %v1700
      %1848 = vmatprep.subr.mxu0 0.0
      %1849 = vmatpush1.msra.mxu0 %v1701
      %1850 = vmatprep.subr.mxu0 0.0
      %1851 = vmatpush1.msra.mxu0 %v1702
      %1852 = vmatprep.subr.mxu0 0.0
      %1853 = vmatpush1.msra.mxu0 %v1703
      %1854 = vmatprep.subr.mxu0 0.0
      %1855 = vmatpush1.msra.mxu0 0.0
      %1856 = vmatprep.subr.mxu0 0.0
      %1857 = vmatpush1.msra.mxu0 0.0
      %1858 = vmatprep.subr.mxu0 0.0
      %1859 = vmatpush1.msra.mxu0 0.0
      %1860 = vmatprep.subr.mxu0 0.0
      %1861 = vmatpush1.msra.mxu0 0.0
      %1862 = vmatprep.subr.mxu0 0.0
      %1863 = vmatpush1.msra.mxu0 0.0
      %1864 = vmatprep.subr.mxu0 0.0
      %1865 = vmatpush1.msra.mxu0 0.0
      %1866 = vmatprep.subr.mxu0 0.0
      %1867 = vmatpush1.msra.mxu0 0.0
      %1868 = vmatprep.subr.mxu0 0.0
      %1869 = vmatpush1.msra.mxu0 0.0
      %1870 = vmatprep.subr.mxu0 0.0
      %1871 = vmatpush1.msra.mxu0 0.0
      %1872 = vmatprep.subr.mxu0 0.0
      %1873 = vmatpush1.msra.mxu0 0.0
      %1874 = vmatprep.subr.mxu0 0.0
      %1875 = vmatpush1.msra.mxu0 0.0
      %1876 = vmatprep.subr.mxu0 0.0
      %1877 = vmatpush1.msra.mxu0 0.0
      %1878 = vmatprep.subr.mxu0 0.0
      %1879 = vmatpush1.msra.mxu0 0.0
      %1880 = vmatprep.subr.mxu0 0.0
      %1881 = vmatpush1.msra.mxu0 0.0
      %1882 = vmatprep.subr.mxu0 0.0
      %1883 = vmatpush1.msra.mxu0 0.0
      %1884 = vmatprep.subr.mxu0 0.0
      %1885 = vmatpush1.msra.mxu0 0.0
      %1886 = vmatprep.mubr.f32.mxu0 0.0
      %1887 = vmatmul.mubr.f32.gmra.mrb[0].mxu0 %v1739
      %v1888 = vpop.f32.mrb[0].mxu0
      %v1889 = vadd.f32 %v1814, %v1888
      %v1890 = vpop.f32.mrb[0].mxu0
      %1891 = vmatprep.mubr.f32.mxu0 0.0
      %1892 = vmatmul.mubr.f32.gmra.mrb[0].mxu0 %v1740
      %v1893 = vpop.f32.mrb[0].mxu0
      %v1894 = vadd.f32 %v1819, %v1893
      %v1895 = vpop.f32.mrb[0].mxu0
      %1896 = vdwg.mxu0
      %1897 = vmatprep.subr.mxu0 0.0
      %1898 = vmatpush1.msra.mxu0 %v1720
      %1899 = vmatprep.subr.mxu0 0.0
      %1900 = vmatpush1.msra.mxu0 %v1721
      %1901 = vmatprep.subr.mxu0 0.0
      %1902 = vmatpush1.msra.mxu0 %v1722
      %1903 = vmatprep.subr.mxu0 0.0
      %1904 = vmatpush1.msra.mxu0 %v1723
      %1905 = vmatprep.subr.mxu0 0.0
      %1906 = vmatpush1.msra.mxu0 %v1724
      %1907 = vmatprep.subr.mxu0 0.0
      %1908 = vmatpush1.msra.mxu0 %v1725
      %1909 = vmatprep.subr.mxu0 0.0
      %1910 = vmatpush1.msra.mxu0 %v1726
      %1911 = vmatprep.subr.mxu0 0.0
      %1912 = vmatpush1.msra.mxu0 %v1727
      %1913 = vmatprep.subr.mxu0 0.0
      %1914 = vmatpush1.msra.mxu0 %v1728
      %1915 = vmatprep.subr.mxu0 0.0
      %1916 = vmatpush1.msra.mxu0 %v1729
      %1917 = vmatprep.subr.mxu0 0.0
      %1918 = vmatpush1.msra.mxu0 %v1730
      %1919 = vmatprep.subr.mxu0 0.0
      %1920 = vmatpush1.msra.mxu0 %v1731
      %1921 = vmatprep.subr.mxu0 0.0
      %1922 = vmatpush1.msra.mxu0 %v1732
      %1923 = vmatprep.subr.mxu0 0.0
      %1924 = vmatpush1.msra.mxu0 %v1733
      %1925 = vmatprep.subr.mxu0 0.0
      %1926 = vmatpush1.msra.mxu0 %v1734
      %1927 = vmatprep.subr.mxu0 0.0
      %1928 = vmatpush1.msra.mxu0 %v1735
      %1929 = vmatprep.subr.mxu0 0.0
      %1930 = vmatpush1.msra.mxu0 0.0
      %1931 = vmatprep.subr.mxu0 0.0
      %1932 = vmatpush1.msra.mxu0 0.0
      %1933 = vmatprep.subr.mxu0 0.0
      %1934 = vmatpush1.msra.mxu0 0.0
      %1935 = vmatprep.subr.mxu0 0.0
      %1936 = vmatpush1.msra.mxu0 0.0
      %1937 = vmatprep.subr.mxu0 0.0
      %1938 = vmatpush1.msra.mxu0 0.0
      %1939 = vmatprep.subr.mxu0 0.0
      %1940 = vmatpush1.msra.mxu0 0.0
      %1941 = vmatprep.subr.mxu0 0.0
      %1942 = vmatpush1.msra.mxu0 0.0
      %1943 = vmatprep.subr.mxu0 0.0
      %1944 = vmatpush1.msra.mxu0 0.0
      %1945 = vmatprep.subr.mxu0 0.0
      %1946 = vmatpush1.msra.mxu0 0.0
      %1947 = vmatprep.subr.mxu0 0.0
      %1948 = vmatpush1.msra.mxu0 0.0
      %1949 = vmatprep.subr.mxu0 0.0
      %1950 = vmatpush1.msra.mxu0 0.0
      %1951 = vmatprep.subr.mxu0 0.0
      %1952 = vmatpush1.msra.mxu0 0.0
      %1953 = vmatprep.subr.mxu0 0.0
      %1954 = vmatpush1.msra.mxu0 0.0
      %1955 = vmatprep.subr.mxu0 0.0
      %1956 = vmatpush1.msra.mxu0 0.0
      %1957 = vmatprep.subr.mxu0 0.0
      %1958 = vmatpush1.msra.mxu0 0.0
      %1959 = vmatprep.subr.mxu0 0.0
      %1960 = vmatpush1.msra.mxu0 0.0
      %1961 = vmatprep.mubr.f32.mxu0 0.0
      %1962 = vmatmul.mubr.f32.gmra.mrb[0].mxu0 %v1686
      %v1963 = vpop.f32.mrb[0].mxu0
      %v1964 = vadd.f32 0.0, %v1963
      %v1965 = vpop.f32.mrb[0].mxu0
      %1966 = vmatprep.mubr.f32.mxu0 0.0
      %1967 = vmatmul.mubr.f32.gmra.mrb[0].mxu0 %v1687
      %v1968 = vpop.f32.mrb[0].mxu0
      %v1969 = vadd.f32 0.0, %v1968
      %v1970 = vpop.f32.mrb[0].mxu0
      %1971 = vdwg.mxu0
      %v1972 = vadd.f32 %v1889, %v1964
      %v1973 = vadd.f32 %v1894, %v1969
      %v1975 = vlaneseq
      %v1976 = vshrl.u32 %v1975, 7
      %v1977 = vsub.s32 0, %v1976
      %v1978 = vrot.slane %v1736, %v1977
      %v1980 = vadd.f32 %v1972, %v1978
      %v1981 = vadd.f32 %v1973, %v1978
      %v1982 = vadd.f32 %v1980, %v387
      %v1983 = vadd.f32 %v1981, %v388
      %v1984 = vmax.f32 %v1982, 0.0
      %v1985 = vmax.f32 %v1983, 0.0
      %1986 = vst.msk [vmem:[%s386] sm:$0xff] %vm424, %v1984
      %1987 = vst.msk [vmem:[%s386 + $0x8] sm:$0xff] %vm424, %v1985
      %1988 = vmatprep.subr.mxu0 0.0
      %1989 = vmatpush1.msra.mxu0 %v1704
      %1990 = vmatprep.subr.mxu0 0.0
      %1991 = vmatpush1.msra.mxu0 %v1705
      %1992 = vmatprep.subr.mxu0 0.0
      %1993 = vmatpush1.msra.mxu0 %v1706
      %1994 = vmatprep.subr.mxu0 0.0
      %1995 = vmatpush1.msra.mxu0 %v1707
      %1996 = vmatprep.subr.mxu0 0.0
      %1997 = vmatpush1.msra.mxu0 %v1708
      %1998 = vmatprep.subr.mxu0 0.0
      %1999 = vmatpush1.msra.mxu0 %v1709
      %2000 = vmatprep.subr.mxu0 0.0
      %2001 = vmatpush1.msra.mxu0 %v1710
      %2002 = vmatprep.subr.mxu0 0.0
      %2003 = vmatpush1.msra.mxu0 %v1711
      %2004 = vmatprep.subr.mxu0 0.0
      %2005 = vmatpush1.msra.mxu0 %v1712
      %2006 = vmatprep.subr.mxu0 0.0
      %2007 = vmatpush1.msra.mxu0 %v1713
      %2008 = vmatprep.subr.mxu0 0.0
      %2009 = vmatpush1.msra.mxu0 %v1714
      %2010 = vmatprep.subr.mxu0 0.0
      %2011 = vmatpush1.msra.mxu0 %v1715
      %2012 = vmatprep.subr.mxu0 0.0
      %2013 = vmatpush1.msra.mxu0 %v1716
      %2014 = vmatprep.subr.mxu0 0.0
      %2015 = vmatpush1.msra.mxu0 %v1717
      %2016 = vmatprep.subr.mxu0 0.0
      %2017 = vmatpush1.msra.mxu0 %v1718
      %2018 = vmatprep.subr.mxu0 0.0
      %2019 = vmatpush1.msra.mxu0 %v1719
      %2020 = vmatprep.subr.mxu0 0.0
      %2021 = vmatpush1.msra.mxu0 0.0
      %2022 = vmatprep.subr.mxu0 0.0
      %2023 = vmatpush1.msra.mxu0 0.0
      %2024 = vmatprep.subr.mxu0 0.0
      %2025 = vmatpush1.msra.mxu0 0.0
      %2026 = vmatprep.subr.mxu0 0.0
      %2027 = vmatpush1.msra.mxu0 0.0
      %2028 = vmatprep.subr.mxu0 0.0
      %2029 = vmatpush1.msra.mxu0 0.0
      %2030 = vmatprep.subr.mxu0 0.0
      %2031 = vmatpush1.msra.mxu0 0.0
      %2032 = vmatprep.subr.mxu0 0.0
      %2033 = vmatpush1.msra.mxu0 0.0
      %2034 = vmatprep.subr.mxu0 0.0
      %2035 = vmatpush1.msra.mxu0 0.0
      %2036 = vmatprep.subr.mxu0 0.0
      %2037 = vmatpush1.msra.mxu0 0.0
      %2038 = vmatprep.subr.mxu0 0.0
      %2039 = vmatpush1.msra.mxu0 0.0
      %2040 = vmatprep.subr.mxu0 0.0
      %2041 = vmatpush1.msra.mxu0 0.0
      %2042 = vmatprep.subr.mxu0 0.0
      %2043 = vmatpush1.msra.mxu0 0.0
      %2044 = vmatprep.subr.mxu0 0.0
      %2045 = vmatpush1.msra.mxu0 0.0
      %2046 = vmatprep.subr.mxu0 0.0
      %2047 = vmatpush1.msra.mxu0 0.0
      %2048 = vmatprep.subr.mxu0 0.0
      %2049 = vmatpush1.msra.mxu0 0.0
      %2050 = vmatprep.subr.mxu0 0.0
      %2051 = vmatpush1.msra.mxu0 0.0
      %2052 = vmatprep.mubr.f32.mxu0 0.0
      %2053 = vmatmul.mubr.f32.gmra.mrb[0].mxu0 %v1686
      %v2054 = vpop.f32.mrb[0].mxu0
      %v2055 = vadd.f32 0.0, %v2054
      %v2056 = vpop.f32.mrb[0].mxu0
      %2057 = vmatprep.mubr.f32.mxu0 0.0
      %2058 = vmatmul.mubr.f32.gmra.mrb[0].mxu0 %v1687
      %v2059 = vpop.f32.mrb[0].mxu0
      %v2060 = vadd.f32 0.0, %v2059
      %v2061 = vpop.f32.mrb[0].mxu0
      %2062 = vdwg.mxu0
      %2063 = vmatprep.subr.mxu0 0.0
      %2064 = vmatpush1.msra.mxu0 %v1688
      %2065 = vmatprep.subr.mxu0 0.0
      %2066 = vmatpush1.msra.mxu0 %v1689
      %2067 = vmatprep.subr.mxu0 0.0
      %2068 = vmatpush1.msra.mxu0 %v1690
      %2069 = vmatprep.subr.mxu0 0.0
      %2070 = vmatpush1.msra.mxu0 %v1691
      %2071 = vmatprep.subr.mxu0 0.0
      %2072 = vmatpush1.msra.mxu0 %v1692
      %2073 = vmatprep.subr.mxu0 0.0
      %2074 = vmatpush1.msra.mxu0 %v1693
      %2075 = vmatprep.subr.mxu0 0.0
      %2076 = vmatpush1.msra.mxu0 %v1694
      %2077 = vmatprep.subr.mxu0 0.0
      %2078 = vmatpush1.msra.mxu0 %v1695
      %2079 = vmatprep.subr.mxu0 0.0
      %2080 = vmatpush1.msra.mxu0 %v1696
      %2081 = vmatprep.subr.mxu0 0.0
      %2082 = vmatpush1.msra.mxu0 %v1697
      %2083 = vmatprep.subr.mxu0 0.0
      %2084 = vmatpush1.msra.mxu0 %v1698
      %2085 = vmatprep.subr.mxu0 0.0
      %2086 = vmatpush1.msra.mxu0 %v1699
      %2087 = vmatprep.subr.mxu0 0.0
      %2088 = vmatpush1.msra.mxu0 %v1700
      %2089 = vmatprep.subr.mxu0 0.0
      %2090 = vmatpush1.msra.mxu0 %v1701
      %2091 = vmatprep.subr.mxu0 0.0
      %2092 = vmatpush1.msra.mxu0 %v1702
      %2093 = vmatprep.subr.mxu0 0.0
      %2094 = vmatpush1.msra.mxu0 %v1703
      %2095 = vmatprep.subr.mxu0 0.0
      %2096 = vmatpush1.msra.mxu0 0.0
      %2097 = vmatprep.subr.mxu0 0.0
      %2098 = vmatpush1.msra.mxu0 0.0
      %2099 = vmatprep.subr.mxu0 0.0
      %2100 = vmatpush1.msra.mxu0 0.0
      %2101 = vmatprep.subr.mxu0 0.0
      %2102 = vmatpush1.msra.mxu0 0.0
      %2103 = vmatprep.subr.mxu0 0.0
      %2104 = vmatpush1.msra.mxu0 0.0
      %2105 = vmatprep.subr.mxu0 0.0
      %2106 = vmatpush1.msra.mxu0 0.0
      %2107 = vmatprep.subr.mxu0 0.0
      %2108 = vmatpush1.msra.mxu0 0.0
      %2109 = vmatprep.subr.mxu0 0.0
      %2110 = vmatpush1.msra.mxu0 0.0
      %2111 = vmatprep.subr.mxu0 0.0
      %2112 = vmatpush1.msra.mxu0 0.0
      %2113 = vmatprep.subr.mxu0 0.0
      %2114 = vmatpush1.msra.mxu0 0.0
      %2115 = vmatprep.subr.mxu0 0.0
      %2116 = vmatpush1.msra.mxu0 0.0
      %2117 = vmatprep.subr.mxu0 0.0
      %2118 = vmatpush1.msra.mxu0 0.0
      %2119 = vmatprep.subr.mxu0 0.0
      %2120 = vmatpush1.msra.mxu0 0.0
      %2121 = vmatprep.subr.mxu0 0.0
      %2122 = vmatpush1.msra.mxu0 0.0
      %2123 = vmatprep.subr.mxu0 0.0
      %2124 = vmatpush1.msra.mxu0 0.0
      %2125 = vmatprep.subr.mxu0 0.0
      %2126 = vmatpush1.msra.mxu0 0.0
      %2127 = vmatprep.mubr.f32.mxu0 0.0
      %2128 = vmatmul.mubr.f32.gmra.mrb[0].mxu0 %v1670
      %v2129 = vpop.f32.mrb[0].mxu0
      %v2130 = vadd.f32 %v2055, %v2129
      %v2131 = vpop.f32.mrb[0].mxu0
      %2132 = vmatprep.mubr.f32.mxu0 0.0
      %2133 = vmatmul.mubr.f32.gmra.mrb[0].mxu0 %v1671
      %v2134 = vpop.f32.mrb[0].mxu0
      %v2135 = vadd.f32 %v2060, %v2134
      %v2136 = vpop.f32.mrb[0].mxu0
      %2137 = vdwg.mxu0
      %2138 = vmatprep.subr.mxu0 0.0
      %2139 = vmatpush1.msra.mxu0 %v1720
      %2140 = vmatprep.subr.mxu0 0.0
      %2141 = vmatpush1.msra.mxu0 %v1721
      %2142 = vmatprep.subr.mxu0 0.0
      %2143 = vmatpush1.msra.mxu0 %v1722
      %2144 = vmatprep.subr.mxu0 0.0
      %2145 = vmatpush1.msra.mxu0 %v1723
      %2146 = vmatprep.subr.mxu0 0.0
      %2147 = vmatpush1.msra.mxu0 %v1724
      %2148 = vmatprep.subr.mxu0 0.0
      %2149 = vmatpush1.msra.mxu0 %v1725
      %2150 = vmatprep.subr.mxu0 0.0
      %2151 = vmatpush1.msra.mxu0 %v1726
      %2152 = vmatprep.subr.mxu0 0.0
      %2153 = vmatpush1.msra.mxu0 %v1727
      %2154 = vmatprep.subr.mxu0 0.0
      %2155 = vmatpush1.msra.mxu0 %v1728
      %2156 = vmatprep.subr.mxu0 0.0
      %2157 = vmatpush1.msra.mxu0 %v1729
      %2158 = vmatprep.subr.mxu0 0.0
      %2159 = vmatpush1.msra.mxu0 %v1730
      %2160 = vmatprep.subr.mxu0 0.0
      %2161 = vmatpush1.msra.mxu0 %v1731
      %2162 = vmatprep.subr.mxu0 0.0
      %2163 = vmatpush1.msra.mxu0 %v1732
      %2164 = vmatprep.subr.mxu0 0.0
      %2165 = vmatpush1.msra.mxu0 %v1733
      %2166 = vmatprep.subr.mxu0 0.0
      %2167 = vmatpush1.msra.mxu0 %v1734
      %2168 = vmatprep.subr.mxu0 0.0
      %2169 = vmatpush1.msra.mxu0 %v1735
      %2170 = vmatprep.subr.mxu0 0.0
      %2171 = vmatpush1.msra.mxu0 0.0
      %2172 = vmatprep.subr.mxu0 0.0
      %2173 = vmatpush1.msra.mxu0 0.0
      %2174 = vmatprep.subr.mxu0 0.0
      %2175 = vmatpush1.msra.mxu0 0.0
      %2176 = vmatprep.subr.mxu0 0.0
      %2177 = vmatpush1.msra.mxu0 0.0
      %2178 = vmatprep.subr.mxu0 0.0
      %2179 = vmatpush1.msra.mxu0 0.0
      %2180 = vmatprep.subr.mxu0 0.0
      %2181 = vmatpush1.msra.mxu0 0.0
      %2182 = vmatprep.subr.mxu0 0.0
      %2183 = vmatpush1.msra.mxu0 0.0
      %2184 = vmatprep.subr.mxu0 0.0
      %2185 = vmatpush1.msra.mxu0 0.0
      %2186 = vmatprep.subr.mxu0 0.0
      %2187 = vmatpush1.msra.mxu0 0.0
      %2188 = vmatprep.subr.mxu0 0.0
      %2189 = vmatpush1.msra.mxu0 0.0
      %2190 = vmatprep.subr.mxu0 0.0
      %2191 = vmatpush1.msra.mxu0 0.0
      %2192 = vmatprep.subr.mxu0 0.0
      %2193 = vmatpush1.msra.mxu0 0.0
      %2194 = vmatprep.subr.mxu0 0.0
      %2195 = vmatpush1.msra.mxu0 0.0
      %2196 = vmatprep.subr.mxu0 0.0
      %2197 = vmatpush1.msra.mxu0 0.0
      %2198 = vmatprep.subr.mxu0 0.0
      %2199 = vmatpush1.msra.mxu0 0.0
      %2200 = vmatprep.subr.mxu0 0.0
      %2201 = vmatpush1.msra.mxu0 0.0
      %2202 = vmatprep.mubr.f32.mxu0 0.0
      %2203 = vmatmul.mubr.f32.gmra.mrb[0].mxu0 %v1743
      %v2204 = vpop.f32.mrb[0].mxu0
      %v2205 = vadd.f32 0.0, %v2204
      %v2206 = vpop.f32.mrb[0].mxu0
      %2207 = vmatprep.mubr.f32.mxu0 0.0
      %2208 = vmatmul.mubr.f32.gmra.mrb[0].mxu0 %v1744
      %v2209 = vpop.f32.mrb[0].mxu0
      %v2210 = vadd.f32 0.0, %v2209
      %v2211 = vpop.f32.mrb[0].mxu0
      %2212 = vdwg.mxu0
      %v2213 = vadd.f32 %v2130, %v2205
      %v2214 = vadd.f32 %v2135, %v2210
      %v2215 = vadd.f32 %v2213, %v1978
      %v2216 = vadd.f32 %v2214, %v1978
      %v2217 = vadd.f32 %v2215, %v408
      %v2218 = vadd.f32 %v2216, %v1746
      %v2219 = vmax.f32 %v2217, 0.0
      %v2220 = vmax.f32 %v2218, 0.0
      %s2221 = scalar_lea.vmem %s386, 16
      %2222 = vst.msk [vmem:[%s2221] sm:$0xff] %vm424, %v2219
      %2223 = vst.msk [vmem:[%s2221 + $0x8] sm:$0xff] %vm424, %v2220
      %p2224 = scmp.lt.s32.totalorder %s22, 1
      %s2225 = scalar_select %p2224, %s22, 1
      %s2226 = smul.addr %s2225, 4
      %s2227 = smul.addr %s2226, 8
      %s2228 = scalar_lea.vmem %s11, %s2227
      // Predicated region
      $region65: #{temporal_upsample_forward.1} parent=63 // pred_check
        %p2229 = pneg %p276
      $region66: #{temporal_upsample_forward.1} parent=63 // pred_check_branch
        %2231 = sbr.rel (%p2229) target = $region68
      $region67: #{temporal_upsample_forward.1} parent=63 // pred_region
        _
      $region68: #{temporal_upsample_forward.1} parent=63 // pred_fallthru
        _
    $region64: #{temporal_upsample_forward.1} parent=5 // pred_fallthru
      _
    %p2232 = scmp.le.s32.totalorder 2, %s17
    // Predicated region
    $region69: #{temporal_upsample_forward.1} parent=5 // pred_check
      %p2233 = pneg %p2232
    $region70: #{temporal_upsample_forward.1} parent=5 // pred_check_branch
      %2235 = sbr.rel (%p2233) target = $region72
    $region71: #{temporal_upsample_forward.1} parent=5 // pred_region
      %s2236 = ssub.s32 %s17, 2
      // Predicated region
      $region73: #{temporal_upsample_forward.1} parent=71 // pred_check
        %p2237 = pneg %p282
      $region74: #{temporal_upsample_forward.1} parent=71 // pred_check_branch
        %2239 = sbr.rel (%p2237) target = $region76
      $region75: #{temporal_upsample_forward.1} parent=71 // pred_region
        %p2240 = scmp.lt.s32.totalorder %s23, 1
        %s2241 = scalar_select %p2240, %s23, 1
        %s2242 = smul.addr %s2241, 4
        %s2243 = smul.addr %s2242, 8
        %s2244 = scalar_lea.vmem %s11, %s2243
      $region76: #{temporal_upsample_forward.1} parent=71 // pred_fallthru
        _
    $region72: #{temporal_upsample_forward.1} parent=5 // pred_fallthru
      _
  $region6: #{temporal_upsample_forward.1} parent=0 // loop_footer
    %s21 = sadd.s32 1, %s17
  $region7: #{temporal_upsample_forward.1} parent=0 // loop_footer_branch
    %16 = sbr.rel target = $region3
  $region8: #{temporal_upsample_forward.1} parent=0 // loop_exit
    _

</llo_original>
